<compile_context>
chip_gen: v7x
topology: tpu7x:2x2x1
jax: 0.10.0
libtpu: 0.0.40
codegen_flags: <defaults>
</compile_context>

<pallas_src>
import jax
import jax.numpy as jnp
from jax.experimental import pallas as pl
from jax.experimental.pallas import tpu as pltpu

# ---------------------------------------------------------------------------
# Geometry fixed by the module (Linear(384, 100) forces L=2048, C_in=2).
_L_IN, _C_IN = 2048, 2
_K0, _S0, _P0 = 64, 9, 32
_L1 = (_L_IN + 2 * _P0 - _K0) // _S0 + 1      # 228  conv1 out
_L1P = _L1 // 2                               # 114  after pool
_L2 = _L1P + 2 - 3 + 1                        # 114  conv2 (k=3, p=1) out
_L2P = _L2 // 2                               # 57
_L3 = _L2P + 2 - 2 + 1                        # 58   conv3 (k=2, p=1) out
_L3P = _L3 // 2                               # 29
_L4 = _L3P + 2 - 3 + 1                        # 29   conv4 (k=3, p=1) out
_L4P = _L4 // 2                               # 14
_L5 = _L4P - 3 + 1                            # 12   conv5 (k=3, p=0) out
_L5P = _L5 // 2                               # 6
_FEAT = _L5P * 64                             # 384

_CONV_SPECS = ((2, 16, 64), (16, 32, 3), (32, 64, 2), (64, 64, 3), (64, 64, 3))


# ----------------------------- fused Pallas kernel --------------------------

def _wdcnn2_kernel(p0_ref, w0_ref, b0_ref, w1_ref, b1_ref, w2_ref, b2_ref,
                   w3_ref, b3_ref, w4_ref, b4_ref, fw1_ref, fb1_ref,
                   fw2_ref, fb2_ref, o_ref,
                   c1_ref, x2_ref, c2_ref, x3_ref, c3_ref, x4_ref, c4_ref):
    f32, bf16 = jnp.float32, jnp.bfloat16

    def pool2(src_ref, n_out):
        # MaxPool1d(kernel=2, stride=2), floor mode: even/odd strided row max.
        return jnp.maximum(src_ref[pl.ds(0, n_out, 2), :],
                           src_ref[pl.ds(1, n_out, 2), :])

    def store_padded(dst_ref, value, pad):
        # dst holds `value` with `pad` zero rows on each side (conv zero padding).
        dst_ref[...] = jnp.zeros(dst_ref.shape, f32)
        dst_ref[pad:pad + value.shape[0], :] = value

    def conv_relu(x_padded, w_ref, b_ref, k, n_out):
        # stride-1 conv as k shifted slices accumulated with bf16 MXU dots (f32 acc).
        y = b_ref[...]
        for ki in range(k):
            xs = x_padded[ki:ki + n_out, :]
            y = y + jnp.dot(xs.astype(bf16), w_ref[ki],
                            preferred_element_type=f32)
        return jnp.maximum(y, 0.0)

    # conv1 (k=64, s=9, p=32) -- pre-im2col'd, single lane-dense K=128 matmul.
    y0 = jnp.dot(p0_ref[...], w0_ref[...], preferred_element_type=f32)
    c1_ref[...] = jnp.maximum(y0 + b0_ref[...], 0.0)                 # (228, 16)

    store_padded(x2_ref, pool2(c1_ref, _L1P), 1)                     # (116, 16)
    c2_ref[...] = conv_relu(x2_ref, w1_ref, b1_ref, 3, _L2)          # (114, 32)

    store_padded(x3_ref, pool2(c2_ref, _L2P), 1)                     # (59, 32)
    c3_ref[...] = conv_relu(x3_ref, w2_ref, b2_ref, 2, _L3)          # (58, 64)

    store_padded(x4_ref, pool2(c3_ref, _L3P), 1)                     # (31, 64)
    c4_ref[...] = conv_relu(x4_ref, w3_ref, b3_ref, 3, _L4)          # (29, 64)

    p4 = pool2(c4_ref, _L4P)                                         # (14, 64) value
    c5 = conv_relu(p4, w4_ref, b4_ref, 3, _L5)                       # (12, 64) value

    # pool(2) + Flatten + fc1: the channel-major flatten is folded into fc1_w's
    # row order (l-major, c-minor) -> 6 accumulated (1,64)x(64,100) dots.
    z = fb1_ref[...]
    for l in range(_L5P):
        row = jnp.maximum(c5[2 * l:2 * l + 1, :], c5[2 * l + 1:2 * l + 2, :])
        z = z + jnp.dot(row.astype(bf16), fw1_ref[64 * l:64 * (l + 1), :],
                        preferred_element_type=f32)
    # Sigmoid: exp and approx reciprocal both run on the EUP slot (free-ish).
    h = pl.reciprocal(1.0 + jnp.exp(-z), approx=True)                # (1, 100) f32
    # TODO(synk): Dropout(p=0.5) treated as identity (eval-mode forward only).

    logits = jnp.dot(h.astype(bf16), fw2_ref[...],
                     preferred_element_type=f32) + fb2_ref[...]      # (1, 10)
    m = jnp.max(logits, axis=-1, keepdims=True)
    e = jnp.exp(logits - m)
    # Exact divide for the final normalization so rows sum to 1 in f32.
    o_ref[...] = (e / jnp.sum(e, axis=-1, keepdims=True)).astype(o_ref.dtype)


# ------------------------------- JAX wrapper ---------------------------------

def wdcnn2_forward(params, x_ncw):
    """x_ncw: (B, 2, 2048) float32, same NCW layout as the PyTorch module."""
    x = jnp.transpose(x_ncw, (0, 2, 1)).astype(jnp.float32)          # (B, L, C)
    B = x.shape[0]
    # im2col only for the strided conv1: K = k*Cin = 128 == one lane tile.
    xp = jnp.pad(x, ((0, 0), (_P0, _P0), (0, 0)))
    idx = jnp.arange(_L1)[:, None] * _S0 + jnp.arange(_K0)[None, :]
    patches = xp[:, idx, :].reshape(B, _L1, _K0 * _C_IN).astype(jnp.bfloat16)

    wkeys = ("conv0_w", "conv0_b", "conv1_w", "conv1_b", "conv2_w", "conv2_b",
             "conv3_w", "conv3_b", "conv4_w", "conv4_b",
             "fc1_w", "fc1_b", "fc2_w", "fc2_b")
    wargs = [params[k] for k in wkeys]

    def _whole(a):   # full-array block, constant across the batch grid
        return pl.BlockSpec(a.shape, lambda b: (0,) * a.ndim)

    out = pl.pallas_call(
        _wdcnn2_kernel,
        out_shape=jax.ShapeDtypeStruct((B, 1, 10), jnp.float32),
        grid=(B,),
        in_specs=[pl.BlockSpec((None, _L1, _K0 * _C_IN), lambda b: (b, 0, 0))]
                 + [_whole(a) for a in wargs],
        out_specs=pl.BlockSpec((None, 1, 10), lambda b: (b, 0, 0)),
        scratch_shapes=[
            pltpu.VMEM((_L1, 16), jnp.float32),        # conv1 out
            pltpu.VMEM((_L1P + 2, 16), jnp.float32),   # padded conv2 in
            pltpu.VMEM((_L2, 32), jnp.float32),        # conv2 out
            pltpu.VMEM((_L2P + 2, 32), jnp.float32),   # padded conv3 in
            pltpu.VMEM((_L3, 64), jnp.float32),        # conv3 out
            pltpu.VMEM((_L3P + 2, 64), jnp.float32),   # padded conv4 in
            pltpu.VMEM((_L4, 64), jnp.float32),        # conv4 out
        ],
        compiler_params=pltpu.CompilerParams(
            dimension_semantics=("parallel",)),
    )(patches, *wargs)
    return out.reshape(B, 10)


# ------------------------------ parameters -----------------------------------

def init_params(key):
    """PyTorch-style U(-1/sqrt(fan_in), +) init, stored in kernel-friendly layouts."""
    p = {}
    for i, (cin, cout, k) in enumerate(_CONV_SPECS):
        key, kw, kb = jax.random.split(key, 3)
        s = 1.0 / float(cin * k) ** 0.5
        if i == 0:
            # conv1 consumed as an im2col matmul: rows ordered (ki, ci) -> K=128.
            w = jax.random.uniform(kw, (k * cin, cout), jnp.float32, -s, s)
        else:
            # stride-1 convs: per-tap (cin, cout) matrices stacked on axis 0.
            w = jax.random.uniform(kw, (k, cin, cout), jnp.float32, -s, s)
        p[f"conv{i}_w"] = w.astype(jnp.bfloat16)            # bf16 MXU inputs
        p[f"conv{i}_b"] = jax.random.uniform(kb, (1, cout), jnp.float32, -s, s)

    # fc1: fold PyTorch's channel-major Flatten ((B,C,L)->(B,C*L)) into the
    # weight row order once at init:  ours[l*64 + c, :] = torch[c*6 + l, :].
    key, kw, kb = jax.random.split(key, 3)
    s = 1.0 / float(_FEAT) ** 0.5
    w_torch_order = jax.random.uniform(kw, (_FEAT, 100), jnp.float32, -s, s)
    perm = (jnp.arange(64)[None, :] * _L5P + jnp.arange(_L5P)[:, None]).reshape(-1)
    p["fc1_w"] = w_torch_order[perm].astype(jnp.bfloat16)
    p["fc1_b"] = jax.random.uniform(kb, (1, 100), jnp.float32, -s, s)

    key, kw, kb = jax.random.split(key, 3)
    s = 1.0 / 100.0 ** 0.5
    p["fc2_w"] = jax.random.uniform(kw, (100, 10), jnp.float32, -s, s).astype(jnp.bfloat16)
    p["fc2_b"] = jax.random.uniform(kb, (1, 10), jnp.float32, -s, s)
    return p


# ------------------------- pure-JAX reference (f32) ---------------------------

def _ref_forward(params, x_ncw):
    x = jnp.transpose(x_ncw, (0, 2, 1)).astype(jnp.float32)          # (B, L, C)
    cfg = [(_K0, _S0, _P0, _C_IN, 16), (3, 1, 1, 16, 32), (2, 1, 1, 32, 64),
           (3, 1, 1, 64, 64), (3, 1, 0, 64, 64)]
    for i, (k, s, p, cin, cout) in enumerate(cfg):
        w = params[f"conv{i}_w"].astype(jnp.float32).reshape(k, cin, cout)
        y = jax.lax.conv_general_dilated(
            x, w, window_strides=(s,), padding=[(p, p)],
            dimension_numbers=("NWC", "WIO", "NWC"))
        y = jax.nn.relu(y + params[f"conv{i}_b"])
        lh = y.shape[1] // 2
        x = jnp.maximum(y[:, 0:2 * lh:2, :], y[:, 1:2 * lh:2, :])
    feat = x.reshape(x.shape[0], -1)                                 # (B, 384), (l, c) order
    h = jax.nn.sigmoid(feat @ params["fc1_w"].astype(jnp.float32) + params["fc1_b"])
    logits = h @ params["fc2_w"].astype(jnp.float32) + params["fc2_b"]
    return jax.nn.softmax(logits, axis=-1)


# ---------------------------------- main --------------------------------------

if __name__ == "__main__":
    key = jax.random.PRNGKey(0)
    k_param, k_x = jax.random.split(key)
    params = init_params(k_param)
    # Smallest shape consistent with the module: Linear(384, .) forces L=2048, C=2.
    x = jax.random.normal(k_x, (2, _C_IN, _L_IN), dtype=jnp.float32)

    out = jax.jit(wdcnn2_forward)(params, x)
    out = jax.block_until_ready(out)

    assert out.shape == (2, 10)
    assert bool(jnp.all(jnp.isfinite(out)))
    assert bool(jnp.allclose(jnp.sum(out, axis=1), 1.0, atol=1e-4))
    # Validate against a pure-JAX/XLA f32 reference (kernel uses bf16 matmul
    # inputs + approx-reciprocal sigmoid -> loose tolerance).
    ref = _ref_forward(params, x)
    assert bool(jnp.allclose(out, ref, atol=2e-2)), (out, ref)
    print("KERNEL_OK")
</pallas_src>

<mosaic_0001>
module attributes {stable_mosaic.version = 11 : i64} {
  func.func @_wdcnn2_kernel(%arg0: i32, %arg1: memref<1x228x128xbf16, #tpu.memory_space<vmem>>, %arg2: memref<128x16xbf16, #tpu.memory_space<vmem>>, %arg3: memref<1x16xf32, #tpu.memory_space<vmem>>, %arg4: memref<3x16x32xbf16, #tpu.memory_space<vmem>>, %arg5: memref<1x32xf32, #tpu.memory_space<vmem>>, %arg6: memref<2x32x64xbf16, #tpu.memory_space<vmem>>, %arg7: memref<1x64xf32, #tpu.memory_space<vmem>>, %arg8: memref<3x64x64xbf16, #tpu.memory_space<vmem>>, %arg9: memref<1x64xf32, #tpu.memory_space<vmem>>, %arg10: memref<3x64x64xbf16, #tpu.memory_space<vmem>>, %arg11: memref<1x64xf32, #tpu.memory_space<vmem>>, %arg12: memref<384x100xbf16, #tpu.memory_space<vmem>>, %arg13: memref<1x100xf32, #tpu.memory_space<vmem>>, %arg14: memref<100x10xbf16, #tpu.memory_space<vmem>>, %arg15: memref<1x10xf32, #tpu.memory_space<vmem>>, %arg16: memref<1x1x10xf32, #tpu.memory_space<vmem>>, %arg17: memref<228x16xf32, #tpu.memory_space<vmem>>, %arg18: memref<116x16xf32, #tpu.memory_space<vmem>>, %arg19: memref<114x32xf32, #tpu.memory_space<vmem>>, %arg20: memref<59x32xf32, #tpu.memory_space<vmem>>, %arg21: memref<58x64xf32, #tpu.memory_space<vmem>>, %arg22: memref<31x64xf32, #tpu.memory_space<vmem>>, %arg23: memref<29x64xf32, #tpu.memory_space<vmem>>) attributes {dimension_semantics = [#tpu.dimension_semantics<parallel>], iteration_bounds = array<i64: 2>, scalar_prefetch = 0 : i64, scratch_operands = 7 : i64, tpu.core_type = #tpu.core_type<tc>, window_params = [{transform_indices = @transform_0, window_bounds = array<i64: 1, 228, 128>}, {pipeline_mode = #tpu.pipeline_mode<synchronous>, transform_indices = @transform_1, window_bounds = array<i64: 128, 16>}, {pipeline_mode = #tpu.pipeline_mode<synchronous>, transform_indices = @transform_2, window_bounds = array<i64: 1, 16>}, {pipeline_mode = #tpu.pipeline_mode<synchronous>, transform_indices = @transform_3, window_bounds = array<i64: 3, 16, 32>}, {pipeline_mode = #tpu.pipeline_mode<synchronous>, transform_indices = @transform_4, window_bounds = array<i64: 1, 32>}, {pipeline_mode = #tpu.pipeline_mode<synchronous>, transform_indices = @transform_5, window_bounds = array<i64: 2, 32, 64>}, {pipeline_mode = #tpu.pipeline_mode<synchronous>, transform_indices = @transform_6, window_bounds = array<i64: 1, 64>}, {pipeline_mode = #tpu.pipeline_mode<synchronous>, transform_indices = @transform_7, window_bounds = array<i64: 3, 64, 64>}, {pipeline_mode = #tpu.pipeline_mode<synchronous>, transform_indices = @transform_8, window_bounds = array<i64: 1, 64>}, {pipeline_mode = #tpu.pipeline_mode<synchronous>, transform_indices = @transform_9, window_bounds = array<i64: 3, 64, 64>}, {pipeline_mode = #tpu.pipeline_mode<synchronous>, transform_indices = @transform_10, window_bounds = array<i64: 1, 64>}, {pipeline_mode = #tpu.pipeline_mode<synchronous>, transform_indices = @transform_11, window_bounds = array<i64: 384, 100>}, {pipeline_mode = #tpu.pipeline_mode<synchronous>, transform_indices = @transform_12, window_bounds = array<i64: 1, 100>}, {pipeline_mode = #tpu.pipeline_mode<synchronous>, transform_indices = @transform_13, window_bounds = array<i64: 100, 10>}, {pipeline_mode = #tpu.pipeline_mode<synchronous>, transform_indices = @transform_14, window_bounds = array<i64: 1, 10>}, {transform_indices = @transform_15, window_bounds = array<i64: 1, 1, 10>}]} {
    %c0 = arith.constant 0 : index
    %c0_0 = arith.constant 0 : index
    %c0_1 = arith.constant 0 : index
    %0 = vector.load %arg1[%c0, %c0_0, %c0_1] : memref<1x228x128xbf16, #tpu.memory_space<vmem>>, vector<1x228x128xbf16>
    %1 = vector.shape_cast %0 : vector<1x228x128xbf16> to vector<228x128xbf16>
    %c0_2 = arith.constant 0 : index
    %c0_3 = arith.constant 0 : index
    %2 = vector.load %arg2[%c0_2, %c0_3] : memref<128x16xbf16, #tpu.memory_space<vmem>>, vector<128x16xbf16>
    %cst = arith.constant dense<0.000000e+00> : vector<228x16xf32>
    %3 = tpu.matmul %1, %2, %cst {dimension_numbers = #tpu.dot_dimension_numbers<[1], [0], [0], [1], [0, 0, 1, 1], [], []>} : vector<228x128xbf16>, vector<128x16xbf16>, vector<228x16xf32> -> vector<228x16xf32>
    %c0_4 = arith.constant 0 : index
    %c0_5 = arith.constant 0 : index
    %4 = vector.load %arg3[%c0_4, %c0_5] : memref<1x16xf32, #tpu.memory_space<vmem>>, vector<1x16xf32>
    %5 = vector.broadcast %4 : vector<1x16xf32> to vector<228x16xf32>
    %6 = arith.addf %3, %5 : vector<228x16xf32>
    %cst_6 = arith.constant 0.000000e+00 : f32
    %7 = vector.broadcast %cst_6 : f32 to vector<228x16xf32>
    %8 = arith.maximumf %6, %7 : vector<228x16xf32>
    %c0_7 = arith.constant 0 : index
    %c0_8 = arith.constant 0 : index
    %9 = vector.load %arg17[%c0_7, %c0_8] : memref<228x16xf32, #tpu.memory_space<vmem>>, vector<228x16xf32>
    tpu.vector_store %arg17[%c0_7, %c0_8], %8 {strides = array<i32>} : memref<228x16xf32, #tpu.memory_space<vmem>>, vector<228x16xf32>,
    %c0_9 = arith.constant 0 : index
    %c0_10 = arith.constant 0 : index
    %10 = tpu.strided_load %arg17[%c0_9, %c0_10] {strides = array<i32: 2, 1>} : memref<228x16xf32, #tpu.memory_space<vmem>>, vector<114x16xf32>
    %c1 = arith.constant 1 : index
    %c0_11 = arith.constant 0 : index
    %11 = tpu.strided_load %arg17[%c1, %c0_11] {strides = array<i32: 2, 1>} : memref<228x16xf32, #tpu.memory_space<vmem>>, vector<114x16xf32>
    %12 = arith.maximumf %10, %11 : vector<114x16xf32>
    %cst_12 = arith.constant 0.000000e+00 : f32
    %13 = vector.broadcast %cst_12 : f32 to vector<116x16xf32>
    %c0_13 = arith.constant 0 : index
    %c0_14 = arith.constant 0 : index
    %14 = vector.load %arg18[%c0_13, %c0_14] : memref<116x16xf32, #tpu.memory_space<vmem>>, vector<116x16xf32>
    tpu.vector_store %arg18[%c0_13, %c0_14], %13 {strides = array<i32>} : memref<116x16xf32, #tpu.memory_space<vmem>>, vector<116x16xf32>,
    %c1_15 = arith.constant 1 : index
    %c0_16 = arith.constant 0 : index
    %15 = vector.load %arg18[%c1_15, %c0_16] : memref<116x16xf32, #tpu.memory_space<vmem>>, vector<114x16xf32>
    tpu.vector_store %arg18[%c1_15, %c0_16], %12 {strides = array<i32>} : memref<116x16xf32, #tpu.memory_space<vmem>>, vector<114x16xf32>,
    %c0_17 = arith.constant 0 : index
    %c0_18 = arith.constant 0 : index
    %16 = vector.load %arg5[%c0_17, %c0_18] : memref<1x32xf32, #tpu.memory_space<vmem>>, vector<1x32xf32>
    %c0_19 = arith.constant 0 : index
    %c0_20 = arith.constant 0 : index
    %17 = vector.load %arg18[%c0_19, %c0_20] : memref<116x16xf32, #tpu.memory_space<vmem>>, vector<114x16xf32>
    %18 = arith.truncf %17 : vector<114x16xf32> to vector<114x16xbf16>
    %c0_21 = arith.constant 0 : index
    %c0_22 = arith.constant 0 : index
    %c0_23 = arith.constant 0 : index
    %19 = vector.load %arg4[%c0_21, %c0_22, %c0_23] : memref<3x16x32xbf16, #tpu.memory_space<vmem>>, vector<1x16x32xbf16>
    %20 = vector.shape_cast %19 : vector<1x16x32xbf16> to vector<16x32xbf16>
    %cst_24 = arith.constant dense<0.000000e+00> : vector<114x32xf32>
    %21 = tpu.matmul %18, %20, %cst_24 {dimension_numbers = #tpu.dot_dimension_numbers<[1], [0], [0], [1], [0, 0, 1, 1], [], []>} : vector<114x16xbf16>, vector<16x32xbf16>, vector<114x32xf32> -> vector<114x32xf32>
    %22 = vector.broadcast %16 : vector<1x32xf32> to vector<114x32xf32>
    %23 = arith.addf %22, %21 : vector<114x32xf32>
    %c1_25 = arith.constant 1 : index
    %c0_26 = arith.constant 0 : index
    %24 = vector.load %arg18[%c1_25, %c0_26] : memref<116x16xf32, #tpu.memory_space<vmem>>, vector<114x16xf32>
    %25 = arith.truncf %24 : vector<114x16xf32> to vector<114x16xbf16>
    %c1_27 = arith.constant 1 : index
    %c0_28 = arith.constant 0 : index
    %c0_29 = arith.constant 0 : index
    %26 = vector.load %arg4[%c1_27, %c0_28, %c0_29] : memref<3x16x32xbf16, #tpu.memory_space<vmem>>, vector<1x16x32xbf16>
    %27 = vector.shape_cast %26 : vector<1x16x32xbf16> to vector<16x32xbf16>
    %cst_30 = arith.constant dense<0.000000e+00> : vector<114x32xf32>
    %28 = tpu.matmul %25, %27, %cst_30 {dimension_numbers = #tpu.dot_dimension_numbers<[1], [0], [0], [1], [0, 0, 1, 1], [], []>} : vector<114x16xbf16>, vector<16x32xbf16>, vector<114x32xf32> -> vector<114x32xf32>
    %29 = arith.addf %23, %28 : vector<114x32xf32>
    %c2 = arith.constant 2 : index
    %c0_31 = arith.constant 0 : index
    %30 = vector.load %arg18[%c2, %c0_31] : memref<116x16xf32, #tpu.memory_space<vmem>>, vector<114x16xf32>
    %31 = arith.truncf %30 : vector<114x16xf32> to vector<114x16xbf16>
    %c2_32 = arith.constant 2 : index
    %c0_33 = arith.constant 0 : index
    %c0_34 = arith.constant 0 : index
    %32 = vector.load %arg4[%c2_32, %c0_33, %c0_34] : memref<3x16x32xbf16, #tpu.memory_space<vmem>>, vector<1x16x32xbf16>
    %33 = vector.shape_cast %32 : vector<1x16x32xbf16> to vector<16x32xbf16>
    %cst_35 = arith.constant dense<0.000000e+00> : vector<114x32xf32>
    %34 = tpu.matmul %31, %33, %cst_35 {dimension_numbers = #tpu.dot_dimension_numbers<[1], [0], [0], [1], [0, 0, 1, 1], [], []>} : vector<114x16xbf16>, vector<16x32xbf16>, vector<114x32xf32> -> vector<114x32xf32>
    %35 = arith.addf %29, %34 : vector<114x32xf32>
    %cst_36 = arith.constant 0.000000e+00 : f32
    %36 = vector.broadcast %cst_36 : f32 to vector<114x32xf32>
    %37 = arith.maximumf %35, %36 : vector<114x32xf32>
    %c0_37 = arith.constant 0 : index
    %c0_38 = arith.constant 0 : index
    %38 = vector.load %arg19[%c0_37, %c0_38] : memref<114x32xf32, #tpu.memory_space<vmem>>, vector<114x32xf32>
    tpu.vector_store %arg19[%c0_37, %c0_38], %37 {strides = array<i32>} : memref<114x32xf32, #tpu.memory_space<vmem>>, vector<114x32xf32>,
    %c0_39 = arith.constant 0 : index
    %c0_40 = arith.constant 0 : index
    %39 = tpu.strided_load %arg19[%c0_39, %c0_40] {strides = array<i32: 2, 1>} : memref<114x32xf32, #tpu.memory_space<vmem>>, vector<57x32xf32>
    %c1_41 = arith.constant 1 : index
    %c0_42 = arith.constant 0 : index
    %40 = tpu.strided_load %arg19[%c1_41, %c0_42] {strides = array<i32: 2, 1>} : memref<114x32xf32, #tpu.memory_space<vmem>>, vector<57x32xf32>
    %41 = arith.maximumf %39, %40 : vector<57x32xf32>
    %cst_43 = arith.constant 0.000000e+00 : f32
    %42 = vector.broadcast %cst_43 : f32 to vector<59x32xf32>
    %c0_44 = arith.constant 0 : index
    %c0_45 = arith.constant 0 : index
    %43 = vector.load %arg20[%c0_44, %c0_45] : memref<59x32xf32, #tpu.memory_space<vmem>>, vector<59x32xf32>
    tpu.vector_store %arg20[%c0_44, %c0_45], %42 {strides = array<i32>} : memref<59x32xf32, #tpu.memory_space<vmem>>, vector<59x32xf32>,
    %c1_46 = arith.constant 1 : index
    %c0_47 = arith.constant 0 : index
    %44 = vector.load %arg20[%c1_46, %c0_47] : memref<59x32xf32, #tpu.memory_space<vmem>>, vector<57x32xf32>
    tpu.vector_store %arg20[%c1_46, %c0_47], %41 {strides = array<i32>} : memref<59x32xf32, #tpu.memory_space<vmem>>, vector<57x32xf32>,
    %c0_48 = arith.constant 0 : index
    %c0_49 = arith.constant 0 : index
    %45 = vector.load %arg7[%c0_48, %c0_49] : memref<1x64xf32, #tpu.memory_space<vmem>>, vector<1x64xf32>
    %c0_50 = arith.constant 0 : index
    %c0_51 = arith.constant 0 : index
    %46 = vector.load %arg20[%c0_50, %c0_51] : memref<59x32xf32, #tpu.memory_space<vmem>>, vector<58x32xf32>
    %47 = arith.truncf %46 : vector<58x32xf32> to vector<58x32xbf16>
    %c0_52 = arith.constant 0 : index
    %c0_53 = arith.constant 0 : index
    %c0_54 = arith.constant 0 : index
    %48 = vector.load %arg6[%c0_52, %c0_53, %c0_54] : memref<2x32x64xbf16, #tpu.memory_space<vmem>>, vector<1x32x64xbf16>
    %49 = vector.shape_cast %48 : vector<1x32x64xbf16> to vector<32x64xbf16>
    %cst_55 = arith.constant dense<0.000000e+00> : vector<58x64xf32>
    %50 = tpu.matmul %47, %49, %cst_55 {dimension_numbers = #tpu.dot_dimension_numbers<[1], [0], [0], [1], [0, 0, 1, 1], [], []>} : vector<58x32xbf16>, vector<32x64xbf16>, vector<58x64xf32> -> vector<58x64xf32>
    %51 = vector.broadcast %45 : vector<1x64xf32> to vector<58x64xf32>
    %52 = arith.addf %51, %50 : vector<58x64xf32>
    %c1_56 = arith.constant 1 : index
    %c0_57 = arith.constant 0 : index
    %53 = vector.load %arg20[%c1_56, %c0_57] : memref<59x32xf32, #tpu.memory_space<vmem>>, vector<58x32xf32>
    %54 = arith.truncf %53 : vector<58x32xf32> to vector<58x32xbf16>
    %c1_58 = arith.constant 1 : index
    %c0_59 = arith.constant 0 : index
    %c0_60 = arith.constant 0 : index
    %55 = vector.load %arg6[%c1_58, %c0_59, %c0_60] : memref<2x32x64xbf16, #tpu.memory_space<vmem>>, vector<1x32x64xbf16>
    %56 = vector.shape_cast %55 : vector<1x32x64xbf16> to vector<32x64xbf16>
    %cst_61 = arith.constant dense<0.000000e+00> : vector<58x64xf32>
    %57 = tpu.matmul %54, %56, %cst_61 {dimension_numbers = #tpu.dot_dimension_numbers<[1], [0], [0], [1], [0, 0, 1, 1], [], []>} : vector<58x32xbf16>, vector<32x64xbf16>, vector<58x64xf32> -> vector<58x64xf32>
    %58 = arith.addf %52, %57 : vector<58x64xf32>
    %cst_62 = arith.constant 0.000000e+00 : f32
    %59 = vector.broadcast %cst_62 : f32 to vector<58x64xf32>
    %60 = arith.maximumf %58, %59 : vector<58x64xf32>
    %c0_63 = arith.constant 0 : index
    %c0_64 = arith.constant 0 : index
    %61 = vector.load %arg21[%c0_63, %c0_64] : memref<58x64xf32, #tpu.memory_space<vmem>>, vector<58x64xf32>
    tpu.vector_store %arg21[%c0_63, %c0_64], %60 {strides = array<i32>} : memref<58x64xf32, #tpu.memory_space<vmem>>, vector<58x64xf32>,
    %c0_65 = arith.constant 0 : index
    %c0_66 = arith.constant 0 : index
    %62 = tpu.strided_load %arg21[%c0_65, %c0_66] {strides = array<i32: 2, 1>} : memref<58x64xf32, #tpu.memory_space<vmem>>, vector<29x64xf32>
    %c1_67 = arith.constant 1 : index
    %c0_68 = arith.constant 0 : index
    %63 = tpu.strided_load %arg21[%c1_67, %c0_68] {strides = array<i32: 2, 1>} : memref<58x64xf32, #tpu.memory_space<vmem>>, vector<29x64xf32>
    %64 = arith.maximumf %62, %63 : vector<29x64xf32>
    %cst_69 = arith.constant 0.000000e+00 : f32
    %65 = vector.broadcast %cst_69 : f32 to vector<31x64xf32>
    %c0_70 = arith.constant 0 : index
    %c0_71 = arith.constant 0 : index
    %66 = vector.load %arg22[%c0_70, %c0_71] : memref<31x64xf32, #tpu.memory_space<vmem>>, vector<31x64xf32>
    tpu.vector_store %arg22[%c0_70, %c0_71], %65 {strides = array<i32>} : memref<31x64xf32, #tpu.memory_space<vmem>>, vector<31x64xf32>,
    %c1_72 = arith.constant 1 : index
    %c0_73 = arith.constant 0 : index
    %67 = vector.load %arg22[%c1_72, %c0_73] : memref<31x64xf32, #tpu.memory_space<vmem>>, vector<29x64xf32>
    tpu.vector_store %arg22[%c1_72, %c0_73], %64 {strides = array<i32>} : memref<31x64xf32, #tpu.memory_space<vmem>>, vector<29x64xf32>,
    %c0_74 = arith.constant 0 : index
    %c0_75 = arith.constant 0 : index
    %68 = vector.load %arg9[%c0_74, %c0_75] : memref<1x64xf32, #tpu.memory_space<vmem>>, vector<1x64xf32>
    %c0_76 = arith.constant 0 : index
    %c0_77 = arith.constant 0 : index
    %69 = vector.load %arg22[%c0_76, %c0_77] : memref<31x64xf32, #tpu.memory_space<vmem>>, vector<29x64xf32>
    %70 = arith.truncf %69 : vector<29x64xf32> to vector<29x64xbf16>
    %c0_78 = arith.constant 0 : index
    %c0_79 = arith.constant 0 : index
    %c0_80 = arith.constant 0 : index
    %71 = vector.load %arg8[%c0_78, %c0_79, %c0_80] : memref<3x64x64xbf16, #tpu.memory_space<vmem>>, vector<1x64x64xbf16>
    %72 = vector.shape_cast %71 : vector<1x64x64xbf16> to vector<64x64xbf16>
    %cst_81 = arith.constant dense<0.000000e+00> : vector<29x64xf32>
    %73 = tpu.matmul %70, %72, %cst_81 {dimension_numbers = #tpu.dot_dimension_numbers<[1], [0], [0], [1], [0, 0, 1, 1], [], []>} : vector<29x64xbf16>, vector<64x64xbf16>, vector<29x64xf32> -> vector<29x64xf32>
    %74 = vector.broadcast %68 : vector<1x64xf32> to vector<29x64xf32>
    %75 = arith.addf %74, %73 : vector<29x64xf32>
    %c1_82 = arith.constant 1 : index
    %c0_83 = arith.constant 0 : index
    %76 = vector.load %arg22[%c1_82, %c0_83] : memref<31x64xf32, #tpu.memory_space<vmem>>, vector<29x64xf32>
    %77 = arith.truncf %76 : vector<29x64xf32> to vector<29x64xbf16>
    %c1_84 = arith.constant 1 : index
    %c0_85 = arith.constant 0 : index
    %c0_86 = arith.constant 0 : index
    %78 = vector.load %arg8[%c1_84, %c0_85, %c0_86] : memref<3x64x64xbf16, #tpu.memory_space<vmem>>, vector<1x64x64xbf16>
    %79 = vector.shape_cast %78 : vector<1x64x64xbf16> to vector<64x64xbf16>
    %cst_87 = arith.constant dense<0.000000e+00> : vector<29x64xf32>
    %80 = tpu.matmul %77, %79, %cst_87 {dimension_numbers = #tpu.dot_dimension_numbers<[1], [0], [0], [1], [0, 0, 1, 1], [], []>} : vector<29x64xbf16>, vector<64x64xbf16>, vector<29x64xf32> -> vector<29x64xf32>
    %81 = arith.addf %75, %80 : vector<29x64xf32>
    %c2_88 = arith.constant 2 : index
    %c0_89 = arith.constant 0 : index
    %82 = vector.load %arg22[%c2_88, %c0_89] : memref<31x64xf32, #tpu.memory_space<vmem>>, vector<29x64xf32>
    %83 = arith.truncf %82 : vector<29x64xf32> to vector<29x64xbf16>
    %c2_90 = arith.constant 2 : index
    %c0_91 = arith.constant 0 : index
    %c0_92 = arith.constant 0 : index
    %84 = vector.load %arg8[%c2_90, %c0_91, %c0_92] : memref<3x64x64xbf16, #tpu.memory_space<vmem>>, vector<1x64x64xbf16>
    %85 = vector.shape_cast %84 : vector<1x64x64xbf16> to vector<64x64xbf16>
    %cst_93 = arith.constant dense<0.000000e+00> : vector<29x64xf32>
    %86 = tpu.matmul %83, %85, %cst_93 {dimension_numbers = #tpu.dot_dimension_numbers<[1], [0], [0], [1], [0, 0, 1, 1], [], []>} : vector<29x64xbf16>, vector<64x64xbf16>, vector<29x64xf32> -> vector<29x64xf32>
    %87 = arith.addf %81, %86 : vector<29x64xf32>
    %cst_94 = arith.constant 0.000000e+00 : f32
    %88 = vector.broadcast %cst_94 : f32 to vector<29x64xf32>
    %89 = arith.maximumf %87, %88 : vector<29x64xf32>
    %c0_95 = arith.constant 0 : index
    %c0_96 = arith.constant 0 : index
    %90 = vector.load %arg23[%c0_95, %c0_96] : memref<29x64xf32, #tpu.memory_space<vmem>>, vector<29x64xf32>
    tpu.vector_store %arg23[%c0_95, %c0_96], %89 {strides = array<i32>} : memref<29x64xf32, #tpu.memory_space<vmem>>, vector<29x64xf32>,
    %c0_97 = arith.constant 0 : index
    %c0_98 = arith.constant 0 : index
    %91 = tpu.strided_load %arg23[%c0_97, %c0_98] {strides = array<i32: 2, 1>} : memref<29x64xf32, #tpu.memory_space<vmem>>, vector<14x64xf32>
    %c1_99 = arith.constant 1 : index
    %c0_100 = arith.constant 0 : index
    %92 = tpu.strided_load %arg23[%c1_99, %c0_100] {strides = array<i32: 2, 1>} : memref<29x64xf32, #tpu.memory_space<vmem>>, vector<14x64xf32>
    %93 = arith.maximumf %91, %92 : vector<14x64xf32>
    %c0_101 = arith.constant 0 : index
    %c0_102 = arith.constant 0 : index
    %94 = vector.load %arg11[%c0_101, %c0_102] : memref<1x64xf32, #tpu.memory_space<vmem>>, vector<1x64xf32>
    %95 = vector.extract_strided_slice %93 {offsets = [0, 0], sizes = [12, 64], strides = [1, 1]} : vector<14x64xf32> to vector<12x64xf32>
    %96 = arith.truncf %95 : vector<12x64xf32> to vector<12x64xbf16>
    %c0_103 = arith.constant 0 : index
    %c0_104 = arith.constant 0 : index
    %c0_105 = arith.constant 0 : index
    %97 = vector.load %arg10[%c0_103, %c0_104, %c0_105] : memref<3x64x64xbf16, #tpu.memory_space<vmem>>, vector<1x64x64xbf16>
    %98 = vector.shape_cast %97 : vector<1x64x64xbf16> to vector<64x64xbf16>
    %cst_106 = arith.constant dense<0.000000e+00> : vector<12x64xf32>
    %99 = tpu.matmul %96, %98, %cst_106 {dimension_numbers = #tpu.dot_dimension_numbers<[1], [0], [0], [1], [0, 0, 1, 1], [], []>} : vector<12x64xbf16>, vector<64x64xbf16>, vector<12x64xf32> -> vector<12x64xf32>
    %100 = vector.broadcast %94 : vector<1x64xf32> to vector<12x64xf32>
    %101 = arith.addf %100, %99 : vector<12x64xf32>
    %102 = vector.extract_strided_slice %93 {offsets = [1, 0], sizes = [12, 64], strides = [1, 1]} : vector<14x64xf32> to vector<12x64xf32>
    %103 = arith.truncf %102 : vector<12x64xf32> to vector<12x64xbf16>
    %c1_107 = arith.constant 1 : index
    %c0_108 = arith.constant 0 : index
    %c0_109 = arith.constant 0 : index
    %104 = vector.load %arg10[%c1_107, %c0_108, %c0_109] : memref<3x64x64xbf16, #tpu.memory_space<vmem>>, vector<1x64x64xbf16>
    %105 = vector.shape_cast %104 : vector<1x64x64xbf16> to vector<64x64xbf16>
    %cst_110 = arith.constant dense<0.000000e+00> : vector<12x64xf32>
    %106 = tpu.matmul %103, %105, %cst_110 {dimension_numbers = #tpu.dot_dimension_numbers<[1], [0], [0], [1], [0, 0, 1, 1], [], []>} : vector<12x64xbf16>, vector<64x64xbf16>, vector<12x64xf32> -> vector<12x64xf32>
    %107 = arith.addf %101, %106 : vector<12x64xf32>
    %108 = vector.extract_strided_slice %93 {offsets = [2, 0], sizes = [12, 64], strides = [1, 1]} : vector<14x64xf32> to vector<12x64xf32>
    %109 = arith.truncf %108 : vector<12x64xf32> to vector<12x64xbf16>
    %c2_111 = arith.constant 2 : index
    %c0_112 = arith.constant 0 : index
    %c0_113 = arith.constant 0 : index
    %110 = vector.load %arg10[%c2_111, %c0_112, %c0_113] : memref<3x64x64xbf16, #tpu.memory_space<vmem>>, vector<1x64x64xbf16>
    %111 = vector.shape_cast %110 : vector<1x64x64xbf16> to vector<64x64xbf16>
    %cst_114 = arith.constant dense<0.000000e+00> : vector<12x64xf32>
    %112 = tpu.matmul %109, %111, %cst_114 {dimension_numbers = #tpu.dot_dimension_numbers<[1], [0], [0], [1], [0, 0, 1, 1], [], []>} : vector<12x64xbf16>, vector<64x64xbf16>, vector<12x64xf32> -> vector<12x64xf32>
    %113 = arith.addf %107, %112 : vector<12x64xf32>
    %cst_115 = arith.constant 0.000000e+00 : f32
    %114 = vector.broadcast %cst_115 : f32 to vector<12x64xf32>
    %115 = arith.maximumf %113, %114 : vector<12x64xf32>
    %c0_116 = arith.constant 0 : index
    %c0_117 = arith.constant 0 : index
    %116 = vector.load %arg13[%c0_116, %c0_117] : memref<1x100xf32, #tpu.memory_space<vmem>>, vector<1x100xf32>
    %117 = vector.extract_strided_slice %115 {offsets = [0, 0], sizes = [1, 64], strides = [1, 1]} : vector<12x64xf32> to vector<1x64xf32>
    %118 = vector.extract_strided_slice %115 {offsets = [1, 0], sizes = [1, 64], strides = [1, 1]} : vector<12x64xf32> to vector<1x64xf32>
    %119 = arith.maximumf %117, %118 : vector<1x64xf32>
    %120 = arith.truncf %119 : vector<1x64xf32> to vector<1x64xbf16>
    %c0_118 = arith.constant 0 : index
    %c0_119 = arith.constant 0 : index
    %121 = vector.load %arg12[%c0_118, %c0_119] : memref<384x100xbf16, #tpu.memory_space<vmem>>, vector<64x100xbf16>
    %cst_120 = arith.constant dense<0.000000e+00> : vector<1x100xf32>
    %122 = tpu.matmul %120, %121, %cst_120 {dimension_numbers = #tpu.dot_dimension_numbers<[1], [0], [0], [1], [0, 0, 1, 1], [], []>} : vector<1x64xbf16>, vector<64x100xbf16>, vector<1x100xf32> -> vector<1x100xf32>
    %123 = arith.addf %116, %122 : vector<1x100xf32>
    %124 = vector.extract_strided_slice %115 {offsets = [2, 0], sizes = [1, 64], strides = [1, 1]} : vector<12x64xf32> to vector<1x64xf32>
    %125 = vector.extract_strided_slice %115 {offsets = [3, 0], sizes = [1, 64], strides = [1, 1]} : vector<12x64xf32> to vector<1x64xf32>
    %126 = arith.maximumf %124, %125 : vector<1x64xf32>
    %127 = arith.truncf %126 : vector<1x64xf32> to vector<1x64xbf16>
    %c64 = arith.constant 64 : index
    %c0_121 = arith.constant 0 : index
    %128 = vector.load %arg12[%c64, %c0_121] : memref<384x100xbf16, #tpu.memory_space<vmem>>, vector<64x100xbf16>
    %cst_122 = arith.constant dense<0.000000e+00> : vector<1x100xf32>
    %129 = tpu.matmul %127, %128, %cst_122 {dimension_numbers = #tpu.dot_dimension_numbers<[1], [0], [0], [1], [0, 0, 1, 1], [], []>} : vector<1x64xbf16>, vector<64x100xbf16>, vector<1x100xf32> -> vector<1x100xf32>
    %130 = arith.addf %123, %129 : vector<1x100xf32>
    %131 = vector.extract_strided_slice %115 {offsets = [4, 0], sizes = [1, 64], strides = [1, 1]} : vector<12x64xf32> to vector<1x64xf32>
    %132 = vector.extract_strided_slice %115 {offsets = [5, 0], sizes = [1, 64], strides = [1, 1]} : vector<12x64xf32> to vector<1x64xf32>
    %133 = arith.maximumf %131, %132 : vector<1x64xf32>
    %134 = arith.truncf %133 : vector<1x64xf32> to vector<1x64xbf16>
    %c128 = arith.constant 128 : index
    %c0_123 = arith.constant 0 : index
    %135 = vector.load %arg12[%c128, %c0_123] : memref<384x100xbf16, #tpu.memory_space<vmem>>, vector<64x100xbf16>
    %cst_124 = arith.constant dense<0.000000e+00> : vector<1x100xf32>
    %136 = tpu.matmul %134, %135, %cst_124 {dimension_numbers = #tpu.dot_dimension_numbers<[1], [0], [0], [1], [0, 0, 1, 1], [], []>} : vector<1x64xbf16>, vector<64x100xbf16>, vector<1x100xf32> -> vector<1x100xf32>
    %137 = arith.addf %130, %136 : vector<1x100xf32>
    %138 = vector.extract_strided_slice %115 {offsets = [6, 0], sizes = [1, 64], strides = [1, 1]} : vector<12x64xf32> to vector<1x64xf32>
    %139 = vector.extract_strided_slice %115 {offsets = [7, 0], sizes = [1, 64], strides = [1, 1]} : vector<12x64xf32> to vector<1x64xf32>
    %140 = arith.maximumf %138, %139 : vector<1x64xf32>
    %141 = arith.truncf %140 : vector<1x64xf32> to vector<1x64xbf16>
    %c192 = arith.constant 192 : index
    %c0_125 = arith.constant 0 : index
    %142 = vector.load %arg12[%c192, %c0_125] : memref<384x100xbf16, #tpu.memory_space<vmem>>, vector<64x100xbf16>
    %cst_126 = arith.constant dense<0.000000e+00> : vector<1x100xf32>
    %143 = tpu.matmul %141, %142, %cst_126 {dimension_numbers = #tpu.dot_dimension_numbers<[1], [0], [0], [1], [0, 0, 1, 1], [], []>} : vector<1x64xbf16>, vector<64x100xbf16>, vector<1x100xf32> -> vector<1x100xf32>
    %144 = arith.addf %137, %143 : vector<1x100xf32>
    %145 = vector.extract_strided_slice %115 {offsets = [8, 0], sizes = [1, 64], strides = [1, 1]} : vector<12x64xf32> to vector<1x64xf32>
    %146 = vector.extract_strided_slice %115 {offsets = [9, 0], sizes = [1, 64], strides = [1, 1]} : vector<12x64xf32> to vector<1x64xf32>
    %147 = arith.maximumf %145, %146 : vector<1x64xf32>
    %148 = arith.truncf %147 : vector<1x64xf32> to vector<1x64xbf16>
    %c256 = arith.constant 256 : index
    %c0_127 = arith.constant 0 : index
    %149 = vector.load %arg12[%c256, %c0_127] : memref<384x100xbf16, #tpu.memory_space<vmem>>, vector<64x100xbf16>
    %cst_128 = arith.constant dense<0.000000e+00> : vector<1x100xf32>
    %150 = tpu.matmul %148, %149, %cst_128 {dimension_numbers = #tpu.dot_dimension_numbers<[1], [0], [0], [1], [0, 0, 1, 1], [], []>} : vector<1x64xbf16>, vector<64x100xbf16>, vector<1x100xf32> -> vector<1x100xf32>
    %151 = arith.addf %144, %150 : vector<1x100xf32>
    %152 = vector.extract_strided_slice %115 {offsets = [10, 0], sizes = [1, 64], strides = [1, 1]} : vector<12x64xf32> to vector<1x64xf32>
    %153 = vector.extract_strided_slice %115 {offsets = [11, 0], sizes = [1, 64], strides = [1, 1]} : vector<12x64xf32> to vector<1x64xf32>
    %154 = arith.maximumf %152, %153 : vector<1x64xf32>
    %155 = arith.truncf %154 : vector<1x64xf32> to vector<1x64xbf16>
    %c320 = arith.constant 320 : index
    %c0_129 = arith.constant 0 : index
    %156 = vector.load %arg12[%c320, %c0_129] : memref<384x100xbf16, #tpu.memory_space<vmem>>, vector<64x100xbf16>
    %cst_130 = arith.constant dense<0.000000e+00> : vector<1x100xf32>
    %157 = tpu.matmul %155, %156, %cst_130 {dimension_numbers = #tpu.dot_dimension_numbers<[1], [0], [0], [1], [0, 0, 1, 1], [], []>} : vector<1x64xbf16>, vector<64x100xbf16>, vector<1x100xf32> -> vector<1x100xf32>
    %158 = arith.addf %151, %157 : vector<1x100xf32>
    %cst_131 = arith.constant 0.000000e+00 : f32
    %159 = vector.broadcast %cst_131 : f32 to vector<1x100xf32>
    %160 = arith.subf %159, %158 : vector<1x100xf32>
    %161 = math.exp %160 : vector<1x100xf32>
    %cst_132 = arith.constant 1.000000e+00 : f32
    %162 = vector.broadcast %cst_132 : f32 to vector<1x100xf32>
    %163 = arith.addf %162, %161 : vector<1x100xf32>
    %164 = tpu.reciprocal %163 {approx = true} : vector<1x100xf32> -> vector<1x100xf32>
    %165 = arith.truncf %164 : vector<1x100xf32> to vector<1x100xbf16>
    %c0_133 = arith.constant 0 : index
    %c0_134 = arith.constant 0 : index
    %166 = vector.load %arg14[%c0_133, %c0_134] : memref<100x10xbf16, #tpu.memory_space<vmem>>, vector<100x10xbf16>
    %cst_135 = arith.constant dense<0.000000e+00> : vector<1x10xf32>
    %167 = tpu.matmul %165, %166, %cst_135 {dimension_numbers = #tpu.dot_dimension_numbers<[1], [0], [0], [1], [0, 0, 1, 1], [], []>} : vector<1x100xbf16>, vector<100x10xbf16>, vector<1x10xf32> -> vector<1x10xf32>
    %c0_136 = arith.constant 0 : index
    %c0_137 = arith.constant 0 : index
    %168 = vector.load %arg15[%c0_136, %c0_137] : memref<1x10xf32, #tpu.memory_space<vmem>>, vector<1x10xf32>
    %169 = arith.addf %167, %168 : vector<1x10xf32>
    %cst_138 = arith.constant dense<0xFF800000> : vector<1xf32>
    %170 = vector.multi_reduction <maximumf>, %169, %cst_138 [1] : vector<1x10xf32> to vector<1xf32>
    %171 = vector.shape_cast %170 : vector<1xf32> to vector<1x1xf32>
    %172 = vector.broadcast %171 : vector<1x1xf32> to vector<1x10xf32>
    %173 = arith.subf %169, %172 : vector<1x10xf32>
    %174 = math.exp %173 : vector<1x10xf32>
    %cst_139 = arith.constant dense<0.000000e+00> : vector<1xf32>
    %175 = vector.multi_reduction <add>, %174, %cst_139 [1] : vector<1x10xf32> to vector<1xf32>
    %176 = vector.shape_cast %175 : vector<1xf32> to vector<1x1xf32>
    %177 = vector.broadcast %176 : vector<1x1xf32> to vector<1x10xf32>
    %178 = arith.divf %174, %177 : vector<1x10xf32>
    %c0_140 = arith.constant 0 : index
    %c0_141 = arith.constant 0 : index
    %c0_142 = arith.constant 0 : index
    %179 = vector.load %arg16[%c0_140, %c0_141, %c0_142] : memref<1x1x10xf32, #tpu.memory_space<vmem>>, vector<1x1x10xf32>
    %180 = vector.shape_cast %179 : vector<1x1x10xf32> to vector<1x10xf32>
    %181 = vector.shape_cast %178 : vector<1x10xf32> to vector<1x1x10xf32>
    tpu.vector_store %arg16[%c0_140, %c0_141, %c0_142], %181 {strides = array<i32>} : memref<1x1x10xf32, #tpu.memory_space<vmem>>, vector<1x1x10xf32>,
    return
  }
  func.func @transform_0(%arg0: i32) -> (i32, i32, i32) {
    %c0_i32 = arith.constant 0 : i32
    %c0_i32_0 = arith.constant 0 : i32
    %c0_i32_1 = arith.constant 0 : i32
    return %arg0, %c0_i32, %c0_i32_0 : i32, i32, i32
  }
  func.func @transform_1(%arg0: i32) -> (i32, i32) {
    %c0_i32 = arith.constant 0 : i32
    %c0_i32_0 = arith.constant 0 : i32
    %c0_i32_1 = arith.constant 0 : i32
    return %c0_i32, %c0_i32_0 : i32, i32
  }
  func.func @transform_2(%arg0: i32) -> (i32, i32) {
    %c0_i32 = arith.constant 0 : i32
    %c0_i32_0 = arith.constant 0 : i32
    %c0_i32_1 = arith.constant 0 : i32
    return %c0_i32, %c0_i32_0 : i32, i32
  }
  func.func @transform_3(%arg0: i32) -> (i32, i32, i32) {
    %c0_i32 = arith.constant 0 : i32
    %c0_i32_0 = arith.constant 0 : i32
    %c0_i32_1 = arith.constant 0 : i32
    %c0_i32_2 = arith.constant 0 : i32
    return %c0_i32, %c0_i32_0, %c0_i32_1 : i32, i32, i32
  }
  func.func @transform_4(%arg0: i32) -> (i32, i32) {
    %c0_i32 = arith.constant 0 : i32
    %c0_i32_0 = arith.constant 0 : i32
    %c0_i32_1 = arith.constant 0 : i32
    return %c0_i32, %c0_i32_0 : i32, i32
  }
  func.func @transform_5(%arg0: i32) -> (i32, i32, i32) {
    %c0_i32 = arith.constant 0 : i32
    %c0_i32_0 = arith.constant 0 : i32
    %c0_i32_1 = arith.constant 0 : i32
    %c0_i32_2 = arith.constant 0 : i32
    return %c0_i32, %c0_i32_0, %c0_i32_1 : i32, i32, i32
  }
  func.func @transform_6(%arg0: i32) -> (i32, i32) {
    %c0_i32 = arith.constant 0 : i32
    %c0_i32_0 = arith.constant 0 : i32
    %c0_i32_1 = arith.constant 0 : i32
    return %c0_i32, %c0_i32_0 : i32, i32
  }
  func.func @transform_7(%arg0: i32) -> (i32, i32, i32) {
    %c0_i32 = arith.constant 0 : i32
    %c0_i32_0 = arith.constant 0 : i32
    %c0_i32_1 = arith.constant 0 : i32
    %c0_i32_2 = arith.constant 0 : i32
    return %c0_i32, %c0_i32_0, %c0_i32_1 : i32, i32, i32
  }
  func.func @transform_8(%arg0: i32) -> (i32, i32) {
    %c0_i32 = arith.constant 0 : i32
    %c0_i32_0 = arith.constant 0 : i32
    %c0_i32_1 = arith.constant 0 : i32
    return %c0_i32, %c0_i32_0 : i32, i32
  }
  func.func @transform_9(%arg0: i32) -> (i32, i32, i32) {
    %c0_i32 = arith.constant 0 : i32
    %c0_i32_0 = arith.constant 0 : i32
    %c0_i32_1 = arith.constant 0 : i32
    %c0_i32_2 = arith.constant 0 : i32
    return %c0_i32, %c0_i32_0, %c0_i32_1 : i32, i32, i32
  }
  func.func @transform_10(%arg0: i32) -> (i32, i32) {
    %c0_i32 = arith.constant 0 : i32
    %c0_i32_0 = arith.constant 0 : i32
    %c0_i32_1 = arith.constant 0 : i32
    return %c0_i32, %c0_i32_0 : i32, i32
  }
  func.func @transform_11(%arg0: i32) -> (i32, i32) {
    %c0_i32 = arith.constant 0 : i32
    %c0_i32_0 = arith.constant 0 : i32
    %c0_i32_1 = arith.constant 0 : i32
    return %c0_i32, %c0_i32_0 : i32, i32
  }
  func.func @transform_12(%arg0: i32) -> (i32, i32) {
    %c0_i32 = arith.constant 0 : i32
    %c0_i32_0 = arith.constant 0 : i32
    %c0_i32_1 = arith.constant 0 : i32
    return %c0_i32, %c0_i32_0 : i32, i32
  }
  func.func @transform_13(%arg0: i32) -> (i32, i32) {
    %c0_i32 = arith.constant 0 : i32
    %c0_i32_0 = arith.constant 0 : i32
    %c0_i32_1 = arith.constant 0 : i32
    return %c0_i32, %c0_i32_0 : i32, i32
  }
  func.func @transform_14(%arg0: i32) -> (i32, i32) {
    %c0_i32 = arith.constant 0 : i32
    %c0_i32_0 = arith.constant 0 : i32
    %c0_i32_1 = arith.constant 0 : i32
    return %c0_i32, %c0_i32_0 : i32, i32
  }
  func.func @transform_15(%arg0: i32) -> (i32, i32, i32) {
    %c0_i32 = arith.constant 0 : i32
    %c0_i32_0 = arith.constant 0 : i32
    %c0_i32_1 = arith.constant 0 : i32
    return %arg0, %c0_i32, %c0_i32_0 : i32, i32, i32
  }
}

</mosaic_0001>

<llo_original>
// kernel: wdcnn2_forward.1
$region0: #{wdcnn2_forward.1}
  #allocation0 [shape = 'u32[]', space=smem, size = 0x4, offset = 0x4, fixed_abs, tag = 'smem constant byte address 0x4 - core index']
  #allocation1 [shape = 'u32[144,128]{1,0:T(1,128)}', space=vmem, size = 0x12000, scoped, tag = 'internal scratch']
  #allocation2 [shape = 'f32[228,16]{1,0:T(8,128)}', space=vmem, size = 0x1d000, scoped, tag = 'scratch operand']
  #allocation3 [shape = 'f32[116,16]{1,0:T(8,128)}', space=vmem, size = 0xf000, scoped, tag = 'scratch operand']
  #allocation4 [shape = 'f32[114,32]{1,0:T(8,128)}', space=vmem, size = 0xf000, scoped, tag = 'scratch operand']
  #allocation5 [shape = 'f32[59,32]{1,0:T(8,128)}', space=vmem, size = 0x8000, scoped, tag = 'scratch operand']
  #allocation6 [shape = 'f32[58,64]{1,0:T(8,128)}', space=vmem, size = 0x8000, scoped, tag = 'scratch operand']
  #allocation7 [shape = 'f32[31,64]{1,0:T(8,128)}', space=vmem, size = 0x4000, scoped, tag = 'scratch operand']
  #allocation8 [shape = 'f32[29,64]{1,0:T(8,128)}', space=vmem, size = 0x4000, scoped, tag = 'scratch operand']
  %s0 = inlined_call_operand.vmem [shape: bf16[2,228,128], index: 0, kind: input, shape index: {}]
  %s1 = inlined_call_operand.vmem [shape: bf16[128,16], index: 1, kind: input, shape index: {}]
  %s2 = inlined_call_operand.vmem [shape: f32[1,16], index: 2, kind: input, shape index: {}]
  %s3 = inlined_call_operand.vmem [shape: bf16[3,16,32], index: 3, kind: input, shape index: {}]
  %s4 = inlined_call_operand.vmem [shape: f32[1,32], index: 4, kind: input, shape index: {}]
  %s5 = inlined_call_operand.vmem [shape: bf16[2,32,64], index: 5, kind: input, shape index: {}]
  %s6 = inlined_call_operand.vmem [shape: f32[1,64], index: 6, kind: input, shape index: {}]
  %s7 = inlined_call_operand.vmem [shape: bf16[3,64,64], index: 7, kind: input, shape index: {}]
  %s8 = inlined_call_operand.vmem [shape: f32[1,64], index: 8, kind: input, shape index: {}]
  %s9 = inlined_call_operand.vmem [shape: bf16[3,64,64], index: 9, kind: input, shape index: {}]
  %s10 = inlined_call_operand.vmem [shape: f32[1,64], index: 10, kind: input, shape index: {}]
  %s11 = inlined_call_operand.vmem [shape: bf16[384,100], index: 11, kind: input, shape index: {}]
  %s12 = inlined_call_operand.vmem [shape: f32[1,100], index: 12, kind: input, shape index: {}]
  %s13 = inlined_call_operand.vmem [shape: bf16[100,10], index: 13, kind: input, shape index: {}]
  %s14 = inlined_call_operand.vmem [shape: f32[1,10], index: 14, kind: input, shape index: {}]
  %s15 = inlined_call_operand.hbm [shape: f32[2,1,10], index: 15, kind: output, shape index: {}]
  %s16 = sld [smem:[#allocation0]]
  $region93: #{wdcnn2_forward.1} parent=0
    _
  %s18 = ssub.s32 1, %s16
  %s19 = scalar_select 0, %s18, %s16
  $region1: #{wdcnn2_forward.1} parent=0
    #allocation9 [shape = 'u8[1024]{0}', space=vmem, size = 0x400, scoped, tag = 'output window, operand 0']
    #allocation10 [shape = 's32[2]{0}', space=sflag, size = 0x8, scoped, tag = 'scoped memory for wdcnn2_forward.1']
    %20 = vsyncpa [#allocation10], 0
    %s21 = scalar_lea.sflag [#allocation10], 1
    %22 = vsyncpa %s21, 0
    loop: start=0, step=1, limit=4
    $region2: #{wdcnn2_forward.1} parent=1 // loop_pre_header
      _
    $region3: #{wdcnn2_forward.1} parent=1 // loop_header
      %s24 = sphi 0, %s28
      %p25 = scmp.ge.s32.totalorder %s24, 4
      %s34 = sphi 0, %s36
      %s37 = sphi 0, %s34
      %s38 = sphi 0, %s37
      %s54 = sphi 0, %s38
      %s58 = sphi 0, %s58
      %s60 = sphi 0, %s58
      %s61 = sphi 0, %s60
      %s75 = sphi 0, %s61
      %s79 = sphi 0, %s79
      %s81 = sphi 0, %s79
      %s82 = sphi 0, %s81
      %s96 = sphi 0, %s82
      %s100 = sphi 0, %s100
      %s102 = sphi 0, %s100
      %s103 = sphi 0, %s102
      %s117 = sphi 0, %s103
      %s121 = sphi 0, %s121
      %s123 = sphi 0, %s121
      %s124 = sphi 0, %s123
      %s138 = sphi 0, %s124
      %s142 = sphi 0, %s142
      %s144 = sphi 0, %s142
      %s145 = sphi 0, %s144
      %s159 = sphi 0, %s145
      %s163 = sphi 0, %s163
      %s165 = sphi 0, %s163
      %s166 = sphi 0, %s165
      %s180 = sphi 0, %s166
      %s184 = sphi 0, %s184
      %s186 = sphi 0, %s184
      %s187 = sphi 0, %s186
      %s201 = sphi 0, %s187
      %s205 = sphi 0, %s205
      %s207 = sphi 0, %s205
      %s208 = sphi 0, %s207
      %s222 = sphi 0, %s208
      %s226 = sphi 0, %s226
      %s228 = sphi 0, %s226
      %s229 = sphi 0, %s228
      %s243 = sphi 0, %s229
      %s247 = sphi 0, %s247
      %s249 = sphi 0, %s247
      %s250 = sphi 0, %s249
      %s264 = sphi 0, %s250
      %s268 = sphi 0, %s268
      %s270 = sphi 0, %s268
      %s271 = sphi 0, %s270
      %s285 = sphi 0, %s271
      %s289 = sphi 0, %s289
      %s291 = sphi 0, %s289
      %s292 = sphi 0, %s291
      %s306 = sphi 0, %s292
      %s310 = sphi 0, %s310
      %s312 = sphi 0, %s310
      %s313 = sphi 0, %s312
      %s327 = sphi 0, %s313
      %s331 = sphi 0, %s331
      %s333 = sphi 0, %s331
      %s334 = sphi 0, %s333
      %s348 = sphi 0, %s334
      %s354 = sphi 0, %s356
      %s357 = sphi 0, %s354
      %s358 = sphi 0, %s357
      %s374 = sphi 0, %s358
    $region4: #{wdcnn2_forward.1} parent=1 // loop_header_branch
      %27 = sbr.rel (%p25) target = $region8
    $region5: #{wdcnn2_forward.1} parent=1 // loop_body
      %s29 = ssub.s32 %s24, 1
      %s30 = ssub.s32 %s24, 2
      %s31 = sadd.s32 %s24, 1
      %s32 = ssub.s32 %s24, %s31
      %p33 = scmp.eq.s32.totalorder %s32, 0
      %s35 = sadd.s32 %s34, 1
      %s36 = scalar_select %p33, %s34, %s35
      %p39 = pneg %p33
      %p40 = scmp.eq.s32.totalorder %s24, 1
      %p41 = por %p39, %p40
      %p42 = scmp.ne.s32.totalorder %s34, %s37
      %p43 = scmp.eq.s32.totalorder %s24, 0
      %p44 = por %p42, %p43
      %p45 = scmp.ne.s32.totalorder %s34, %s37
      %p46 = scmp.eq.s32.totalorder %s29, 1
      %p47 = por %p45, %p46
      %p48 = scmp.ne.s32.totalorder %s37, %s38
      %p49 = scmp.eq.s32.totalorder %s29, 0
      %p50 = por %p48, %p49
      %p51 = scmp.ne.s32.totalorder %s37, %s38
      %p52 = scmp.eq.s32.totalorder %s30, 1
      %p53 = por %p51, %p52
      %p55 = scmp.ne.s32.totalorder %s38, %s54
      %p56 = scmp.eq.s32.totalorder %s30, 0
      %p57 = por %p55, %p56
      %s59 = sadd.s32 %s58, 1
      %p62 = scmp.eq.s32.totalorder %s24, 1
      %p63 = scmp.ne.s32.totalorder %s58, %s60
      %p64 = scmp.eq.s32.totalorder %s24, 0
      %p65 = por %p63, %p64
      %p66 = scmp.ne.s32.totalorder %s58, %s60
      %p67 = scmp.eq.s32.totalorder %s29, 1
      %p68 = por %p66, %p67
      %p69 = scmp.ne.s32.totalorder %s60, %s61
      %p70 = scmp.eq.s32.totalorder %s29, 0
      %p71 = por %p69, %p70
      %p72 = scmp.ne.s32.totalorder %s60, %s61
      %p73 = scmp.eq.s32.totalorder %s30, 1
      %p74 = por %p72, %p73
      %p76 = scmp.ne.s32.totalorder %s61, %s75
      %p77 = scmp.eq.s32.totalorder %s30, 0
      %p78 = por %p76, %p77
      %s80 = sadd.s32 %s79, 1
      %p83 = scmp.eq.s32.totalorder %s24, 1
      %p84 = scmp.ne.s32.totalorder %s79, %s81
      %p85 = scmp.eq.s32.totalorder %s24, 0
      %p86 = por %p84, %p85
      %p87 = scmp.ne.s32.totalorder %s79, %s81
      %p88 = scmp.eq.s32.totalorder %s29, 1
      %p89 = por %p87, %p88
      %p90 = scmp.ne.s32.totalorder %s81, %s82
      %p91 = scmp.eq.s32.totalorder %s29, 0
      %p92 = por %p90, %p91
      %p93 = scmp.ne.s32.totalorder %s81, %s82
      %p94 = scmp.eq.s32.totalorder %s30, 1
      %p95 = por %p93, %p94
      %p97 = scmp.ne.s32.totalorder %s82, %s96
      %p98 = scmp.eq.s32.totalorder %s30, 0
      %p99 = por %p97, %p98
      %s101 = sadd.s32 %s100, 1
      %p104 = scmp.eq.s32.totalorder %s24, 1
      %p105 = scmp.ne.s32.totalorder %s100, %s102
      %p106 = scmp.eq.s32.totalorder %s24, 0
      %p107 = por %p105, %p106
      %p108 = scmp.ne.s32.totalorder %s100, %s102
      %p109 = scmp.eq.s32.totalorder %s29, 1
      %p110 = por %p108, %p109
      %p111 = scmp.ne.s32.totalorder %s102, %s103
      %p112 = scmp.eq.s32.totalorder %s29, 0
      %p113 = por %p111, %p112
      %p114 = scmp.ne.s32.totalorder %s102, %s103
      %p115 = scmp.eq.s32.totalorder %s30, 1
      %p116 = por %p114, %p115
      %p118 = scmp.ne.s32.totalorder %s103, %s117
      %p119 = scmp.eq.s32.totalorder %s30, 0
      %p120 = por %p118, %p119
      %s122 = sadd.s32 %s121, 1
      %p125 = scmp.eq.s32.totalorder %s24, 1
      %p126 = scmp.ne.s32.totalorder %s121, %s123
      %p127 = scmp.eq.s32.totalorder %s24, 0
      %p128 = por %p126, %p127
      %p129 = scmp.ne.s32.totalorder %s121, %s123
      %p130 = scmp.eq.s32.totalorder %s29, 1
      %p131 = por %p129, %p130
      %p132 = scmp.ne.s32.totalorder %s123, %s124
      %p133 = scmp.eq.s32.totalorder %s29, 0
      %p134 = por %p132, %p133
      %p135 = scmp.ne.s32.totalorder %s123, %s124
      %p136 = scmp.eq.s32.totalorder %s30, 1
      %p137 = por %p135, %p136
      %p139 = scmp.ne.s32.totalorder %s124, %s138
      %p140 = scmp.eq.s32.totalorder %s30, 0
      %p141 = por %p139, %p140
      %s143 = sadd.s32 %s142, 1
      %p146 = scmp.eq.s32.totalorder %s24, 1
      %p147 = scmp.ne.s32.totalorder %s142, %s144
      %p148 = scmp.eq.s32.totalorder %s24, 0
      %p149 = por %p147, %p148
      %p150 = scmp.ne.s32.totalorder %s142, %s144
      %p151 = scmp.eq.s32.totalorder %s29, 1
      %p152 = por %p150, %p151
      %p153 = scmp.ne.s32.totalorder %s144, %s145
      %p154 = scmp.eq.s32.totalorder %s29, 0
      %p155 = por %p153, %p154
      %p156 = scmp.ne.s32.totalorder %s144, %s145
      %p157 = scmp.eq.s32.totalorder %s30, 1
      %p158 = por %p156, %p157
      %p160 = scmp.ne.s32.totalorder %s145, %s159
      %p161 = scmp.eq.s32.totalorder %s30, 0
      %p162 = por %p160, %p161
      %s164 = sadd.s32 %s163, 1
      %p167 = scmp.eq.s32.totalorder %s24, 1
      %p168 = scmp.ne.s32.totalorder %s163, %s165
      %p169 = scmp.eq.s32.totalorder %s24, 0
      %p170 = por %p168, %p169
      %p171 = scmp.ne.s32.totalorder %s163, %s165
      %p172 = scmp.eq.s32.totalorder %s29, 1
      %p173 = por %p171, %p172
      %p174 = scmp.ne.s32.totalorder %s165, %s166
      %p175 = scmp.eq.s32.totalorder %s29, 0
      %p176 = por %p174, %p175
      %p177 = scmp.ne.s32.totalorder %s165, %s166
      %p178 = scmp.eq.s32.totalorder %s30, 1
      %p179 = por %p177, %p178
      %p181 = scmp.ne.s32.totalorder %s166, %s180
      %p182 = scmp.eq.s32.totalorder %s30, 0
      %p183 = por %p181, %p182
      %s185 = sadd.s32 %s184, 1
      %p188 = scmp.eq.s32.totalorder %s24, 1
      %p189 = scmp.ne.s32.totalorder %s184, %s186
      %p190 = scmp.eq.s32.totalorder %s24, 0
      %p191 = por %p189, %p190
      %p192 = scmp.ne.s32.totalorder %s184, %s186
      %p193 = scmp.eq.s32.totalorder %s29, 1
      %p194 = por %p192, %p193
      %p195 = scmp.ne.s32.totalorder %s186, %s187
      %p196 = scmp.eq.s32.totalorder %s29, 0
      %p197 = por %p195, %p196
      %p198 = scmp.ne.s32.totalorder %s186, %s187
      %p199 = scmp.eq.s32.totalorder %s30, 1
      %p200 = por %p198, %p199
      %p202 = scmp.ne.s32.totalorder %s187, %s201
      %p203 = scmp.eq.s32.totalorder %s30, 0
      %p204 = por %p202, %p203
      %s206 = sadd.s32 %s205, 1
      %p209 = scmp.eq.s32.totalorder %s24, 1
      %p210 = scmp.ne.s32.totalorder %s205, %s207
      %p211 = scmp.eq.s32.totalorder %s24, 0
      %p212 = por %p210, %p211
      %p213 = scmp.ne.s32.totalorder %s205, %s207
      %p214 = scmp.eq.s32.totalorder %s29, 1
      %p215 = por %p213, %p214
      %p216 = scmp.ne.s32.totalorder %s207, %s208
      %p217 = scmp.eq.s32.totalorder %s29, 0
      %p218 = por %p216, %p217
      %p219 = scmp.ne.s32.totalorder %s207, %s208
      %p220 = scmp.eq.s32.totalorder %s30, 1
      %p221 = por %p219, %p220
      %p223 = scmp.ne.s32.totalorder %s208, %s222
      %p224 = scmp.eq.s32.totalorder %s30, 0
      %p225 = por %p223, %p224
      %s227 = sadd.s32 %s226, 1
      %p230 = scmp.eq.s32.totalorder %s24, 1
      %p231 = scmp.ne.s32.totalorder %s226, %s228
      %p232 = scmp.eq.s32.totalorder %s24, 0
      %p233 = por %p231, %p232
      %p234 = scmp.ne.s32.totalorder %s226, %s228
      %p235 = scmp.eq.s32.totalorder %s29, 1
      %p236 = por %p234, %p235
      %p237 = scmp.ne.s32.totalorder %s228, %s229
      %p238 = scmp.eq.s32.totalorder %s29, 0
      %p239 = por %p237, %p238
      %p240 = scmp.ne.s32.totalorder %s228, %s229
      %p241 = scmp.eq.s32.totalorder %s30, 1
      %p242 = por %p240, %p241
      %p244 = scmp.ne.s32.totalorder %s229, %s243
      %p245 = scmp.eq.s32.totalorder %s30, 0
      %p246 = por %p244, %p245
      %s248 = sadd.s32 %s247, 1
      %p251 = scmp.eq.s32.totalorder %s24, 1
      %p252 = scmp.ne.s32.totalorder %s247, %s249
      %p253 = scmp.eq.s32.totalorder %s24, 0
      %p254 = por %p252, %p253
      %p255 = scmp.ne.s32.totalorder %s247, %s249
      %p256 = scmp.eq.s32.totalorder %s29, 1
      %p257 = por %p255, %p256
      %p258 = scmp.ne.s32.totalorder %s249, %s250
      %p259 = scmp.eq.s32.totalorder %s29, 0
      %p260 = por %p258, %p259
      %p261 = scmp.ne.s32.totalorder %s249, %s250
      %p262 = scmp.eq.s32.totalorder %s30, 1
      %p263 = por %p261, %p262
      %p265 = scmp.ne.s32.totalorder %s250, %s264
      %p266 = scmp.eq.s32.totalorder %s30, 0
      %p267 = por %p265, %p266
      %s269 = sadd.s32 %s268, 1
      %p272 = scmp.eq.s32.totalorder %s24, 1
      %p273 = scmp.ne.s32.totalorder %s268, %s270
      %p274 = scmp.eq.s32.totalorder %s24, 0
      %p275 = por %p273, %p274
      %p276 = scmp.ne.s32.totalorder %s268, %s270
      %p277 = scmp.eq.s32.totalorder %s29, 1
      %p278 = por %p276, %p277
      %p279 = scmp.ne.s32.totalorder %s270, %s271
      %p280 = scmp.eq.s32.totalorder %s29, 0
      %p281 = por %p279, %p280
      %p282 = scmp.ne.s32.totalorder %s270, %s271
      %p283 = scmp.eq.s32.totalorder %s30, 1
      %p284 = por %p282, %p283
      %p286 = scmp.ne.s32.totalorder %s271, %s285
      %p287 = scmp.eq.s32.totalorder %s30, 0
      %p288 = por %p286, %p287
      %s290 = sadd.s32 %s289, 1
      %p293 = scmp.eq.s32.totalorder %s24, 1
      %p294 = scmp.ne.s32.totalorder %s289, %s291
      %p295 = scmp.eq.s32.totalorder %s24, 0
      %p296 = por %p294, %p295
      %p297 = scmp.ne.s32.totalorder %s289, %s291
      %p298 = scmp.eq.s32.totalorder %s29, 1
      %p299 = por %p297, %p298
      %p300 = scmp.ne.s32.totalorder %s291, %s292
      %p301 = scmp.eq.s32.totalorder %s29, 0
      %p302 = por %p300, %p301
      %p303 = scmp.ne.s32.totalorder %s291, %s292
      %p304 = scmp.eq.s32.totalorder %s30, 1
      %p305 = por %p303, %p304
      %p307 = scmp.ne.s32.totalorder %s292, %s306
      %p308 = scmp.eq.s32.totalorder %s30, 0
      %p309 = por %p307, %p308
      %s311 = sadd.s32 %s310, 1
      %p314 = scmp.eq.s32.totalorder %s24, 1
      %p315 = scmp.ne.s32.totalorder %s310, %s312
      %p316 = scmp.eq.s32.totalorder %s24, 0
      %p317 = por %p315, %p316
      %p318 = scmp.ne.s32.totalorder %s310, %s312
      %p319 = scmp.eq.s32.totalorder %s29, 1
      %p320 = por %p318, %p319
      %p321 = scmp.ne.s32.totalorder %s312, %s313
      %p322 = scmp.eq.s32.totalorder %s29, 0
      %p323 = por %p321, %p322
      %p324 = scmp.ne.s32.totalorder %s312, %s313
      %p325 = scmp.eq.s32.totalorder %s30, 1
      %p326 = por %p324, %p325
      %p328 = scmp.ne.s32.totalorder %s313, %s327
      %p329 = scmp.eq.s32.totalorder %s30, 0
      %p330 = por %p328, %p329
      %s332 = sadd.s32 %s331, 1
      %p335 = scmp.eq.s32.totalorder %s24, 1
      %p336 = scmp.ne.s32.totalorder %s331, %s333
      %p337 = scmp.eq.s32.totalorder %s24, 0
      %p338 = por %p336, %p337
      %p339 = scmp.ne.s32.totalorder %s331, %s333
      %p340 = scmp.eq.s32.totalorder %s29, 1
      %p341 = por %p339, %p340
      %p342 = scmp.ne.s32.totalorder %s333, %s334
      %p343 = scmp.eq.s32.totalorder %s29, 0
      %p344 = por %p342, %p343
      %p345 = scmp.ne.s32.totalorder %s333, %s334
      %p346 = scmp.eq.s32.totalorder %s30, 1
      %p347 = por %p345, %p346
      %p349 = scmp.ne.s32.totalorder %s334, %s348
      %p350 = scmp.eq.s32.totalorder %s30, 0
      %p351 = por %p349, %p350
      %s352 = ssub.s32 %s24, %s31
      %p353 = scmp.eq.s32.totalorder %s352, 0
      %s355 = sadd.s32 %s354, 1
      %s356 = scalar_select %p353, %s354, %s355
      %p359 = pneg %p353
      %p360 = scmp.eq.s32.totalorder %s24, 1
      %p361 = por %p359, %p360
      %p362 = scmp.ne.s32.totalorder %s354, %s357
      %p363 = scmp.eq.s32.totalorder %s24, 0
      %p364 = por %p362, %p363
      %p365 = scmp.ne.s32.totalorder %s354, %s357
      %p366 = scmp.eq.s32.totalorder %s29, 1
      %p367 = por %p365, %p366
      %p368 = scmp.ne.s32.totalorder %s357, %s358
      %p369 = scmp.eq.s32.totalorder %s29, 0
      %p370 = por %p368, %p369
      %p371 = scmp.ne.s32.totalorder %s357, %s358
      %p372 = scmp.eq.s32.totalorder %s30, 1
      %p373 = por %p371, %p372
      %p375 = scmp.ne.s32.totalorder %s358, %s374
      %p376 = scmp.eq.s32.totalorder %s30, 0
      %p377 = por %p375, %p376
      %p378 = scmp.le.s32.totalorder 1, %s24
      %p379 = scmp.lt.s32.totalorder %s24, 3
      %p380 = pnand %p378, %p379
      %p381 = pneg %p380
      // Predicated region
      $region9: #{wdcnn2_forward.1} parent=5 // pred_check
        _
      $region10: #{wdcnn2_forward.1} parent=5 // pred_check_branch
        %383 = sbr.rel (%p380) target = $region12
      $region11: #{wdcnn2_forward.1} parent=5 // pred_region
        %s384 = ssub.s32 %s24, 1
        // Predicated region
        $region13: #{wdcnn2_forward.1} parent=11 // pred_check
          %p385 = pneg %p71
        $region14: #{wdcnn2_forward.1} parent=11 // pred_check_branch
          %387 = sbr.rel (%p385) target = $region16
        $region15: #{wdcnn2_forward.1} parent=11 // pred_region
          _
        $region16: #{wdcnn2_forward.1} parent=11 // pred_fallthru
          _
        // Predicated region
        $region17: #{wdcnn2_forward.1} parent=11 // pred_check
          %p388 = pneg %p92
        $region18: #{wdcnn2_forward.1} parent=11 // pred_check_branch
          %390 = sbr.rel (%p388) target = $region20
        $region19: #{wdcnn2_forward.1} parent=11 // pred_region
          _
        $region20: #{wdcnn2_forward.1} parent=11 // pred_fallthru
          _
        // Predicated region
        $region21: #{wdcnn2_forward.1} parent=11 // pred_check
          %p391 = pneg %p113
        $region22: #{wdcnn2_forward.1} parent=11 // pred_check_branch
          %393 = sbr.rel (%p391) target = $region24
        $region23: #{wdcnn2_forward.1} parent=11 // pred_region
          _
        $region24: #{wdcnn2_forward.1} parent=11 // pred_fallthru
          _
        // Predicated region
        $region25: #{wdcnn2_forward.1} parent=11 // pred_check
          %p394 = pneg %p134
        $region26: #{wdcnn2_forward.1} parent=11 // pred_check_branch
          %396 = sbr.rel (%p394) target = $region28
        $region27: #{wdcnn2_forward.1} parent=11 // pred_region
          _
        $region28: #{wdcnn2_forward.1} parent=11 // pred_fallthru
          _
        // Predicated region
        $region29: #{wdcnn2_forward.1} parent=11 // pred_check
          %p397 = pneg %p155
        $region30: #{wdcnn2_forward.1} parent=11 // pred_check_branch
          %399 = sbr.rel (%p397) target = $region32
        $region31: #{wdcnn2_forward.1} parent=11 // pred_region
          _
        $region32: #{wdcnn2_forward.1} parent=11 // pred_fallthru
          _
        // Predicated region
        $region33: #{wdcnn2_forward.1} parent=11 // pred_check
          %p400 = pneg %p176
        $region34: #{wdcnn2_forward.1} parent=11 // pred_check_branch
          %402 = sbr.rel (%p400) target = $region36
        $region35: #{wdcnn2_forward.1} parent=11 // pred_region
          _
        $region36: #{wdcnn2_forward.1} parent=11 // pred_fallthru
          _
        // Predicated region
        $region37: #{wdcnn2_forward.1} parent=11 // pred_check
          %p403 = pneg %p197
        $region38: #{wdcnn2_forward.1} parent=11 // pred_check_branch
          %405 = sbr.rel (%p403) target = $region40
        $region39: #{wdcnn2_forward.1} parent=11 // pred_region
          _
        $region40: #{wdcnn2_forward.1} parent=11 // pred_fallthru
          _
        // Predicated region
        $region41: #{wdcnn2_forward.1} parent=11 // pred_check
          %p406 = pneg %p218
        $region42: #{wdcnn2_forward.1} parent=11 // pred_check_branch
          %408 = sbr.rel (%p406) target = $region44
        $region43: #{wdcnn2_forward.1} parent=11 // pred_region
          _
        $region44: #{wdcnn2_forward.1} parent=11 // pred_fallthru
          _
        // Predicated region
        $region45: #{wdcnn2_forward.1} parent=11 // pred_check
          %p409 = pneg %p239
        $region46: #{wdcnn2_forward.1} parent=11 // pred_check_branch
          %411 = sbr.rel (%p409) target = $region48
        $region47: #{wdcnn2_forward.1} parent=11 // pred_region
          _
        $region48: #{wdcnn2_forward.1} parent=11 // pred_fallthru
          _
        // Predicated region
        $region49: #{wdcnn2_forward.1} parent=11 // pred_check
          %p412 = pneg %p260
        $region50: #{wdcnn2_forward.1} parent=11 // pred_check_branch
          %414 = sbr.rel (%p412) target = $region52
        $region51: #{wdcnn2_forward.1} parent=11 // pred_region
          _
        $region52: #{wdcnn2_forward.1} parent=11 // pred_fallthru
          _
        // Predicated region
        $region53: #{wdcnn2_forward.1} parent=11 // pred_check
          %p415 = pneg %p281
        $region54: #{wdcnn2_forward.1} parent=11 // pred_check_branch
          %417 = sbr.rel (%p415) target = $region56
        $region55: #{wdcnn2_forward.1} parent=11 // pred_region
          _
        $region56: #{wdcnn2_forward.1} parent=11 // pred_fallthru
          _
        // Predicated region
        $region57: #{wdcnn2_forward.1} parent=11 // pred_check
          %p418 = pneg %p302
        $region58: #{wdcnn2_forward.1} parent=11 // pred_check_branch
          %420 = sbr.rel (%p418) target = $region60
        $region59: #{wdcnn2_forward.1} parent=11 // pred_region
          _
        $region60: #{wdcnn2_forward.1} parent=11 // pred_fallthru
          _
        // Predicated region
        $region61: #{wdcnn2_forward.1} parent=11 // pred_check
          %p421 = pneg %p323
        $region62: #{wdcnn2_forward.1} parent=11 // pred_check_branch
          %423 = sbr.rel (%p421) target = $region64
        $region63: #{wdcnn2_forward.1} parent=11 // pred_region
          _
        $region64: #{wdcnn2_forward.1} parent=11 // pred_fallthru
          _
        // Predicated region
        $region65: #{wdcnn2_forward.1} parent=11 // pred_check
          %p424 = pneg %p344
        $region66: #{wdcnn2_forward.1} parent=11 // pred_check_branch
          %426 = sbr.rel (%p424) target = $region68
        $region67: #{wdcnn2_forward.1} parent=11 // pred_region
          _
        $region68: #{wdcnn2_forward.1} parent=11 // pred_fallthru
          _
      $region12: #{wdcnn2_forward.1} parent=5 // pred_fallthru
        _
      %p427 = scmp.lt.s32.totalorder %s24, 2
      // Predicated region
      $region69: #{wdcnn2_forward.1} parent=5 // pred_check
        %p428 = pneg %p427
      $region70: #{wdcnn2_forward.1} parent=5 // pred_check_branch
        %430 = sbr.rel (%p428) target = $region72
      $region71: #{wdcnn2_forward.1} parent=5 // pred_region
        // Predicated region
        $region73: #{wdcnn2_forward.1} parent=71 // pred_check
          %p431 = pneg %p44
        $region74: #{wdcnn2_forward.1} parent=71 // pred_check_branch
          %433 = sbr.rel (%p431) target = $region76
        $region75: #{wdcnn2_forward.1} parent=71 // pred_region
          %p434 = scmp.lt.s32.totalorder %s24, 1
          %s435 = scalar_select %p434, %s24, 1
          %s436 = smul.addr %s435, 29
          %s437 = smul.addr %s436, 4
          %s438 = scalar_lea.vmem %s0, %s437
        $region76: #{wdcnn2_forward.1} parent=71 // pred_fallthru
          _
      $region72: #{wdcnn2_forward.1} parent=5 // pred_fallthru
        _
      %p439 = scmp.le.s32.totalorder 1, %s24
      %p440 = scmp.lt.s32.totalorder %s24, 3
      %p441 = pnand %p439, %p440
      %p442 = pneg %p441
      // Predicated region
      $region77: #{wdcnn2_forward.1} parent=5 // pred_check
        _
      $region78: #{wdcnn2_forward.1} parent=5 // pred_check_branch
        %444 = sbr.rel (%p441) target = $region80
      $region79: #{wdcnn2_forward.1} parent=5 // pred_region
        %s445 = ssub.s32 %s24, 1
        %p446 = scmp.lt.s32.totalorder %s29, 1
        %s447 = scalar_select %p446, %s29, 1
        %s448 = smul.addr %s447, 29
        %s449 = smul.addr %s448, 4
        %s450 = scalar_lea.vmem %s0, %s449
        %p451 = pneg %p50
        %p452 = pneg %p47
        %p453 = pneg %p71
        %p454 = pneg %p68
        %p455 = pneg %p92
        %p456 = pneg %p89
        %p457 = pneg %p113
        %p458 = pneg %p110
        %p459 = pneg %p134
        %p460 = pneg %p131
        %p461 = pneg %p155
        %p462 = pneg %p152
        %p463 = pneg %p176
        %p464 = pneg %p173
        %p465 = pneg %p197
        %p466 = pneg %p194
        %p467 = pneg %p218
        %p468 = pneg %p215
        %p469 = pneg %p239
        %p470 = pneg %p236
        %p471 = pneg %p260
        %p472 = pneg %p257
        %p473 = pneg %p281
        %p474 = pneg %p278
        %p475 = pneg %p302
        %p476 = pneg %p299
        %p477 = pneg %p323
        %p478 = pneg %p320
        %p479 = pneg %p344
        %p480 = pneg %p341
        %p481 = pneg %p370
        %p482 = pneg %p367
        %s483 = sand.u32 %s357, 1
        %s484 = scalar_lea.sflag [#allocation10], %s483
        %s485 = sand.u32 %s357, 1
        %s486 = scalar_lea.vmem [#allocation9], %s485
        %p487 = scmp.lt.s32.totalorder %s29, 1
        %s488 = scalar_select %p487, %s29, 1
        %s489 = smul.addr %s488, 29
        %s490 = smul.addr %s489, 4
        %s491 = scalar_lea.vmem %s0, %s490
        %v493 = vld [vmem:[%s491] sm:$0xf]
        %v494 = vld [vmem:[%s491 + $0x4] sm:$0xf]
        %v495 = vld [vmem:[%s491 + $0x8] sm:$0xf]
        %v496 = vld [vmem:[%s491 + $0xc] sm:$0xf]
        %v497 = vld [vmem:[%s491 + $0x10] sm:$0xf]
        %v498 = vld [vmem:[%s491 + $0x14] sm:$0xf]
        %v499 = vld [vmem:[%s491 + $0x18] sm:$0xf]
        %v500 = vld [vmem:[%s491 + $0x1c] sm:$0xf]
        %v501 = vld [vmem:[%s491 + $0x20] sm:$0xf]
        %v502 = vld [vmem:[%s491 + $0x24] sm:$0xf]
        %v503 = vld [vmem:[%s491 + $0x28] sm:$0xf]
        %v504 = vld [vmem:[%s491 + $0x2c] sm:$0xf]
        %v505 = vld [vmem:[%s491 + $0x30] sm:$0xf]
        %v506 = vld [vmem:[%s491 + $0x34] sm:$0xf]
        %v507 = vld [vmem:[%s491 + $0x38] sm:$0xf]
        %v508 = vld [vmem:[%s491 + $0x3c] sm:$0xf]
        %v509 = vld [vmem:[%s491 + $0x40] sm:$0xf]
        %v510 = vld [vmem:[%s491 + $0x44] sm:$0xf]
        %v511 = vld [vmem:[%s491 + $0x48] sm:$0xf]
        %v512 = vld [vmem:[%s491 + $0x4c] sm:$0xf]
        %v513 = vld [vmem:[%s491 + $0x50] sm:$0xf]
        %v514 = vld [vmem:[%s491 + $0x54] sm:$0xf]
        %v515 = vld [vmem:[%s491 + $0x58] sm:$0xf]
        %v516 = vld [vmem:[%s491 + $0x5c] sm:$0xf]
        %v517 = vld [vmem:[%s491 + $0x60] sm:$0xf]
        %v518 = vld [vmem:[%s491 + $0x64] sm:$0xf]
        %v519 = vld [vmem:[%s491 + $0x68] sm:$0xf]
        %v520 = vld [vmem:[%s491 + $0x6c] sm:$0xf]
        %v521 = vld [vmem:[%s491 + $0x70] sm:$0x3]
        %v522 = vld [vmem:[%s1] sm:$0xf]
        %v523 = vld [vmem:[%s1 + $0x4] sm:$0xf]
        %v524 = vld [vmem:[%s1 + $0x8] sm:$0xf]
        %v525 = vld [vmem:[%s1 + $0xc] sm:$0xf]
        %v526 = vld [vmem:[%s1 + $0x10] sm:$0xf]
        %v527 = vld [vmem:[%s1 + $0x14] sm:$0xf]
        %v528 = vld [vmem:[%s1 + $0x18] sm:$0xf]
        %v529 = vld [vmem:[%s1 + $0x1c] sm:$0xf]
        %v530 = vld [vmem:[%s1 + $0x20] sm:$0xf]
        %v531 = vld [vmem:[%s1 + $0x24] sm:$0xf]
        %v532 = vld [vmem:[%s1 + $0x28] sm:$0xf]
        %v533 = vld [vmem:[%s1 + $0x2c] sm:$0xf]
        %v534 = vld [vmem:[%s1 + $0x30] sm:$0xf]
        %v535 = vld [vmem:[%s1 + $0x34] sm:$0xf]
        %v536 = vld [vmem:[%s1 + $0x38] sm:$0xf]
        %v537 = vld [vmem:[%s1 + $0x3c] sm:$0xf]
        %v538 = vld [vmem:[%s2] sm:$0x1]
        %v540 = vlaneseq
        %v541 = vshrl.u32 %v540, 7
        %v542 = vsub.s32 0, %v541
        %v543 = vrot.slane %v538, %v542
        %v574 = vunpack.c.l.b16 %v493
        %v575 = vunpack.c.l.b16 %v494
        %v576 = vunpack.c.l.b16 %v495
        %v577 = vunpack.c.l.b16 %v496
        %v578 = vunpack.c.l.b16 %v497
        %v579 = vunpack.c.l.b16 %v498
        %v580 = vunpack.c.l.b16 %v499
        %v581 = vunpack.c.l.b16 %v500
        %v582 = vunpack.c.l.b16 %v501
        %v583 = vunpack.c.l.b16 %v502
        %v584 = vunpack.c.l.b16 %v503
        %v585 = vunpack.c.l.b16 %v504
        %v586 = vunpack.c.l.b16 %v505
        %v587 = vunpack.c.l.b16 %v506
        %v588 = vunpack.c.l.b16 %v507
        %v589 = vunpack.c.l.b16 %v508
        %v590 = vunpack.c.l.b16 %v509
        %v591 = vunpack.c.l.b16 %v510
        %v592 = vunpack.c.l.b16 %v511
        %v593 = vunpack.c.l.b16 %v512
        %v594 = vunpack.c.l.b16 %v513
        %v595 = vunpack.c.l.b16 %v514
        %v596 = vunpack.c.l.b16 %v515
        %v597 = vunpack.c.l.b16 %v516
        %v598 = vunpack.c.l.b16 %v517
        %v599 = vunpack.c.l.b16 %v518
        %v600 = vunpack.c.l.b16 %v519
        %v601 = vunpack.c.l.b16 %v520
        %v602 = vunpack.c.l.b16 %v521
        %v603 = vpack.c.b16 %v575, %v574
        %v604 = vpack.c.b16 %v577, %v576
        %v605 = vpack.c.b16 %v579, %v578
        %v606 = vpack.c.b16 %v581, %v580
        %v607 = vpack.c.b16 %v583, %v582
        %v608 = vpack.c.b16 %v585, %v584
        %v609 = vpack.c.b16 %v587, %v586
        %v610 = vpack.c.b16 %v589, %v588
        %v611 = vpack.c.b16 %v591, %v590
        %v612 = vpack.c.b16 %v593, %v592
        %v613 = vpack.c.b16 %v595, %v594
        %v614 = vpack.c.b16 %v597, %v596
        %v615 = vpack.c.b16 %v599, %v598
        %v616 = vpack.c.b16 %v601, %v600
        %v617 = vpack.c.b16 %v602, %v602
        %v649 = vunpack.c.l.b16 %v522
        %v650 = vunpack.c.l.b16 %v523
        %v651 = vunpack.c.l.b16 %v524
        %v652 = vunpack.c.l.b16 %v525
        %v653 = vunpack.c.l.b16 %v526
        %v654 = vunpack.c.l.b16 %v527
        %v655 = vunpack.c.l.b16 %v528
        %v656 = vunpack.c.l.b16 %v529
        %v657 = vunpack.c.l.b16 %v530
        %v658 = vunpack.c.l.b16 %v531
        %v659 = vunpack.c.l.b16 %v532
        %v660 = vunpack.c.l.b16 %v533
        %v661 = vunpack.c.l.b16 %v534
        %v662 = vunpack.c.l.b16 %v535
        %v663 = vunpack.c.l.b16 %v536
        %v664 = vunpack.c.l.b16 %v537
        %v665 = vpack.c.b16 %v650, %v649
        %v666 = vpack.c.b16 %v652, %v651
        %v667 = vpack.c.b16 %v654, %v653
        %v668 = vpack.c.b16 %v656, %v655
        %v669 = vpack.c.b16 %v658, %v657
        %v670 = vpack.c.b16 %v660, %v659
        %v671 = vpack.c.b16 %v662, %v661
        %v672 = vpack.c.b16 %v664, %v663
        %681 = vmatprep.subr.bf16.mxu0 0
        %682 = vmatpush1.bf16.msra.mxu0 %v665
        %683 = vmatprep.subr.bf16.mxu0 0
        %684 = vmatpush1.bf16.msra.mxu0 %v666
        %685 = vmatprep.subr.bf16.mxu0 0
        %686 = vmatpush1.bf16.msra.mxu0 %v667
        %687 = vmatprep.subr.bf16.mxu0 0
        %688 = vmatpush1.bf16.msra.mxu0 %v668
        %689 = vmatprep.subr.bf16.mxu0 0
        %690 = vmatpush1.bf16.msra.mxu0 %v669
        %691 = vmatprep.subr.bf16.mxu0 0
        %692 = vmatpush1.bf16.msra.mxu0 %v670
        %693 = vmatprep.subr.bf16.mxu0 0
        %694 = vmatpush1.bf16.msra.mxu0 %v671
        %695 = vmatprep.subr.bf16.mxu0 0
        %696 = vmatpush1.bf16.msra.mxu0 %v672
        %697 = vmatprep.subr.bf16.mxu0 0
        %698 = vmatpush1.bf16.msra.mxu0 0
        %699 = vmatprep.subr.bf16.mxu0 0
        %700 = vmatpush1.bf16.msra.mxu0 0
        %701 = vmatprep.subr.bf16.mxu0 0
        %702 = vmatpush1.bf16.msra.mxu0 0
        %703 = vmatprep.subr.bf16.mxu0 0
        %704 = vmatpush1.bf16.msra.mxu0 0
        %705 = vmatprep.subr.bf16.mxu0 0
        %706 = vmatpush1.bf16.msra.mxu0 0
        %707 = vmatprep.subr.bf16.mxu0 0
        %708 = vmatpush1.bf16.msra.mxu0 0
        %709 = vmatprep.subr.bf16.mxu0 0
        %710 = vmatpush1.bf16.msra.mxu0 0
        %711 = vmatprep.subr.bf16.mxu0 0
        %712 = vmatpush1.bf16.msra.mxu0 0
        %713 = vmatprep.mubr.bf16.mxu0 0
        %714 = vmatmul.mubr.bf16.gmra.mrb[0].mxu0 %v603
        %v715 = vpop.f32.mrb[0].mxu0
        %v716 = vadd.f32 %v543, %v715
        %v717 = vpop.f32.mrb[0].mxu0
        %v718 = vpop.f32.mrb[0].mxu0
        %v719 = vadd.f32 %v543, %v718
        %v720 = vpop.f32.mrb[0].mxu0
        %721 = vmatprep.mubr.bf16.mxu0 0
        %722 = vmatmul.mubr.bf16.gmra.mrb[0].mxu0 %v604
        %v723 = vpop.f32.mrb[0].mxu0
        %v724 = vadd.f32 %v543, %v723
        %v725 = vpop.f32.mrb[0].mxu0
        %v726 = vpop.f32.mrb[0].mxu0
        %v727 = vadd.f32 %v543, %v726
        %v728 = vpop.f32.mrb[0].mxu0
        %729 = vmatprep.mubr.bf16.mxu0 0
        %730 = vmatmul.mubr.bf16.gmra.mrb[0].mxu0 %v605
        %v731 = vpop.f32.mrb[0].mxu0
        %v732 = vadd.f32 %v543, %v731
        %v733 = vpop.f32.mrb[0].mxu0
        %v734 = vpop.f32.mrb[0].mxu0
        %v735 = vadd.f32 %v543, %v734
        %v736 = vpop.f32.mrb[0].mxu0
        %737 = vmatprep.mubr.bf16.mxu0 0
        %738 = vmatmul.mubr.bf16.gmra.mrb[0].mxu0 %v606
        %v739 = vpop.f32.mrb[0].mxu0
        %v740 = vadd.f32 %v543, %v739
        %v741 = vpop.f32.mrb[0].mxu0
        %v742 = vpop.f32.mrb[0].mxu0
        %v743 = vadd.f32 %v543, %v742
        %v744 = vpop.f32.mrb[0].mxu0
        %745 = vmatprep.mubr.bf16.mxu0 0
        %746 = vmatmul.mubr.bf16.gmra.mrb[0].mxu0 %v607
        %v747 = vpop.f32.mrb[0].mxu0
        %v748 = vadd.f32 %v543, %v747
        %v749 = vpop.f32.mrb[0].mxu0
        %v750 = vpop.f32.mrb[0].mxu0
        %v751 = vadd.f32 %v543, %v750
        %v752 = vpop.f32.mrb[0].mxu0
        %753 = vmatprep.mubr.bf16.mxu0 0
        %754 = vmatmul.mubr.bf16.gmra.mrb[0].mxu0 %v608
        %v755 = vpop.f32.mrb[0].mxu0
        %v756 = vadd.f32 %v543, %v755
        %v757 = vpop.f32.mrb[0].mxu0
        %v758 = vpop.f32.mrb[0].mxu0
        %v759 = vadd.f32 %v543, %v758
        %v760 = vpop.f32.mrb[0].mxu0
        %761 = vmatprep.mubr.bf16.mxu0 0
        %762 = vmatmul.mubr.bf16.gmra.mrb[0].mxu0 %v609
        %v763 = vpop.f32.mrb[0].mxu0
        %v764 = vadd.f32 %v543, %v763
        %v765 = vpop.f32.mrb[0].mxu0
        %v766 = vpop.f32.mrb[0].mxu0
        %v767 = vadd.f32 %v543, %v766
        %v768 = vpop.f32.mrb[0].mxu0
        %769 = vmatprep.mubr.bf16.mxu0 0
        %770 = vmatmul.mubr.bf16.gmra.mrb[0].mxu0 %v610
        %v771 = vpop.f32.mrb[0].mxu0
        %v772 = vadd.f32 %v543, %v771
        %v773 = vpop.f32.mrb[0].mxu0
        %v774 = vpop.f32.mrb[0].mxu0
        %v775 = vadd.f32 %v543, %v774
        %v776 = vpop.f32.mrb[0].mxu0
        %777 = vmatprep.mubr.bf16.mxu0 0
        %778 = vmatmul.mubr.bf16.gmra.mrb[0].mxu0 %v611
        %v779 = vpop.f32.mrb[0].mxu0
        %v780 = vadd.f32 %v543, %v779
        %v781 = vpop.f32.mrb[0].mxu0
        %v782 = vpop.f32.mrb[0].mxu0
        %v783 = vadd.f32 %v543, %v782
        %v784 = vpop.f32.mrb[0].mxu0
        %785 = vmatprep.mubr.bf16.mxu0 0
        %786 = vmatmul.mubr.bf16.gmra.mrb[0].mxu0 %v612
        %v787 = vpop.f32.mrb[0].mxu0
        %v788 = vadd.f32 %v543, %v787
        %v789 = vpop.f32.mrb[0].mxu0
        %v790 = vpop.f32.mrb[0].mxu0
        %v791 = vadd.f32 %v543, %v790
        %v792 = vpop.f32.mrb[0].mxu0
        %793 = vmatprep.mubr.bf16.mxu0 0
        %794 = vmatmul.mubr.bf16.gmra.mrb[0].mxu0 %v613
        %v795 = vpop.f32.mrb[0].mxu0
        %v796 = vadd.f32 %v543, %v795
        %v797 = vpop.f32.mrb[0].mxu0
        %v798 = vpop.f32.mrb[0].mxu0
        %v799 = vadd.f32 %v543, %v798
        %v800 = vpop.f32.mrb[0].mxu0
        %801 = vmatprep.mubr.bf16.mxu0 0
        %802 = vmatmul.mubr.bf16.gmra.mrb[0].mxu0 %v614
        %v803 = vpop.f32.mrb[0].mxu0
        %v804 = vadd.f32 %v543, %v803
        %v805 = vpop.f32.mrb[0].mxu0
        %v806 = vpop.f32.mrb[0].mxu0
        %v807 = vadd.f32 %v543, %v806
        %v808 = vpop.f32.mrb[0].mxu0
        %809 = vmatprep.mubr.bf16.mxu0 0
        %810 = vmatmul.mubr.bf16.gmra.mrb[0].mxu0 %v615
        %v811 = vpop.f32.mrb[0].mxu0
        %v812 = vadd.f32 %v543, %v811
        %v813 = vpop.f32.mrb[0].mxu0
        %v814 = vpop.f32.mrb[0].mxu0
        %v815 = vadd.f32 %v543, %v814
        %v816 = vpop.f32.mrb[0].mxu0
        %817 = vmatprep.mubr.bf16.mxu0 0
        %818 = vmatmul.mubr.bf16.gmra.mrb[0].mxu0 %v616
        %v819 = vpop.f32.mrb[0].mxu0
        %v820 = vadd.f32 %v543, %v819
        %v821 = vpop.f32.mrb[0].mxu0
        %v822 = vpop.f32.mrb[0].mxu0
        %v823 = vadd.f32 %v543, %v822
        %v824 = vpop.f32.mrb[0].mxu0
        %825 = vmatprep.mubr.bf16.mxu0 0
        %826 = vmatmul.mubr.bf16.gmra.mrb[0].mxu0 %v617
        %v827 = vpop.f32.mrb[0].mxu0
        %v828 = vadd.f32 %v543, %v827
        %v829 = vpop.f32.mrb[0].mxu0
        %v830 = vpop.f32.mrb[0].mxu0
        %v831 = vpop.f32.mrb[0].mxu0
        %832 = vdwg.mxu0
        %v833 = vmax.f32 %v716, 0.0
        %v834 = vmax.f32 %v719, 0.0
        %v835 = vmax.f32 %v724, 0.0
        %v836 = vmax.f32 %v727, 0.0
        %v837 = vmax.f32 %v732, 0.0
        %v838 = vmax.f32 %v735, 0.0
        %v839 = vmax.f32 %v740, 0.0
        %v840 = vmax.f32 %v743, 0.0
        %v841 = vmax.f32 %v748, 0.0
        %v842 = vmax.f32 %v751, 0.0
        %v843 = vmax.f32 %v756, 0.0
        %v844 = vmax.f32 %v759, 0.0
        %v845 = vmax.f32 %v764, 0.0
        %v846 = vmax.f32 %v767, 0.0
        %v847 = vmax.f32 %v772, 0.0
        %v848 = vmax.f32 %v775, 0.0
        %v849 = vmax.f32 %v780, 0.0
        %v850 = vmax.f32 %v783, 0.0
        %v851 = vmax.f32 %v788, 0.0
        %v852 = vmax.f32 %v791, 0.0
        %v853 = vmax.f32 %v796, 0.0
        %v854 = vmax.f32 %v799, 0.0
        %v855 = vmax.f32 %v804, 0.0
        %v856 = vmax.f32 %v807, 0.0
        %v857 = vmax.f32 %v812, 0.0
        %v858 = vmax.f32 %v815, 0.0
        %v859 = vmax.f32 %v820, 0.0
        %v860 = vmax.f32 %v823, 0.0
        %v861 = vmax.f32 %v828, 0.0
        %vm862 = vcmask 130048
        %863 = vst.msk [vmem:[#allocation2] sm:$0xff] %vm862, %v833
        %864 = vst.msk [vmem:[#allocation2 + $0x8] sm:$0xff] %vm862, %v834
        %865 = vst.msk [vmem:[#allocation2 + $0x10] sm:$0xff] %vm862, %v835
        %866 = vst.msk [vmem:[#allocation2 + $0x18] sm:$0xff] %vm862, %v836
        %867 = vst.msk [vmem:[#allocation2 + $0x20] sm:$0xff] %vm862, %v837
        %868 = vst.msk [vmem:[#allocation2 + $0x28] sm:$0xff] %vm862, %v838
        %869 = vst.msk [vmem:[#allocation2 + $0x30] sm:$0xff] %vm862, %v839
        %870 = vst.msk [vmem:[#allocation2 + $0x38] sm:$0xff] %vm862, %v840
        %871 = vst.msk [vmem:[#allocation2 + $0x40] sm:$0xff] %vm862, %v841
        %872 = vst.msk [vmem:[#allocation2 + $0x48] sm:$0xff] %vm862, %v842
        %873 = vst.msk [vmem:[#allocation2 + $0x50] sm:$0xff] %vm862, %v843
        %874 = vst.msk [vmem:[#allocation2 + $0x58] sm:$0xff] %vm862, %v844
        %875 = vst.msk [vmem:[#allocation2 + $0x60] sm:$0xff] %vm862, %v845
        %876 = vst.msk [vmem:[#allocation2 + $0x68] sm:$0xff] %vm862, %v846
        %877 = vst.msk [vmem:[#allocation2 + $0x70] sm:$0xff] %vm862, %v847
        %878 = vst.msk [vmem:[#allocation2 + $0x78] sm:$0xff] %vm862, %v848
        %879 = vst.msk [vmem:[#allocation2 + $0x80] sm:$0xff] %vm862, %v849
        %880 = vst.msk [vmem:[#allocation2 + $0x88] sm:$0xff] %vm862, %v850
        %881 = vst.msk [vmem:[#allocation2 + $0x90] sm:$0xff] %vm862, %v851
        %882 = vst.msk [vmem:[#allocation2 + $0x98] sm:$0xff] %vm862, %v852
        %883 = vst.msk [vmem:[#allocation2 + $0xa0] sm:$0xff] %vm862, %v853
        %884 = vst.msk [vmem:[#allocation2 + $0xa8] sm:$0xff] %vm862, %v854
        %885 = vst.msk [vmem:[#allocation2 + $0xb0] sm:$0xff] %vm862, %v855
        %886 = vst.msk [vmem:[#allocation2 + $0xb8] sm:$0xff] %vm862, %v856
        %887 = vst.msk [vmem:[#allocation2 + $0xc0] sm:$0xff] %vm862, %v857
        %888 = vst.msk [vmem:[#allocation2 + $0xc8] sm:$0xff] %vm862, %v858
        %889 = vst.msk [vmem:[#allocation2 + $0xd0] sm:$0xff] %vm862, %v859
        %890 = vst.msk [vmem:[#allocation2 + $0xd8] sm:$0xff] %vm862, %v860
        %vm891 = vcmask 125952
        %892 = vst.msk [vmem:[#allocation2 + $0xe0] sm:$0xf] %vm891, %v861
        %v893 = vld [vmem:[#allocation2] ss:$2 sm:$0xff]
        %s894 = scalar_lea.vmem [#allocation2], 16
        %v895 = vld [vmem:[%s894] ss:$2 sm:$0xff]
        %s896 = scalar_lea.vmem [#allocation2], 32
        %v897 = vld [vmem:[%s896] ss:$2 sm:$0xff]
        %s898 = scalar_lea.vmem [#allocation2], 48
        %v899 = vld [vmem:[%s898] ss:$2 sm:$0xff]
        %s900 = scalar_lea.vmem [#allocation2], 64
        %v901 = vld [vmem:[%s900] ss:$2 sm:$0xff]
        %s902 = scalar_lea.vmem [#allocation2], 80
        %v903 = vld [vmem:[%s902] ss:$2 sm:$0xff]
        %s904 = scalar_lea.vmem [#allocation2], 96
        %v905 = vld [vmem:[%s904] ss:$2 sm:$0xff]
        %s906 = scalar_lea.vmem [#allocation2], 112
        %v907 = vld [vmem:[%s906] ss:$2 sm:$0xff]
        %s908 = scalar_lea.vmem [#allocation2], 128
        %v909 = vld [vmem:[%s908] ss:$2 sm:$0xff]
        %s910 = scalar_lea.vmem [#allocation2], 144
        %v911 = vld [vmem:[%s910] ss:$2 sm:$0xff]
        %s912 = scalar_lea.vmem [#allocation2], 160
        %v913 = vld [vmem:[%s912] ss:$2 sm:$0xff]
        %s914 = scalar_lea.vmem [#allocation2], 176
        %v915 = vld [vmem:[%s914] ss:$2 sm:$0xff]
        %s916 = scalar_lea.vmem [#allocation2], 192
        %v917 = vld [vmem:[%s916] ss:$2 sm:$0xff]
        %s918 = scalar_lea.vmem [#allocation2], 208
        %v919 = vld [vmem:[%s918] ss:$2 sm:$0xff]
        %s920 = scalar_lea.vmem [#allocation2], 224
        %v921 = vld [vmem:[%s920] ss:$2 sm:$0x3]
        %s922 = scalar_lea.vmem [#allocation2], 1
        %v923 = vld [vmem:[%s922] ss:$2 sm:$0xff]
        %s924 = scalar_lea.vmem [#allocation2], 17
        %v925 = vld [vmem:[%s924] ss:$2 sm:$0xff]
        %s926 = scalar_lea.vmem [#allocation2], 33
        %v927 = vld [vmem:[%s926] ss:$2 sm:$0xff]
        %s928 = scalar_lea.vmem [#allocation2], 49
        %v929 = vld [vmem:[%s928] ss:$2 sm:$0xff]
        %s930 = scalar_lea.vmem [#allocation2], 65
        %v931 = vld [vmem:[%s930] ss:$2 sm:$0xff]
        %s932 = scalar_lea.vmem [#allocation2], 81
        %v933 = vld [vmem:[%s932] ss:$2 sm:$0xff]
        %s934 = scalar_lea.vmem [#allocation2], 97
        %v935 = vld [vmem:[%s934] ss:$2 sm:$0xff]
        %s936 = scalar_lea.vmem [#allocation2], 113
        %v937 = vld [vmem:[%s936] ss:$2 sm:$0xff]
        %s938 = scalar_lea.vmem [#allocation2], 129
        %v939 = vld [vmem:[%s938] ss:$2 sm:$0xff]
        %s940 = scalar_lea.vmem [#allocation2], 145
        %v941 = vld [vmem:[%s940] ss:$2 sm:$0xff]
        %s942 = scalar_lea.vmem [#allocation2], 161
        %v943 = vld [vmem:[%s942] ss:$2 sm:$0xff]
        %s944 = scalar_lea.vmem [#allocation2], 177
        %v945 = vld [vmem:[%s944] ss:$2 sm:$0xff]
        %s946 = scalar_lea.vmem [#allocation2], 193
        %v947 = vld [vmem:[%s946] ss:$2 sm:$0xff]
        %s948 = scalar_lea.vmem [#allocation2], 209
        %v949 = vld [vmem:[%s948] ss:$2 sm:$0xff]
        %s950 = scalar_lea.vmem [#allocation2], 225
        %v951 = vld [vmem:[%s950] ss:$2 sm:$0x3]
        %v952 = vmax.f32 %v893, %v923
        %v953 = vmax.f32 %v895, %v925
        %v954 = vmax.f32 %v897, %v927
        %v955 = vmax.f32 %v899, %v929
        %v956 = vmax.f32 %v901, %v931
        %v957 = vmax.f32 %v903, %v933
        %v958 = vmax.f32 %v905, %v935
        %v959 = vmax.f32 %v907, %v937
        %v960 = vmax.f32 %v909, %v939
        %v961 = vmax.f32 %v911, %v941
        %v962 = vmax.f32 %v913, %v943
        %v963 = vmax.f32 %v915, %v945
        %v964 = vmax.f32 %v917, %v947
        %v965 = vmax.f32 %v919, %v949
        %v966 = vmax.f32 %v921, %v951
        %967 = vst.msk [vmem:[#allocation3] sm:$0xff] %vm862, 0.0
        %968 = vst.msk [vmem:[#allocation3 + $0x8] sm:$0xff] %vm862, 0.0
        %969 = vst.msk [vmem:[#allocation3 + $0x10] sm:$0xff] %vm862, 0.0
        %970 = vst.msk [vmem:[#allocation3 + $0x18] sm:$0xff] %vm862, 0.0
        %971 = vst.msk [vmem:[#allocation3 + $0x20] sm:$0xff] %vm862, 0.0
        %972 = vst.msk [vmem:[#allocation3 + $0x28] sm:$0xff] %vm862, 0.0
        %973 = vst.msk [vmem:[#allocation3 + $0x30] sm:$0xff] %vm862, 0.0
        %974 = vst.msk [vmem:[#allocation3 + $0x38] sm:$0xff] %vm862, 0.0
        %975 = vst.msk [vmem:[#allocation3 + $0x40] sm:$0xff] %vm862, 0.0
        %976 = vst.msk [vmem:[#allocation3 + $0x48] sm:$0xff] %vm862, 0.0
        %977 = vst.msk [vmem:[#allocation3 + $0x50] sm:$0xff] %vm862, 0.0
        %978 = vst.msk [vmem:[#allocation3 + $0x58] sm:$0xff] %vm862, 0.0
        %979 = vst.msk [vmem:[#allocation3 + $0x60] sm:$0xff] %vm862, 0.0
        %980 = vst.msk [vmem:[#allocation3 + $0x68] sm:$0xff] %vm862, 0.0
        %981 = vst.msk [vmem:[#allocation3 + $0x70] sm:$0xf] %vm891, 0.0
        %982 = vst.msk [vmem:[#allocation3 + $0x1] sm:$0xff] %vm862, %v952
        %983 = vst.msk [vmem:[#allocation3 + $0x9] sm:$0xff] %vm862, %v953
        %984 = vst.msk [vmem:[#allocation3 + $0x11] sm:$0xff] %vm862, %v954
        %985 = vst.msk [vmem:[#allocation3 + $0x19] sm:$0xff] %vm862, %v955
        %986 = vst.msk [vmem:[#allocation3 + $0x21] sm:$0xff] %vm862, %v956
        %987 = vst.msk [vmem:[#allocation3 + $0x29] sm:$0xff] %vm862, %v957
        %988 = vst.msk [vmem:[#allocation3 + $0x31] sm:$0xff] %vm862, %v958
        %989 = vst.msk [vmem:[#allocation3 + $0x39] sm:$0xff] %vm862, %v959
        %990 = vst.msk [vmem:[#allocation3 + $0x41] sm:$0xff] %vm862, %v960
        %991 = vst.msk [vmem:[#allocation3 + $0x49] sm:$0xff] %vm862, %v961
        %992 = vst.msk [vmem:[#allocation3 + $0x51] sm:$0xff] %vm862, %v962
        %993 = vst.msk [vmem:[#allocation3 + $0x59] sm:$0xff] %vm862, %v963
        %994 = vst.msk [vmem:[#allocation3 + $0x61] sm:$0xff] %vm862, %v964
        %995 = vst.msk [vmem:[#allocation3 + $0x69] sm:$0xff] %vm862, %v965
        %vm996 = vcmask 123904
        %997 = vst.msk [vmem:[#allocation3 + $0x71] sm:$0x3] %vm996, %v966
        %v998 = vld [vmem:[%s4] sm:$0x1]
        %v999 = vld [vmem:[#allocation3] sm:$0xff]
        %v1000 = vld [vmem:[#allocation3 + $0x8] sm:$0xff]
        %v1001 = vld [vmem:[#allocation3 + $0x10] sm:$0xff]
        %v1002 = vld [vmem:[#allocation3 + $0x18] sm:$0xff]
        %v1003 = vld [vmem:[#allocation3 + $0x20] sm:$0xff]
        %v1004 = vld [vmem:[#allocation3 + $0x28] sm:$0xff]
        %v1005 = vld [vmem:[#allocation3 + $0x30] sm:$0xff]
        %v1006 = vld [vmem:[#allocation3 + $0x38] sm:$0xff]
        %v1007 = vld [vmem:[#allocation3 + $0x40] sm:$0xff]
        %v1008 = vld [vmem:[#allocation3 + $0x48] sm:$0xff]
        %v1009 = vld [vmem:[#allocation3 + $0x50] sm:$0xff]
        %v1010 = vld [vmem:[#allocation3 + $0x58] sm:$0xff]
        %v1011 = vld [vmem:[#allocation3 + $0x60] sm:$0xff]
        %v1012 = vld [vmem:[#allocation3 + $0x68] sm:$0xff]
        %v1013 = vld [vmem:[#allocation3 + $0x70] sm:$0x3]
        %v1014 = vpack.c.bf16 %v1000, %v999
        %v1015 = vpack.c.bf16 %v1002, %v1001
        %v1016 = vpack.c.bf16 %v1004, %v1003
        %v1017 = vpack.c.bf16 %v1006, %v1005
        %v1018 = vpack.c.bf16 %v1008, %v1007
        %v1019 = vpack.c.bf16 %v1010, %v1009
        %v1020 = vpack.c.bf16 %v1012, %v1011
        %v1021 = vpack.c.bf16 %v1013, %v1013
        %v1022 = vld [vmem:[%s3] sm:$0xf]
        %v1023 = vld [vmem:[%s3 + $0x4] sm:$0xf]
        %v1026 = vunpack.c.l.b16 %v1022
        %v1027 = vunpack.c.l.b16 %v1023
        %v1028 = vpack.c.b16 %v1027, %v1026
        %v1031 = vsel %vm862, %v1014, 0
        %v1034 = vsel %vm862, %v1015, 0
        %v1037 = vsel %vm862, %v1016, 0
        %v1040 = vsel %vm862, %v1017, 0
        %v1043 = vsel %vm862, %v1018, 0
        %v1046 = vsel %vm862, %v1019, 0
        %v1049 = vsel %vm862, %v1020, 0
        %v1052 = vsel %vm862, %v1021, 0
        %1054 = vmatprep.subr.bf16.mxu0 0
        %1055 = vmatpush1.bf16.msra.mxu0 %v1028
        %1056 = vmatprep.subr.bf16.mxu0 0
        %1057 = vmatpush1.bf16.msra.mxu0 0
        %1058 = vmatprep.subr.bf16.mxu0 0
        %1059 = vmatpush1.bf16.msra.mxu0 0
        %1060 = vmatprep.subr.bf16.mxu0 0
        %1061 = vmatpush1.bf16.msra.mxu0 0
        %1062 = vmatprep.subr.bf16.mxu0 0
        %1063 = vmatpush1.bf16.msra.mxu0 0
        %1064 = vmatprep.subr.bf16.mxu0 0
        %1065 = vmatpush1.bf16.msra.mxu0 0
        %1066 = vmatprep.subr.bf16.mxu0 0
        %1067 = vmatpush1.bf16.msra.mxu0 0
        %1068 = vmatprep.subr.bf16.mxu0 0
        %1069 = vmatpush1.bf16.msra.mxu0 0
        %1070 = vmatprep.subr.bf16.mxu0 0
        %1071 = vmatpush1.bf16.msra.mxu0 0
        %1072 = vmatprep.subr.bf16.mxu0 0
        %1073 = vmatpush1.bf16.msra.mxu0 0
        %1074 = vmatprep.subr.bf16.mxu0 0
        %1075 = vmatpush1.bf16.msra.mxu0 0
        %1076 = vmatprep.subr.bf16.mxu0 0
        %1077 = vmatpush1.bf16.msra.mxu0 0
        %1078 = vmatprep.subr.bf16.mxu0 0
        %1079 = vmatpush1.bf16.msra.mxu0 0
        %1080 = vmatprep.subr.bf16.mxu0 0
        %1081 = vmatpush1.bf16.msra.mxu0 0
        %1082 = vmatprep.subr.bf16.mxu0 0
        %1083 = vmatpush1.bf16.msra.mxu0 0
        %1084 = vmatprep.subr.bf16.mxu0 0
        %1085 = vmatpush1.bf16.msra.mxu0 0
        %1086 = vmatprep.mubr.bf16.mxu0 0
        %1087 = vmatmul.mubr.bf16.gmra.mrb[0].mxu0 %v1031
        %v1088 = vpop.f32.mrb[0].mxu0
        %v1089 = vadd.f32 0.0, %v1088
        %v1090 = vpop.f32.mrb[0].mxu0
        %v1091 = vpop.f32.mrb[0].mxu0
        %v1092 = vadd.f32 0.0, %v1091
        %v1093 = vpop.f32.mrb[0].mxu0
        %1094 = vmatprep.mubr.bf16.mxu0 0
        %1095 = vmatmul.mubr.bf16.gmra.mrb[0].mxu0 %v1034
        %v1096 = vpop.f32.mrb[0].mxu0
        %v1097 = vadd.f32 0.0, %v1096
        %v1098 = vpop.f32.mrb[0].mxu0
        %v1099 = vpop.f32.mrb[0].mxu0
        %v1100 = vadd.f32 0.0, %v1099
        %v1101 = vpop.f32.mrb[0].mxu0
        %1102 = vmatprep.mubr.bf16.mxu0 0
        %1103 = vmatmul.mubr.bf16.gmra.mrb[0].mxu0 %v1037
        %v1104 = vpop.f32.mrb[0].mxu0
        %v1105 = vadd.f32 0.0, %v1104
        %v1106 = vpop.f32.mrb[0].mxu0
        %v1107 = vpop.f32.mrb[0].mxu0
        %v1108 = vadd.f32 0.0, %v1107
        %v1109 = vpop.f32.mrb[0].mxu0
        %1110 = vmatprep.mubr.bf16.mxu0 0
        %1111 = vmatmul.mubr.bf16.gmra.mrb[0].mxu0 %v1040
        %v1112 = vpop.f32.mrb[0].mxu0
        %v1113 = vadd.f32 0.0, %v1112
        %v1114 = vpop.f32.mrb[0].mxu0
        %v1115 = vpop.f32.mrb[0].mxu0
        %v1116 = vadd.f32 0.0, %v1115
        %v1117 = vpop.f32.mrb[0].mxu0
        %1118 = vmatprep.mubr.bf16.mxu0 0
        %1119 = vmatmul.mubr.bf16.gmra.mrb[0].mxu0 %v1043
        %v1120 = vpop.f32.mrb[0].mxu0
        %v1121 = vadd.f32 0.0, %v1120
        %v1122 = vpop.f32.mrb[0].mxu0
        %v1123 = vpop.f32.mrb[0].mxu0
        %v1124 = vadd.f32 0.0, %v1123
        %v1125 = vpop.f32.mrb[0].mxu0
        %1126 = vmatprep.mubr.bf16.mxu0 0
        %1127 = vmatmul.mubr.bf16.gmra.mrb[0].mxu0 %v1046
        %v1128 = vpop.f32.mrb[0].mxu0
        %v1129 = vadd.f32 0.0, %v1128
        %v1130 = vpop.f32.mrb[0].mxu0
        %v1131 = vpop.f32.mrb[0].mxu0
        %v1132 = vadd.f32 0.0, %v1131
        %v1133 = vpop.f32.mrb[0].mxu0
        %1134 = vmatprep.mubr.bf16.mxu0 0
        %1135 = vmatmul.mubr.bf16.gmra.mrb[0].mxu0 %v1049
        %v1136 = vpop.f32.mrb[0].mxu0
        %v1137 = vadd.f32 0.0, %v1136
        %v1138 = vpop.f32.mrb[0].mxu0
        %v1139 = vpop.f32.mrb[0].mxu0
        %v1140 = vadd.f32 0.0, %v1139
        %v1141 = vpop.f32.mrb[0].mxu0
        %1142 = vmatprep.mubr.bf16.mxu0 0
        %1143 = vmatmul.mubr.bf16.gmra.mrb[0].mxu0 %v1052
        %v1144 = vpop.f32.mrb[0].mxu0
        %v1145 = vadd.f32 0.0, %v1144
        %v1146 = vpop.f32.mrb[0].mxu0
        %v1147 = vpop.f32.mrb[0].mxu0
        %v1148 = vpop.f32.mrb[0].mxu0
        %1149 = vdwg.mxu0
        %v1151 = vlaneseq
        %v1152 = vshrl.u32 %v1151, 7
        %v1153 = vsub.s32 0, %v1152
        %v1154 = vrot.slane %v998, %v1153
        %v1156 = vadd.f32 %v1154, %v1089
        %v1157 = vadd.f32 %v1154, %v1092
        %v1158 = vadd.f32 %v1154, %v1097
        %v1159 = vadd.f32 %v1154, %v1100
        %v1160 = vadd.f32 %v1154, %v1105
        %v1161 = vadd.f32 %v1154, %v1108
        %v1162 = vadd.f32 %v1154, %v1113
        %v1163 = vadd.f32 %v1154, %v1116
        %v1164 = vadd.f32 %v1154, %v1121
        %v1165 = vadd.f32 %v1154, %v1124
        %v1166 = vadd.f32 %v1154, %v1129
        %v1167 = vadd.f32 %v1154, %v1132
        %v1168 = vadd.f32 %v1154, %v1137
        %v1169 = vadd.f32 %v1154, %v1140
        %v1170 = vadd.f32 %v1154, %v1145
        %v1171 = vld [vmem:[#allocation3 + $0x1] sm:$0xff]
        %v1172 = vld [vmem:[#allocation3 + $0x9] sm:$0xff]
        %v1173 = vld [vmem:[#allocation3 + $0x11] sm:$0xff]
        %v1174 = vld [vmem:[#allocation3 + $0x19] sm:$0xff]
        %v1175 = vld [vmem:[#allocation3 + $0x21] sm:$0xff]
        %v1176 = vld [vmem:[#allocation3 + $0x29] sm:$0xff]
        %v1177 = vld [vmem:[#allocation3 + $0x31] sm:$0xff]
        %v1178 = vld [vmem:[#allocation3 + $0x39] sm:$0xff]
        %v1179 = vld [vmem:[#allocation3 + $0x41] sm:$0xff]
        %v1180 = vld [vmem:[#allocation3 + $0x49] sm:$0xff]
        %v1181 = vld [vmem:[#allocation3 + $0x51] sm:$0xff]
        %v1182 = vld [vmem:[#allocation3 + $0x59] sm:$0xff]
        %v1183 = vld [vmem:[#allocation3 + $0x61] sm:$0xff]
        %v1184 = vld [vmem:[#allocation3 + $0x69] sm:$0xff]
        %v1185 = vld [vmem:[#allocation3 + $0x71] sm:$0x3]
        %v1186 = vpack.c.bf16 %v1172, %v1171
        %v1187 = vpack.c.bf16 %v1174, %v1173
        %v1188 = vpack.c.bf16 %v1176, %v1175
        %v1189 = vpack.c.bf16 %v1178, %v1177
        %v1190 = vpack.c.bf16 %v1180, %v1179
        %v1191 = vpack.c.bf16 %v1182, %v1181
        %v1192 = vpack.c.bf16 %v1184, %v1183
        %v1193 = vpack.c.bf16 %v1185, %v1185
        %s1194 = scalar_lea.vmem %s3, 8
        %v1195 = vld [vmem:[%s1194] sm:$0xf]
        %v1196 = vld [vmem:[%s1194 + $0x4] sm:$0xf]
        %v1199 = vunpack.c.l.b16 %v1195
        %v1200 = vunpack.c.l.b16 %v1196
        %v1201 = vpack.c.b16 %v1200, %v1199
        %v1204 = vsel %vm862, %v1186, 0
        %v1207 = vsel %vm862, %v1187, 0
        %v1210 = vsel %vm862, %v1188, 0
        %v1213 = vsel %vm862, %v1189, 0
        %v1216 = vsel %vm862, %v1190, 0
        %v1219 = vsel %vm862, %v1191, 0
        %v1222 = vsel %vm862, %v1192, 0
        %v1225 = vsel %vm862, %v1193, 0
        %1227 = vmatprep.subr.bf16.mxu0 0
        %1228 = vmatpush1.bf16.msra.mxu0 %v1201
        %1229 = vmatprep.subr.bf16.mxu0 0
        %1230 = vmatpush1.bf16.msra.mxu0 0
        %1231 = vmatprep.subr.bf16.mxu0 0
        %1232 = vmatpush1.bf16.msra.mxu0 0
        %1233 = vmatprep.subr.bf16.mxu0 0
        %1234 = vmatpush1.bf16.msra.mxu0 0
        %1235 = vmatprep.subr.bf16.mxu0 0
        %1236 = vmatpush1.bf16.msra.mxu0 0
        %1237 = vmatprep.subr.bf16.mxu0 0
        %1238 = vmatpush1.bf16.msra.mxu0 0
        %1239 = vmatprep.subr.bf16.mxu0 0
        %1240 = vmatpush1.bf16.msra.mxu0 0
        %1241 = vmatprep.subr.bf16.mxu0 0
        %1242 = vmatpush1.bf16.msra.mxu0 0
        %1243 = vmatprep.subr.bf16.mxu0 0
        %1244 = vmatpush1.bf16.msra.mxu0 0
        %1245 = vmatprep.subr.bf16.mxu0 0
        %1246 = vmatpush1.bf16.msra.mxu0 0
        %1247 = vmatprep.subr.bf16.mxu0 0
        %1248 = vmatpush1.bf16.msra.mxu0 0
        %1249 = vmatprep.subr.bf16.mxu0 0
        %1250 = vmatpush1.bf16.msra.mxu0 0
        %1251 = vmatprep.subr.bf16.mxu0 0
        %1252 = vmatpush1.bf16.msra.mxu0 0
        %1253 = vmatprep.subr.bf16.mxu0 0
        %1254 = vmatpush1.bf16.msra.mxu0 0
        %1255 = vmatprep.subr.bf16.mxu0 0
        %1256 = vmatpush1.bf16.msra.mxu0 0
        %1257 = vmatprep.subr.bf16.mxu0 0
        %1258 = vmatpush1.bf16.msra.mxu0 0
        %1259 = vmatprep.mubr.bf16.mxu0 0
        %1260 = vmatmul.mubr.bf16.gmra.mrb[0].mxu0 %v1204
        %v1261 = vpop.f32.mrb[0].mxu0
        %v1262 = vadd.f32 0.0, %v1261
        %v1263 = vpop.f32.mrb[0].mxu0
        %v1264 = vpop.f32.mrb[0].mxu0
        %v1265 = vadd.f32 0.0, %v1264
        %v1266 = vpop.f32.mrb[0].mxu0
        %1267 = vmatprep.mubr.bf16.mxu0 0
        %1268 = vmatmul.mubr.bf16.gmra.mrb[0].mxu0 %v1207
        %v1269 = vpop.f32.mrb[0].mxu0
        %v1270 = vadd.f32 0.0, %v1269
        %v1271 = vpop.f32.mrb[0].mxu0
        %v1272 = vpop.f32.mrb[0].mxu0
        %v1273 = vadd.f32 0.0, %v1272
        %v1274 = vpop.f32.mrb[0].mxu0
        %1275 = vmatprep.mubr.bf16.mxu0 0
        %1276 = vmatmul.mubr.bf16.gmra.mrb[0].mxu0 %v1210
        %v1277 = vpop.f32.mrb[0].mxu0
        %v1278 = vadd.f32 0.0, %v1277
        %v1279 = vpop.f32.mrb[0].mxu0
        %v1280 = vpop.f32.mrb[0].mxu0
        %v1281 = vadd.f32 0.0, %v1280
        %v1282 = vpop.f32.mrb[0].mxu0
        %1283 = vmatprep.mubr.bf16.mxu0 0
        %1284 = vmatmul.mubr.bf16.gmra.mrb[0].mxu0 %v1213
        %v1285 = vpop.f32.mrb[0].mxu0
        %v1286 = vadd.f32 0.0, %v1285
        %v1287 = vpop.f32.mrb[0].mxu0
        %v1288 = vpop.f32.mrb[0].mxu0
        %v1289 = vadd.f32 0.0, %v1288
        %v1290 = vpop.f32.mrb[0].mxu0
        %1291 = vmatprep.mubr.bf16.mxu0 0
        %1292 = vmatmul.mubr.bf16.gmra.mrb[0].mxu0 %v1216
        %v1293 = vpop.f32.mrb[0].mxu0
        %v1294 = vadd.f32 0.0, %v1293
        %v1295 = vpop.f32.mrb[0].mxu0
        %v1296 = vpop.f32.mrb[0].mxu0
        %v1297 = vadd.f32 0.0, %v1296
        %v1298 = vpop.f32.mrb[0].mxu0
        %1299 = vmatprep.mubr.bf16.mxu0 0
        %1300 = vmatmul.mubr.bf16.gmra.mrb[0].mxu0 %v1219
        %v1301 = vpop.f32.mrb[0].mxu0
        %v1302 = vadd.f32 0.0, %v1301
        %v1303 = vpop.f32.mrb[0].mxu0
        %v1304 = vpop.f32.mrb[0].mxu0
        %v1305 = vadd.f32 0.0, %v1304
        %v1306 = vpop.f32.mrb[0].mxu0
        %1307 = vmatprep.mubr.bf16.mxu0 0
        %1308 = vmatmul.mubr.bf16.gmra.mrb[0].mxu0 %v1222
        %v1309 = vpop.f32.mrb[0].mxu0
        %v1310 = vadd.f32 0.0, %v1309
        %v1311 = vpop.f32.mrb[0].mxu0
        %v1312 = vpop.f32.mrb[0].mxu0
        %v1313 = vadd.f32 0.0, %v1312
        %v1314 = vpop.f32.mrb[0].mxu0
        %1315 = vmatprep.mubr.bf16.mxu0 0
        %1316 = vmatmul.mubr.bf16.gmra.mrb[0].mxu0 %v1225
        %v1317 = vpop.f32.mrb[0].mxu0
        %v1318 = vadd.f32 0.0, %v1317
        %v1319 = vpop.f32.mrb[0].mxu0
        %v1320 = vpop.f32.mrb[0].mxu0
        %v1321 = vpop.f32.mrb[0].mxu0
        %1322 = vdwg.mxu0
        %v1323 = vadd.f32 %v1156, %v1262
        %v1324 = vadd.f32 %v1157, %v1265
        %v1325 = vadd.f32 %v1158, %v1270
        %v1326 = vadd.f32 %v1159, %v1273
        %v1327 = vadd.f32 %v1160, %v1278
        %v1328 = vadd.f32 %v1161, %v1281
        %v1329 = vadd.f32 %v1162, %v1286
        %v1330 = vadd.f32 %v1163, %v1289
        %v1331 = vadd.f32 %v1164, %v1294
        %v1332 = vadd.f32 %v1165, %v1297
        %v1333 = vadd.f32 %v1166, %v1302
        %v1334 = vadd.f32 %v1167, %v1305
        %v1335 = vadd.f32 %v1168, %v1310
        %v1336 = vadd.f32 %v1169, %v1313
        %v1337 = vadd.f32 %v1170, %v1318
        %v1338 = vld [vmem:[#allocation3 + $0x2] sm:$0xff]
        %v1339 = vld [vmem:[#allocation3 + $0xa] sm:$0xff]
        %v1340 = vld [vmem:[#allocation3 + $0x12] sm:$0xff]
        %v1341 = vld [vmem:[#allocation3 + $0x1a] sm:$0xff]
        %v1342 = vld [vmem:[#allocation3 + $0x22] sm:$0xff]
        %v1343 = vld [vmem:[#allocation3 + $0x2a] sm:$0xff]
        %v1344 = vld [vmem:[#allocation3 + $0x32] sm:$0xff]
        %v1345 = vld [vmem:[#allocation3 + $0x3a] sm:$0xff]
        %v1346 = vld [vmem:[#allocation3 + $0x42] sm:$0xff]
        %v1347 = vld [vmem:[#allocation3 + $0x4a] sm:$0xff]
        %v1348 = vld [vmem:[#allocation3 + $0x52] sm:$0xff]
        %v1349 = vld [vmem:[#allocation3 + $0x5a] sm:$0xff]
        %v1350 = vld [vmem:[#allocation3 + $0x62] sm:$0xff]
        %v1351 = vld [vmem:[#allocation3 + $0x6a] sm:$0xff]
        %v1352 = vld [vmem:[#allocation3 + $0x72] sm:$0x3]
        %v1353 = vpack.c.bf16 %v1339, %v1338
        %v1354 = vpack.c.bf16 %v1341, %v1340
        %v1355 = vpack.c.bf16 %v1343, %v1342
        %v1356 = vpack.c.bf16 %v1345, %v1344
        %v1357 = vpack.c.bf16 %v1347, %v1346
        %v1358 = vpack.c.bf16 %v1349, %v1348
        %v1359 = vpack.c.bf16 %v1351, %v1350
        %v1360 = vpack.c.bf16 %v1352, %v1352
        %s1361 = scalar_lea.vmem %s3, 16
        %v1362 = vld [vmem:[%s1361] sm:$0xf]
        %v1363 = vld [vmem:[%s1361 + $0x4] sm:$0xf]
        %v1366 = vunpack.c.l.b16 %v1362
        %v1367 = vunpack.c.l.b16 %v1363
        %v1368 = vpack.c.b16 %v1367, %v1366
        %v1371 = vsel %vm862, %v1353, 0
        %v1374 = vsel %vm862, %v1354, 0
        %v1377 = vsel %vm862, %v1355, 0
        %v1380 = vsel %vm862, %v1356, 0
        %v1383 = vsel %vm862, %v1357, 0
        %v1386 = vsel %vm862, %v1358, 0
        %v1389 = vsel %vm862, %v1359, 0
        %v1392 = vsel %vm862, %v1360, 0
        %1394 = vmatprep.subr.bf16.mxu0 0
        %1395 = vmatpush1.bf16.msra.mxu0 %v1368
        %1396 = vmatprep.subr.bf16.mxu0 0
        %1397 = vmatpush1.bf16.msra.mxu0 0
        %1398 = vmatprep.subr.bf16.mxu0 0
        %1399 = vmatpush1.bf16.msra.mxu0 0
        %1400 = vmatprep.subr.bf16.mxu0 0
        %1401 = vmatpush1.bf16.msra.mxu0 0
        %1402 = vmatprep.subr.bf16.mxu0 0
        %1403 = vmatpush1.bf16.msra.mxu0 0
        %1404 = vmatprep.subr.bf16.mxu0 0
        %1405 = vmatpush1.bf16.msra.mxu0 0
        %1406 = vmatprep.subr.bf16.mxu0 0
        %1407 = vmatpush1.bf16.msra.mxu0 0
        %1408 = vmatprep.subr.bf16.mxu0 0
        %1409 = vmatpush1.bf16.msra.mxu0 0
        %1410 = vmatprep.subr.bf16.mxu0 0
        %1411 = vmatpush1.bf16.msra.mxu0 0
        %1412 = vmatprep.subr.bf16.mxu0 0
        %1413 = vmatpush1.bf16.msra.mxu0 0
        %1414 = vmatprep.subr.bf16.mxu0 0
        %1415 = vmatpush1.bf16.msra.mxu0 0
        %1416 = vmatprep.subr.bf16.mxu0 0
        %1417 = vmatpush1.bf16.msra.mxu0 0
        %1418 = vmatprep.subr.bf16.mxu0 0
        %1419 = vmatpush1.bf16.msra.mxu0 0
        %1420 = vmatprep.subr.bf16.mxu0 0
        %1421 = vmatpush1.bf16.msra.mxu0 0
        %1422 = vmatprep.subr.bf16.mxu0 0
        %1423 = vmatpush1.bf16.msra.mxu0 0
        %1424 = vmatprep.subr.bf16.mxu0 0
        %1425 = vmatpush1.bf16.msra.mxu0 0
        %1426 = vmatprep.mubr.bf16.mxu0 0
        %1427 = vmatmul.mubr.bf16.gmra.mrb[0].mxu0 %v1371
        %v1428 = vpop.f32.mrb[0].mxu0
        %v1429 = vadd.f32 0.0, %v1428
        %v1430 = vpop.f32.mrb[0].mxu0
        %v1431 = vpop.f32.mrb[0].mxu0
        %v1432 = vadd.f32 0.0, %v1431
        %v1433 = vpop.f32.mrb[0].mxu0
        %1434 = vmatprep.mubr.bf16.mxu0 0
        %1435 = vmatmul.mubr.bf16.gmra.mrb[0].mxu0 %v1374
        %v1436 = vpop.f32.mrb[0].mxu0
        %v1437 = vadd.f32 0.0, %v1436
        %v1438 = vpop.f32.mrb[0].mxu0
        %v1439 = vpop.f32.mrb[0].mxu0
        %v1440 = vadd.f32 0.0, %v1439
        %v1441 = vpop.f32.mrb[0].mxu0
        %1442 = vmatprep.mubr.bf16.mxu0 0
        %1443 = vmatmul.mubr.bf16.gmra.mrb[0].mxu0 %v1377
        %v1444 = vpop.f32.mrb[0].mxu0
        %v1445 = vadd.f32 0.0, %v1444
        %v1446 = vpop.f32.mrb[0].mxu0
        %v1447 = vpop.f32.mrb[0].mxu0
        %v1448 = vadd.f32 0.0, %v1447
        %v1449 = vpop.f32.mrb[0].mxu0
        %1450 = vmatprep.mubr.bf16.mxu0 0
        %1451 = vmatmul.mubr.bf16.gmra.mrb[0].mxu0 %v1380
        %v1452 = vpop.f32.mrb[0].mxu0
        %v1453 = vadd.f32 0.0, %v1452
        %v1454 = vpop.f32.mrb[0].mxu0
        %v1455 = vpop.f32.mrb[0].mxu0
        %v1456 = vadd.f32 0.0, %v1455
        %v1457 = vpop.f32.mrb[0].mxu0
        %1458 = vmatprep.mubr.bf16.mxu0 0
        %1459 = vmatmul.mubr.bf16.gmra.mrb[0].mxu0 %v1383
        %v1460 = vpop.f32.mrb[0].mxu0
        %v1461 = vadd.f32 0.0, %v1460
        %v1462 = vpop.f32.mrb[0].mxu0
        %v1463 = vpop.f32.mrb[0].mxu0
        %v1464 = vadd.f32 0.0, %v1463
        %v1465 = vpop.f32.mrb[0].mxu0
        %1466 = vmatprep.mubr.bf16.mxu0 0
        %1467 = vmatmul.mubr.bf16.gmra.mrb[0].mxu0 %v1386
        %v1468 = vpop.f32.mrb[0].mxu0
        %v1469 = vadd.f32 0.0, %v1468
        %v1470 = vpop.f32.mrb[0].mxu0
        %v1471 = vpop.f32.mrb[0].mxu0
        %v1472 = vadd.f32 0.0, %v1471
        %v1473 = vpop.f32.mrb[0].mxu0
        %1474 = vmatprep.mubr.bf16.mxu0 0
        %1475 = vmatmul.mubr.bf16.gmra.mrb[0].mxu0 %v1389
        %v1476 = vpop.f32.mrb[0].mxu0
        %v1477 = vadd.f32 0.0, %v1476
        %v1478 = vpop.f32.mrb[0].mxu0
        %v1479 = vpop.f32.mrb[0].mxu0
        %v1480 = vadd.f32 0.0, %v1479
        %v1481 = vpop.f32.mrb[0].mxu0
        %1482 = vmatprep.mubr.bf16.mxu0 0
        %1483 = vmatmul.mubr.bf16.gmra.mrb[0].mxu0 %v1392
        %v1484 = vpop.f32.mrb[0].mxu0
        %v1485 = vadd.f32 0.0, %v1484
        %v1486 = vpop.f32.mrb[0].mxu0
        %v1487 = vpop.f32.mrb[0].mxu0
        %v1488 = vpop.f32.mrb[0].mxu0
        %1489 = vdwg.mxu0
        %v1490 = vadd.f32 %v1323, %v1429
        %v1491 = vadd.f32 %v1324, %v1432
        %v1492 = vadd.f32 %v1325, %v1437
        %v1493 = vadd.f32 %v1326, %v1440
        %v1494 = vadd.f32 %v1327, %v1445
        %v1495 = vadd.f32 %v1328, %v1448
        %v1496 = vadd.f32 %v1329, %v1453
        %v1497 = vadd.f32 %v1330, %v1456
        %v1498 = vadd.f32 %v1331, %v1461
        %v1499 = vadd.f32 %v1332, %v1464
        %v1500 = vadd.f32 %v1333, %v1469
        %v1501 = vadd.f32 %v1334, %v1472
        %v1502 = vadd.f32 %v1335, %v1477
        %v1503 = vadd.f32 %v1336, %v1480
        %v1504 = vadd.f32 %v1337, %v1485
        %v1505 = vmax.f32 %v1490, 0.0
        %v1506 = vmax.f32 %v1491, 0.0
        %v1507 = vmax.f32 %v1492, 0.0
        %v1508 = vmax.f32 %v1493, 0.0
        %v1509 = vmax.f32 %v1494, 0.0
        %v1510 = vmax.f32 %v1495, 0.0
        %v1511 = vmax.f32 %v1496, 0.0
        %v1512 = vmax.f32 %v1497, 0.0
        %v1513 = vmax.f32 %v1498, 0.0
        %v1514 = vmax.f32 %v1499, 0.0
        %v1515 = vmax.f32 %v1500, 0.0
        %v1516 = vmax.f32 %v1501, 0.0
        %v1517 = vmax.f32 %v1502, 0.0
        %v1518 = vmax.f32 %v1503, 0.0
        %v1519 = vmax.f32 %v1504, 0.0
        %vm1520 = vcmask 261120
        %1521 = vst.msk [vmem:[#allocation4] sm:$0xff] %vm1520, %v1505
        %1522 = vst.msk [vmem:[#allocation4 + $0x8] sm:$0xff] %vm1520, %v1506
        %1523 = vst.msk [vmem:[#allocation4 + $0x10] sm:$0xff] %vm1520, %v1507
        %1524 = vst.msk [vmem:[#allocation4 + $0x18] sm:$0xff] %vm1520, %v1508
        %1525 = vst.msk [vmem:[#allocation4 + $0x20] sm:$0xff] %vm1520, %v1509
        %1526 = vst.msk [vmem:[#allocation4 + $0x28] sm:$0xff] %vm1520, %v1510
        %1527 = vst.msk [vmem:[#allocation4 + $0x30] sm:$0xff] %vm1520, %v1511
        %1528 = vst.msk [vmem:[#allocation4 + $0x38] sm:$0xff] %vm1520, %v1512
        %1529 = vst.msk [vmem:[#allocation4 + $0x40] sm:$0xff] %vm1520, %v1513
        %1530 = vst.msk [vmem:[#allocation4 + $0x48] sm:$0xff] %vm1520, %v1514
        %1531 = vst.msk [vmem:[#allocation4 + $0x50] sm:$0xff] %vm1520, %v1515
        %1532 = vst.msk [vmem:[#allocation4 + $0x58] sm:$0xff] %vm1520, %v1516
        %1533 = vst.msk [vmem:[#allocation4 + $0x60] sm:$0xff] %vm1520, %v1517
        %1534 = vst.msk [vmem:[#allocation4 + $0x68] sm:$0xff] %vm1520, %v1518
        %vm1535 = vcmask 254976
        %1536 = vst.msk [vmem:[#allocation4 + $0x70] sm:$0x3] %vm1535, %v1519
        %v1537 = vld [vmem:[#allocation4] ss:$2 sm:$0xff]
        %s1538 = scalar_lea.vmem [#allocation4], 16
        %v1539 = vld [vmem:[%s1538] ss:$2 sm:$0xff]
        %s1540 = scalar_lea.vmem [#allocation4], 32
        %v1541 = vld [vmem:[%s1540] ss:$2 sm:$0xff]
        %s1542 = scalar_lea.vmem [#allocation4], 48
        %v1543 = vld [vmem:[%s1542] ss:$2 sm:$0xff]
        %s1544 = scalar_lea.vmem [#allocation4], 64
        %v1545 = vld [vmem:[%s1544] ss:$2 sm:$0xff]
        %s1546 = scalar_lea.vmem [#allocation4], 80
        %v1547 = vld [vmem:[%s1546] ss:$2 sm:$0xff]
        %s1548 = scalar_lea.vmem [#allocation4], 96
        %v1549 = vld [vmem:[%s1548] ss:$2 sm:$0xff]
        %s1550 = scalar_lea.vmem [#allocation4], 112
        %v1551 = vld [vmem:[%s1550] ss:$2 sm:$0x1]
        %s1552 = scalar_lea.vmem [#allocation4], 1
        %v1553 = vld [vmem:[%s1552] ss:$2 sm:$0xff]
        %s1554 = scalar_lea.vmem [#allocation4], 17
        %v1555 = vld [vmem:[%s1554] ss:$2 sm:$0xff]
        %s1556 = scalar_lea.vmem [#allocation4], 33
        %v1557 = vld [vmem:[%s1556] ss:$2 sm:$0xff]
        %s1558 = scalar_lea.vmem [#allocation4], 49
        %v1559 = vld [vmem:[%s1558] ss:$2 sm:$0xff]
        %s1560 = scalar_lea.vmem [#allocation4], 65
        %v1561 = vld [vmem:[%s1560] ss:$2 sm:$0xff]
        %s1562 = scalar_lea.vmem [#allocation4], 81
        %v1563 = vld [vmem:[%s1562] ss:$2 sm:$0xff]
        %s1564 = scalar_lea.vmem [#allocation4], 97
        %v1565 = vld [vmem:[%s1564] ss:$2 sm:$0xff]
        %s1566 = scalar_lea.vmem [#allocation4], 113
        %v1567 = vld [vmem:[%s1566] ss:$2 sm:$0x1]
        %v1568 = vmax.f32 %v1537, %v1553
        %v1569 = vmax.f32 %v1539, %v1555
        %v1570 = vmax.f32 %v1541, %v1557
        %v1571 = vmax.f32 %v1543, %v1559
        %v1572 = vmax.f32 %v1545, %v1561
        %v1573 = vmax.f32 %v1547, %v1563
        %v1574 = vmax.f32 %v1549, %v1565
        %v1575 = vmax.f32 %v1551, %v1567
        %1576 = vst.msk [vmem:[#allocation5] sm:$0xff] %vm1520, 0.0
        %1577 = vst.msk [vmem:[#allocation5 + $0x8] sm:$0xff] %vm1520, 0.0
        %1578 = vst.msk [vmem:[#allocation5 + $0x10] sm:$0xff] %vm1520, 0.0
        %1579 = vst.msk [vmem:[#allocation5 + $0x18] sm:$0xff] %vm1520, 0.0
        %1580 = vst.msk [vmem:[#allocation5 + $0x20] sm:$0xff] %vm1520, 0.0
        %1581 = vst.msk [vmem:[#allocation5 + $0x28] sm:$0xff] %vm1520, 0.0
        %1582 = vst.msk [vmem:[#allocation5 + $0x30] sm:$0xff] %vm1520, 0.0
        %vm1583 = vcmask 256000
        %1584 = vst.msk [vmem:[#allocation5 + $0x38] sm:$0x7] %vm1583, 0.0
        %1585 = vst.msk [vmem:[#allocation5 + $0x1] sm:$0xff] %vm1520, %v1568
        %1586 = vst.msk [vmem:[#allocation5 + $0x9] sm:$0xff] %vm1520, %v1569
        %1587 = vst.msk [vmem:[#allocation5 + $0x11] sm:$0xff] %vm1520, %v1570
        %1588 = vst.msk [vmem:[#allocation5 + $0x19] sm:$0xff] %vm1520, %v1571
        %1589 = vst.msk [vmem:[#allocation5 + $0x21] sm:$0xff] %vm1520, %v1572
        %1590 = vst.msk [vmem:[#allocation5 + $0x29] sm:$0xff] %vm1520, %v1573
        %1591 = vst.msk [vmem:[#allocation5 + $0x31] sm:$0xff] %vm1520, %v1574
        %vm1592 = vcmask 253952
        %1593 = vst.msk [vmem:[#allocation5 + $0x39] sm:$0x1] %vm1592, %v1575
        %v1594 = vld [vmem:[%s6] sm:$0x1]
        %v1595 = vld [vmem:[#allocation5] sm:$0xff]
        %v1596 = vld [vmem:[#allocation5 + $0x8] sm:$0xff]
        %v1597 = vld [vmem:[#allocation5 + $0x10] sm:$0xff]
        %v1598 = vld [vmem:[#allocation5 + $0x18] sm:$0xff]
        %v1599 = vld [vmem:[#allocation5 + $0x20] sm:$0xff]
        %v1600 = vld [vmem:[#allocation5 + $0x28] sm:$0xff]
        %v1601 = vld [vmem:[#allocation5 + $0x30] sm:$0xff]
        %v1602 = vld [vmem:[#allocation5 + $0x38] sm:$0x3]
        %v1603 = vpack.c.bf16 %v1596, %v1595
        %v1604 = vpack.c.bf16 %v1598, %v1597
        %v1605 = vpack.c.bf16 %v1600, %v1599
        %v1606 = vpack.c.bf16 %v1602, %v1601
        %v1607 = vld [vmem:[%s5] sm:$0xf]
        %v1608 = vld [vmem:[%s5 + $0x4] sm:$0xf]
        %v1609 = vld [vmem:[%s5 + $0x8] sm:$0xf]
        %v1610 = vld [vmem:[%s5 + $0xc] sm:$0xf]
        %v1615 = vunpack.c.l.b16 %v1607
        %v1616 = vunpack.c.l.b16 %v1608
        %v1617 = vunpack.c.l.b16 %v1609
        %v1618 = vunpack.c.l.b16 %v1610
        %v1619 = vpack.c.b16 %v1616, %v1615
        %v1620 = vpack.c.b16 %v1618, %v1617
        %v1624 = vsel %vm1520, %v1603, 0
        %v1627 = vsel %vm1520, %v1604, 0
        %v1630 = vsel %vm1520, %v1605, 0
        %v1633 = vsel %vm1520, %v1606, 0
        %1635 = vmatprep.subr.bf16.mxu0 0
        %1636 = vmatpush1.bf16.msra.mxu0 %v1619
        %1637 = vmatprep.subr.bf16.mxu0 0
        %1638 = vmatpush1.bf16.msra.mxu0 %v1620
        %1639 = vmatprep.subr.bf16.mxu0 0
        %1640 = vmatpush1.bf16.msra.mxu0 0
        %1641 = vmatprep.subr.bf16.mxu0 0
        %1642 = vmatpush1.bf16.msra.mxu0 0
        %1643 = vmatprep.subr.bf16.mxu0 0
        %1644 = vmatpush1.bf16.msra.mxu0 0
        %1645 = vmatprep.subr.bf16.mxu0 0
        %1646 = vmatpush1.bf16.msra.mxu0 0
        %1647 = vmatprep.subr.bf16.mxu0 0
        %1648 = vmatpush1.bf16.msra.mxu0 0
        %1649 = vmatprep.subr.bf16.mxu0 0
        %1650 = vmatpush1.bf16.msra.mxu0 0
        %1651 = vmatprep.subr.bf16.mxu0 0
        %1652 = vmatpush1.bf16.msra.mxu0 0
        %1653 = vmatprep.subr.bf16.mxu0 0
        %1654 = vmatpush1.bf16.msra.mxu0 0
        %1655 = vmatprep.subr.bf16.mxu0 0
        %1656 = vmatpush1.bf16.msra.mxu0 0
        %1657 = vmatprep.subr.bf16.mxu0 0
        %1658 = vmatpush1.bf16.msra.mxu0 0
        %1659 = vmatprep.subr.bf16.mxu0 0
        %1660 = vmatpush1.bf16.msra.mxu0 0
        %1661 = vmatprep.subr.bf16.mxu0 0
        %1662 = vmatpush1.bf16.msra.mxu0 0
        %1663 = vmatprep.subr.bf16.mxu0 0
        %1664 = vmatpush1.bf16.msra.mxu0 0
        %1665 = vmatprep.subr.bf16.mxu0 0
        %1666 = vmatpush1.bf16.msra.mxu0 0
        %1667 = vmatprep.mubr.bf16.mxu0 0
        %1668 = vmatmul.mubr.bf16.gmra.mrb[0].mxu0 %v1624
        %v1669 = vpop.f32.mrb[0].mxu0
        %v1670 = vadd.f32 0.0, %v1669
        %v1671 = vpop.f32.mrb[0].mxu0
        %v1672 = vpop.f32.mrb[0].mxu0
        %v1673 = vadd.f32 0.0, %v1672
        %v1674 = vpop.f32.mrb[0].mxu0
        %1675 = vmatprep.mubr.bf16.mxu0 0
        %1676 = vmatmul.mubr.bf16.gmra.mrb[0].mxu0 %v1627
        %v1677 = vpop.f32.mrb[0].mxu0
        %v1678 = vadd.f32 0.0, %v1677
        %v1679 = vpop.f32.mrb[0].mxu0
        %v1680 = vpop.f32.mrb[0].mxu0
        %v1681 = vadd.f32 0.0, %v1680
        %v1682 = vpop.f32.mrb[0].mxu0
        %1683 = vmatprep.mubr.bf16.mxu0 0
        %1684 = vmatmul.mubr.bf16.gmra.mrb[0].mxu0 %v1630
        %v1685 = vpop.f32.mrb[0].mxu0
        %v1686 = vadd.f32 0.0, %v1685
        %v1687 = vpop.f32.mrb[0].mxu0
        %v1688 = vpop.f32.mrb[0].mxu0
        %v1689 = vadd.f32 0.0, %v1688
        %v1690 = vpop.f32.mrb[0].mxu0
        %1691 = vmatprep.mubr.bf16.mxu0 0
        %1692 = vmatmul.mubr.bf16.gmra.mrb[0].mxu0 %v1633
        %v1693 = vpop.f32.mrb[0].mxu0
        %v1694 = vadd.f32 0.0, %v1693
        %v1695 = vpop.f32.mrb[0].mxu0
        %v1696 = vpop.f32.mrb[0].mxu0
        %v1697 = vadd.f32 0.0, %v1696
        %v1698 = vpop.f32.mrb[0].mxu0
        %1699 = vdwg.mxu0
        %v1701 = vlaneseq
        %v1702 = vshrl.u32 %v1701, 7
        %v1703 = vsub.s32 0, %v1702
        %v1704 = vrot.slane %v1594, %v1703
        %v1706 = vadd.f32 %v1704, %v1670
        %v1707 = vadd.f32 %v1704, %v1673
        %v1708 = vadd.f32 %v1704, %v1678
        %v1709 = vadd.f32 %v1704, %v1681
        %v1710 = vadd.f32 %v1704, %v1686
        %v1711 = vadd.f32 %v1704, %v1689
        %v1712 = vadd.f32 %v1704, %v1694
        %v1713 = vadd.f32 %v1704, %v1697
        %v1714 = vld [vmem:[#allocation5 + $0x1] sm:$0xff]
        %v1715 = vld [vmem:[#allocation5 + $0x9] sm:$0xff]
        %v1716 = vld [vmem:[#allocation5 + $0x11] sm:$0xff]
        %v1717 = vld [vmem:[#allocation5 + $0x19] sm:$0xff]
        %v1718 = vld [vmem:[#allocation5 + $0x21] sm:$0xff]
        %v1719 = vld [vmem:[#allocation5 + $0x29] sm:$0xff]
        %v1720 = vld [vmem:[#allocation5 + $0x31] sm:$0xff]
        %v1721 = vld [vmem:[#allocation5 + $0x39] sm:$0x3]
        %v1722 = vpack.c.bf16 %v1715, %v1714
        %v1723 = vpack.c.bf16 %v1717, %v1716
        %v1724 = vpack.c.bf16 %v1719, %v1718
        %v1725 = vpack.c.bf16 %v1721, %v1720
        %s1726 = scalar_lea.vmem %s5, 16
        %v1727 = vld [vmem:[%s1726] sm:$0xf]
        %v1728 = vld [vmem:[%s1726 + $0x4] sm:$0xf]
        %v1729 = vld [vmem:[%s1726 + $0x8] sm:$0xf]
        %v1730 = vld [vmem:[%s1726 + $0xc] sm:$0xf]
        %v1735 = vunpack.c.l.b16 %v1727
        %v1736 = vunpack.c.l.b16 %v1728
        %v1737 = vunpack.c.l.b16 %v1729
        %v1738 = vunpack.c.l.b16 %v1730
        %v1739 = vpack.c.b16 %v1736, %v1735
        %v1740 = vpack.c.b16 %v1738, %v1737
        %v1744 = vsel %vm1520, %v1722, 0
        %v1747 = vsel %vm1520, %v1723, 0
        %v1750 = vsel %vm1520, %v1724, 0
        %v1753 = vsel %vm1520, %v1725, 0
        %1755 = vmatprep.subr.bf16.mxu0 0
        %1756 = vmatpush1.bf16.msra.mxu0 %v1739
        %1757 = vmatprep.subr.bf16.mxu0 0
        %1758 = vmatpush1.bf16.msra.mxu0 %v1740
        %1759 = vmatprep.subr.bf16.mxu0 0
        %1760 = vmatpush1.bf16.msra.mxu0 0
        %1761 = vmatprep.subr.bf16.mxu0 0
        %1762 = vmatpush1.bf16.msra.mxu0 0
        %1763 = vmatprep.subr.bf16.mxu0 0
        %1764 = vmatpush1.bf16.msra.mxu0 0
        %1765 = vmatprep.subr.bf16.mxu0 0
        %1766 = vmatpush1.bf16.msra.mxu0 0
        %1767 = vmatprep.subr.bf16.mxu0 0
        %1768 = vmatpush1.bf16.msra.mxu0 0
        %1769 = vmatprep.subr.bf16.mxu0 0
        %1770 = vmatpush1.bf16.msra.mxu0 0
        %1771 = vmatprep.subr.bf16.mxu0 0
        %1772 = vmatpush1.bf16.msra.mxu0 0
        %1773 = vmatprep.subr.bf16.mxu0 0
        %1774 = vmatpush1.bf16.msra.mxu0 0
        %1775 = vmatprep.subr.bf16.mxu0 0
        %1776 = vmatpush1.bf16.msra.mxu0 0
        %1777 = vmatprep.subr.bf16.mxu0 0
        %1778 = vmatpush1.bf16.msra.mxu0 0
        %1779 = vmatprep.subr.bf16.mxu0 0
        %1780 = vmatpush1.bf16.msra.mxu0 0
        %1781 = vmatprep.subr.bf16.mxu0 0
        %1782 = vmatpush1.bf16.msra.mxu0 0
        %1783 = vmatprep.subr.bf16.mxu0 0
        %1784 = vmatpush1.bf16.msra.mxu0 0
        %1785 = vmatprep.subr.bf16.mxu0 0
        %1786 = vmatpush1.bf16.msra.mxu0 0
        %1787 = vmatprep.mubr.bf16.mxu0 0
        %1788 = vmatmul.mubr.bf16.gmra.mrb[0].mxu0 %v1744
        %v1789 = vpop.f32.mrb[0].mxu0
        %v1790 = vadd.f32 0.0, %v1789
        %v1791 = vpop.f32.mrb[0].mxu0
        %v1792 = vpop.f32.mrb[0].mxu0
        %v1793 = vadd.f32 0.0, %v1792
        %v1794 = vpop.f32.mrb[0].mxu0
        %1795 = vmatprep.mubr.bf16.mxu0 0
        %1796 = vmatmul.mubr.bf16.gmra.mrb[0].mxu0 %v1747
        %v1797 = vpop.f32.mrb[0].mxu0
        %v1798 = vadd.f32 0.0, %v1797
        %v1799 = vpop.f32.mrb[0].mxu0
        %v1800 = vpop.f32.mrb[0].mxu0
        %v1801 = vadd.f32 0.0, %v1800
        %v1802 = vpop.f32.mrb[0].mxu0
        %1803 = vmatprep.mubr.bf16.mxu0 0
        %1804 = vmatmul.mubr.bf16.gmra.mrb[0].mxu0 %v1750
        %v1805 = vpop.f32.mrb[0].mxu0
        %v1806 = vadd.f32 0.0, %v1805
        %v1807 = vpop.f32.mrb[0].mxu0
        %v1808 = vpop.f32.mrb[0].mxu0
        %v1809 = vadd.f32 0.0, %v1808
        %v1810 = vpop.f32.mrb[0].mxu0
        %1811 = vmatprep.mubr.bf16.mxu0 0
        %1812 = vmatmul.mubr.bf16.gmra.mrb[0].mxu0 %v1753
        %v1813 = vpop.f32.mrb[0].mxu0
        %v1814 = vadd.f32 0.0, %v1813
        %v1815 = vpop.f32.mrb[0].mxu0
        %v1816 = vpop.f32.mrb[0].mxu0
        %v1817 = vadd.f32 0.0, %v1816
        %v1818 = vpop.f32.mrb[0].mxu0
        %1819 = vdwg.mxu0
        %v1820 = vadd.f32 %v1706, %v1790
        %v1821 = vadd.f32 %v1707, %v1793
        %v1822 = vadd.f32 %v1708, %v1798
        %v1823 = vadd.f32 %v1709, %v1801
        %v1824 = vadd.f32 %v1710, %v1806
        %v1825 = vadd.f32 %v1711, %v1809
        %v1826 = vadd.f32 %v1712, %v1814
        %v1827 = vadd.f32 %v1713, %v1817
        %v1828 = vmax.f32 %v1820, 0.0
        %v1829 = vmax.f32 %v1821, 0.0
        %v1830 = vmax.f32 %v1822, 0.0
        %v1831 = vmax.f32 %v1823, 0.0
        %v1832 = vmax.f32 %v1824, 0.0
        %v1833 = vmax.f32 %v1825, 0.0
        %v1834 = vmax.f32 %v1826, 0.0
        %v1835 = vmax.f32 %v1827, 0.0
        %vm1836 = vcmask 523264
        %1837 = vst.msk [vmem:[#allocation6] sm:$0xff] %vm1836, %v1828
        %1838 = vst.msk [vmem:[#allocation6 + $0x8] sm:$0xff] %vm1836, %v1829
        %1839 = vst.msk [vmem:[#allocation6 + $0x10] sm:$0xff] %vm1836, %v1830
        %1840 = vst.msk [vmem:[#allocation6 + $0x18] sm:$0xff] %vm1836, %v1831
        %1841 = vst.msk [vmem:[#allocation6 + $0x20] sm:$0xff] %vm1836, %v1832
        %1842 = vst.msk [vmem:[#allocation6 + $0x28] sm:$0xff] %vm1836, %v1833
        %1843 = vst.msk [vmem:[#allocation6 + $0x30] sm:$0xff] %vm1836, %v1834
        %vm1844 = vcmask 517120
        %1845 = vst.msk [vmem:[#allocation6 + $0x38] sm:$0x3] %vm1844, %v1835
        %v1846 = vld [vmem:[#allocation6] ss:$2 sm:$0xff]
        %s1847 = scalar_lea.vmem [#allocation6], 16
        %v1848 = vld [vmem:[%s1847] ss:$2 sm:$0xff]
        %s1849 = scalar_lea.vmem [#allocation6], 32
        %v1850 = vld [vmem:[%s1849] ss:$2 sm:$0xff]
        %s1851 = scalar_lea.vmem [#allocation6], 48
        %v1852 = vld [vmem:[%s1851] ss:$2 sm:$0x1f]
        %s1853 = scalar_lea.vmem [#allocation6], 1
        %v1854 = vld [vmem:[%s1853] ss:$2 sm:$0xff]
        %s1855 = scalar_lea.vmem [#allocation6], 17
        %v1856 = vld [vmem:[%s1855] ss:$2 sm:$0xff]
        %s1857 = scalar_lea.vmem [#allocation6], 33
        %v1858 = vld [vmem:[%s1857] ss:$2 sm:$0xff]
        %s1859 = scalar_lea.vmem [#allocation6], 49
        %v1860 = vld [vmem:[%s1859] ss:$2 sm:$0x1f]
        %v1861 = vmax.f32 %v1846, %v1854
        %v1862 = vmax.f32 %v1848, %v1856
        %v1863 = vmax.f32 %v1850, %v1858
        %v1864 = vmax.f32 %v1852, %v1860
        %1865 = vst.msk [vmem:[#allocation7] sm:$0xff] %vm1836, 0.0
        %1866 = vst.msk [vmem:[#allocation7 + $0x8] sm:$0xff] %vm1836, 0.0
        %1867 = vst.msk [vmem:[#allocation7 + $0x10] sm:$0xff] %vm1836, 0.0
        %vm1868 = vcmask 522240
        %1869 = vst.msk [vmem:[#allocation7 + $0x18] sm:$0x7f] %vm1868, 0.0
        %1870 = vst.msk [vmem:[#allocation7 + $0x1] sm:$0xff] %vm1836, %v1861
        %1871 = vst.msk [vmem:[#allocation7 + $0x9] sm:$0xff] %vm1836, %v1862
        %1872 = vst.msk [vmem:[#allocation7 + $0x11] sm:$0xff] %vm1836, %v1863
        %vm1873 = vcmask 520192
        %1874 = vst.msk [vmem:[#allocation7 + $0x19] sm:$0x1f] %vm1873, %v1864
        %v1875 = vld [vmem:[%s8] sm:$0x1]
        %v1876 = vld [vmem:[#allocation7] sm:$0xff]
        %v1877 = vld [vmem:[#allocation7 + $0x8] sm:$0xff]
        %v1878 = vld [vmem:[#allocation7 + $0x10] sm:$0xff]
        %v1879 = vld [vmem:[#allocation7 + $0x18] sm:$0x1f]
        %v1880 = vpack.c.bf16 %v1877, %v1876
        %v1881 = vpack.c.bf16 %v1879, %v1878
        %v1882 = vld [vmem:[%s7] sm:$0xf]
        %v1883 = vld [vmem:[%s7 + $0x4] sm:$0xf]
        %v1884 = vld [vmem:[%s7 + $0x8] sm:$0xf]
        %v1885 = vld [vmem:[%s7 + $0xc] sm:$0xf]
        %v1886 = vld [vmem:[%s7 + $0x10] sm:$0xf]
        %v1887 = vld [vmem:[%s7 + $0x14] sm:$0xf]
        %v1888 = vld [vmem:[%s7 + $0x18] sm:$0xf]
        %v1889 = vld [vmem:[%s7 + $0x1c] sm:$0xf]
        %v1898 = vunpack.c.l.b16 %v1882
        %v1899 = vunpack.c.l.b16 %v1883
        %v1900 = vunpack.c.l.b16 %v1884
        %v1901 = vunpack.c.l.b16 %v1885
        %v1902 = vunpack.c.l.b16 %v1886
        %v1903 = vunpack.c.l.b16 %v1887
        %v1904 = vunpack.c.l.b16 %v1888
        %v1905 = vunpack.c.l.b16 %v1889
        %v1906 = vpack.c.b16 %v1899, %v1898
        %v1907 = vpack.c.b16 %v1901, %v1900
        %v1908 = vpack.c.b16 %v1903, %v1902
        %v1909 = vpack.c.b16 %v1905, %v1904
        %v1915 = vsel %vm1836, %v1880, 0
        %v1918 = vsel %vm1836, %v1881, 0
        %1920 = vmatprep.subr.bf16.mxu0 0
        %1921 = vmatpush1.bf16.msra.mxu0 %v1906
        %1922 = vmatprep.subr.bf16.mxu0 0
        %1923 = vmatpush1.bf16.msra.mxu0 %v1907
        %1924 = vmatprep.subr.bf16.mxu0 0
        %1925 = vmatpush1.bf16.msra.mxu0 %v1908
        %1926 = vmatprep.subr.bf16.mxu0 0
        %1927 = vmatpush1.bf16.msra.mxu0 %v1909
        %1928 = vmatprep.subr.bf16.mxu0 0
        %1929 = vmatpush1.bf16.msra.mxu0 0
        %1930 = vmatprep.subr.bf16.mxu0 0
        %1931 = vmatpush1.bf16.msra.mxu0 0
        %1932 = vmatprep.subr.bf16.mxu0 0
        %1933 = vmatpush1.bf16.msra.mxu0 0
        %1934 = vmatprep.subr.bf16.mxu0 0
        %1935 = vmatpush1.bf16.msra.mxu0 0
        %1936 = vmatprep.subr.bf16.mxu0 0
        %1937 = vmatpush1.bf16.msra.mxu0 0
        %1938 = vmatprep.subr.bf16.mxu0 0
        %1939 = vmatpush1.bf16.msra.mxu0 0
        %1940 = vmatprep.subr.bf16.mxu0 0
        %1941 = vmatpush1.bf16.msra.mxu0 0
        %1942 = vmatprep.subr.bf16.mxu0 0
        %1943 = vmatpush1.bf16.msra.mxu0 0
        %1944 = vmatprep.subr.bf16.mxu0 0
        %1945 = vmatpush1.bf16.msra.mxu0 0
        %1946 = vmatprep.subr.bf16.mxu0 0
        %1947 = vmatpush1.bf16.msra.mxu0 0
        %1948 = vmatprep.subr.bf16.mxu0 0
        %1949 = vmatpush1.bf16.msra.mxu0 0
        %1950 = vmatprep.subr.bf16.mxu0 0
        %1951 = vmatpush1.bf16.msra.mxu0 0
        %1952 = vmatprep.mubr.bf16.mxu0 0
        %1953 = vmatmul.mubr.bf16.gmra.mrb[0].mxu0 %v1915
        %v1954 = vpop.f32.mrb[0].mxu0
        %v1955 = vadd.f32 0.0, %v1954
        %v1956 = vpop.f32.mrb[0].mxu0
        %v1957 = vpop.f32.mrb[0].mxu0
        %v1958 = vadd.f32 0.0, %v1957
        %v1959 = vpop.f32.mrb[0].mxu0
        %1960 = vmatprep.mubr.bf16.mxu0 0
        %1961 = vmatmul.mubr.bf16.gmra.mrb[0].mxu0 %v1918
        %v1962 = vpop.f32.mrb[0].mxu0
        %v1963 = vadd.f32 0.0, %v1962
        %v1964 = vpop.f32.mrb[0].mxu0
        %v1965 = vpop.f32.mrb[0].mxu0
        %v1966 = vadd.f32 0.0, %v1965
        %v1967 = vpop.f32.mrb[0].mxu0
        %1968 = vdwg.mxu0
        %v1970 = vlaneseq
        %v1971 = vshrl.u32 %v1970, 7
        %v1972 = vsub.s32 0, %v1971
        %v1973 = vrot.slane %v1875, %v1972
        %v1975 = vadd.f32 %v1973, %v1955
        %v1976 = vadd.f32 %v1973, %v1958
        %v1977 = vadd.f32 %v1973, %v1963
        %v1978 = vadd.f32 %v1973, %v1966
        %v1979 = vld [vmem:[#allocation7 + $0x1] sm:$0xff]
        %v1980 = vld [vmem:[#allocation7 + $0x9] sm:$0xff]
        %v1981 = vld [vmem:[#allocation7 + $0x11] sm:$0xff]
        %v1982 = vld [vmem:[#allocation7 + $0x19] sm:$0x1f]
        %v1983 = vpack.c.bf16 %v1980, %v1979
        %v1984 = vpack.c.bf16 %v1982, %v1981
        %s1985 = scalar_lea.vmem %s7, 32
        %v1986 = vld [vmem:[%s1985] sm:$0xf]
        %v1987 = vld [vmem:[%s1985 + $0x4] sm:$0xf]
        %v1988 = vld [vmem:[%s1985 + $0x8] sm:$0xf]
        %v1989 = vld [vmem:[%s1985 + $0xc] sm:$0xf]
        %v1990 = vld [vmem:[%s1985 + $0x10] sm:$0xf]
        %v1991 = vld [vmem:[%s1985 + $0x14] sm:$0xf]
        %v1992 = vld [vmem:[%s1985 + $0x18] sm:$0xf]
        %v1993 = vld [vmem:[%s1985 + $0x1c] sm:$0xf]
        %v2002 = vunpack.c.l.b16 %v1986
        %v2003 = vunpack.c.l.b16 %v1987
        %v2004 = vunpack.c.l.b16 %v1988
        %v2005 = vunpack.c.l.b16 %v1989
        %v2006 = vunpack.c.l.b16 %v1990
        %v2007 = vunpack.c.l.b16 %v1991
        %v2008 = vunpack.c.l.b16 %v1992
        %v2009 = vunpack.c.l.b16 %v1993
        %v2010 = vpack.c.b16 %v2003, %v2002
        %v2011 = vpack.c.b16 %v2005, %v2004
        %v2012 = vpack.c.b16 %v2007, %v2006
        %v2013 = vpack.c.b16 %v2009, %v2008
        %v2019 = vsel %vm1836, %v1983, 0
        %v2022 = vsel %vm1836, %v1984, 0
        %2024 = vmatprep.subr.bf16.mxu0 0
        %2025 = vmatpush1.bf16.msra.mxu0 %v2010
        %2026 = vmatprep.subr.bf16.mxu0 0
        %2027 = vmatpush1.bf16.msra.mxu0 %v2011
        %2028 = vmatprep.subr.bf16.mxu0 0
        %2029 = vmatpush1.bf16.msra.mxu0 %v2012
        %2030 = vmatprep.subr.bf16.mxu0 0
        %2031 = vmatpush1.bf16.msra.mxu0 %v2013
        %2032 = vmatprep.subr.bf16.mxu0 0
        %2033 = vmatpush1.bf16.msra.mxu0 0
        %2034 = vmatprep.subr.bf16.mxu0 0
        %2035 = vmatpush1.bf16.msra.mxu0 0
        %2036 = vmatprep.subr.bf16.mxu0 0
        %2037 = vmatpush1.bf16.msra.mxu0 0
        %2038 = vmatprep.subr.bf16.mxu0 0
        %2039 = vmatpush1.bf16.msra.mxu0 0
        %2040 = vmatprep.subr.bf16.mxu0 0
        %2041 = vmatpush1.bf16.msra.mxu0 0
        %2042 = vmatprep.subr.bf16.mxu0 0
        %2043 = vmatpush1.bf16.msra.mxu0 0
        %2044 = vmatprep.subr.bf16.mxu0 0
        %2045 = vmatpush1.bf16.msra.mxu0 0
        %2046 = vmatprep.subr.bf16.mxu0 0
        %2047 = vmatpush1.bf16.msra.mxu0 0
        %2048 = vmatprep.subr.bf16.mxu0 0
        %2049 = vmatpush1.bf16.msra.mxu0 0
        %2050 = vmatprep.subr.bf16.mxu0 0
        %2051 = vmatpush1.bf16.msra.mxu0 0
        %2052 = vmatprep.subr.bf16.mxu0 0
        %2053 = vmatpush1.bf16.msra.mxu0 0
        %2054 = vmatprep.subr.bf16.mxu0 0
        %2055 = vmatpush1.bf16.msra.mxu0 0
        %2056 = vmatprep.mubr.bf16.mxu0 0
        %2057 = vmatmul.mubr.bf16.gmra.mrb[0].mxu0 %v2019
        %v2058 = vpop.f32.mrb[0].mxu0
        %v2059 = vadd.f32 0.0, %v2058
        %v2060 = vpop.f32.mrb[0].mxu0
        %v2061 = vpop.f32.mrb[0].mxu0
        %v2062 = vadd.f32 0.0, %v2061
        %v2063 = vpop.f32.mrb[0].mxu0
        %2064 = vmatprep.mubr.bf16.mxu0 0
        %2065 = vmatmul.mubr.bf16.gmra.mrb[0].mxu0 %v2022
        %v2066 = vpop.f32.mrb[0].mxu0
        %v2067 = vadd.f32 0.0, %v2066
        %v2068 = vpop.f32.mrb[0].mxu0
        %v2069 = vpop.f32.mrb[0].mxu0
        %v2070 = vadd.f32 0.0, %v2069
        %v2071 = vpop.f32.mrb[0].mxu0
        %2072 = vdwg.mxu0
        %v2073 = vadd.f32 %v1975, %v2059
        %v2074 = vadd.f32 %v1976, %v2062
        %v2075 = vadd.f32 %v1977, %v2067
        %v2076 = vadd.f32 %v1978, %v2070
        %v2077 = vld [vmem:[#allocation7 + $0x2] sm:$0xff]
        %v2078 = vld [vmem:[#allocation7 + $0xa] sm:$0xff]
        %v2079 = vld [vmem:[#allocation7 + $0x12] sm:$0xff]
        %v2080 = vld [vmem:[#allocation7 + $0x1a] sm:$0x1f]
        %v2081 = vpack.c.bf16 %v2078, %v2077
        %v2082 = vpack.c.bf16 %v2080, %v2079
        %s2083 = scalar_lea.vmem %s7, 64
        %v2084 = vld [vmem:[%s2083] sm:$0xf]
        %v2085 = vld [vmem:[%s2083 + $0x4] sm:$0xf]
        %v2086 = vld [vmem:[%s2083 + $0x8] sm:$0xf]
        %v2087 = vld [vmem:[%s2083 + $0xc] sm:$0xf]
        %v2088 = vld [vmem:[%s2083 + $0x10] sm:$0xf]
        %v2089 = vld [vmem:[%s2083 + $0x14] sm:$0xf]
        %v2090 = vld [vmem:[%s2083 + $0x18] sm:$0xf]
        %v2091 = vld [vmem:[%s2083 + $0x1c] sm:$0xf]
        %v2100 = vunpack.c.l.b16 %v2084
        %v2101 = vunpack.c.l.b16 %v2085
        %v2102 = vunpack.c.l.b16 %v2086
        %v2103 = vunpack.c.l.b16 %v2087
        %v2104 = vunpack.c.l.b16 %v2088
        %v2105 = vunpack.c.l.b16 %v2089
        %v2106 = vunpack.c.l.b16 %v2090
        %v2107 = vunpack.c.l.b16 %v2091
        %v2108 = vpack.c.b16 %v2101, %v2100
        %v2109 = vpack.c.b16 %v2103, %v2102
        %v2110 = vpack.c.b16 %v2105, %v2104
        %v2111 = vpack.c.b16 %v2107, %v2106
        %v2117 = vsel %vm1836, %v2081, 0
        %v2120 = vsel %vm1836, %v2082, 0
        %2122 = vmatprep.subr.bf16.mxu0 0
        %2123 = vmatpush1.bf16.msra.mxu0 %v2108
        %2124 = vmatprep.subr.bf16.mxu0 0
        %2125 = vmatpush1.bf16.msra.mxu0 %v2109
        %2126 = vmatprep.subr.bf16.mxu0 0
        %2127 = vmatpush1.bf16.msra.mxu0 %v2110
        %2128 = vmatprep.subr.bf16.mxu0 0
        %2129 = vmatpush1.bf16.msra.mxu0 %v2111
        %2130 = vmatprep.subr.bf16.mxu0 0
        %2131 = vmatpush1.bf16.msra.mxu0 0
        %2132 = vmatprep.subr.bf16.mxu0 0
        %2133 = vmatpush1.bf16.msra.mxu0 0
        %2134 = vmatprep.subr.bf16.mxu0 0
        %2135 = vmatpush1.bf16.msra.mxu0 0
        %2136 = vmatprep.subr.bf16.mxu0 0
        %2137 = vmatpush1.bf16.msra.mxu0 0
        %2138 = vmatprep.subr.bf16.mxu0 0
        %2139 = vmatpush1.bf16.msra.mxu0 0
        %2140 = vmatprep.subr.bf16.mxu0 0
        %2141 = vmatpush1.bf16.msra.mxu0 0
        %2142 = vmatprep.subr.bf16.mxu0 0
        %2143 = vmatpush1.bf16.msra.mxu0 0
        %2144 = vmatprep.subr.bf16.mxu0 0
        %2145 = vmatpush1.bf16.msra.mxu0 0
        %2146 = vmatprep.subr.bf16.mxu0 0
        %2147 = vmatpush1.bf16.msra.mxu0 0
        %2148 = vmatprep.subr.bf16.mxu0 0
        %2149 = vmatpush1.bf16.msra.mxu0 0
        %2150 = vmatprep.subr.bf16.mxu0 0
        %2151 = vmatpush1.bf16.msra.mxu0 0
        %2152 = vmatprep.subr.bf16.mxu0 0
        %2153 = vmatpush1.bf16.msra.mxu0 0
        %2154 = vmatprep.mubr.bf16.mxu0 0
        %2155 = vmatmul.mubr.bf16.gmra.mrb[0].mxu0 %v2117
        %v2156 = vpop.f32.mrb[0].mxu0
        %v2157 = vadd.f32 0.0, %v2156
        %v2158 = vpop.f32.mrb[0].mxu0
        %v2159 = vpop.f32.mrb[0].mxu0
        %v2160 = vadd.f32 0.0, %v2159
        %v2161 = vpop.f32.mrb[0].mxu0
        %2162 = vmatprep.mubr.bf16.mxu0 0
        %2163 = vmatmul.mubr.bf16.gmra.mrb[0].mxu0 %v2120
        %v2164 = vpop.f32.mrb[0].mxu0
        %v2165 = vadd.f32 0.0, %v2164
        %v2166 = vpop.f32.mrb[0].mxu0
        %v2167 = vpop.f32.mrb[0].mxu0
        %v2168 = vadd.f32 0.0, %v2167
        %v2169 = vpop.f32.mrb[0].mxu0
        %2170 = vdwg.mxu0
        %v2171 = vadd.f32 %v2073, %v2157
        %v2172 = vadd.f32 %v2074, %v2160
        %v2173 = vadd.f32 %v2075, %v2165
        %v2174 = vadd.f32 %v2076, %v2168
        %v2175 = vmax.f32 %v2171, 0.0
        %v2176 = vmax.f32 %v2172, 0.0
        %v2177 = vmax.f32 %v2173, 0.0
        %v2178 = vmax.f32 %v2174, 0.0
        %2179 = vst.msk [vmem:[#allocation8] sm:$0xff] %vm1836, %v2175
        %2180 = vst.msk [vmem:[#allocation8 + $0x8] sm:$0xff] %vm1836, %v2176
        %2181 = vst.msk [vmem:[#allocation8 + $0x10] sm:$0xff] %vm1836, %v2177
        %2182 = vst.msk [vmem:[#allocation8 + $0x18] sm:$0x1f] %vm1873, %v2178
        %v2183 = vld [vmem:[#allocation8] ss:$2 sm:$0xff]
        %s2184 = scalar_lea.vmem [#allocation8], 16
        %v2185 = vld [vmem:[%s2184] ss:$2 sm:$0x3f]
        %s2186 = scalar_lea.vmem [#allocation8], 1
        %v2187 = vld [vmem:[%s2186] ss:$2 sm:$0xff]
        %s2188 = scalar_lea.vmem [#allocation8], 17
        %v2189 = vld [vmem:[%s2188] ss:$2 sm:$0x3f]
        %v2190 = vmax.f32 %v2183, %v2187
        %v2191 = vmax.f32 %v2185, %v2189
        %v2192 = vld [vmem:[%s10] sm:$0x1]
        %v2193 = vpack.c.bf16 %v2191, %v2190
        %v2194 = vld [vmem:[%s9] sm:$0xf]
        %v2195 = vld [vmem:[%s9 + $0x4] sm:$0xf]
        %v2196 = vld [vmem:[%s9 + $0x8] sm:$0xf]
        %v2197 = vld [vmem:[%s9 + $0xc] sm:$0xf]
        %v2198 = vld [vmem:[%s9 + $0x10] sm:$0xf]
        %v2199 = vld [vmem:[%s9 + $0x14] sm:$0xf]
        %v2200 = vld [vmem:[%s9 + $0x18] sm:$0xf]
        %v2201 = vld [vmem:[%s9 + $0x1c] sm:$0xf]
        %v2210 = vunpack.c.l.b16 %v2194
        %v2211 = vunpack.c.l.b16 %v2195
        %v2212 = vunpack.c.l.b16 %v2196
        %v2213 = vunpack.c.l.b16 %v2197
        %v2214 = vunpack.c.l.b16 %v2198
        %v2215 = vunpack.c.l.b16 %v2199
        %v2216 = vunpack.c.l.b16 %v2200
        %v2217 = vunpack.c.l.b16 %v2201
        %v2218 = vpack.c.b16 %v2211, %v2210
        %v2219 = vpack.c.b16 %v2213, %v2212
        %v2220 = vpack.c.b16 %v2215, %v2214
        %v2221 = vpack.c.b16 %v2217, %v2216
        %v2227 = vsel %vm1836, %v2193, 0
        %2229 = vmatprep.subr.bf16.mxu0 0
        %2230 = vmatpush1.bf16.msra.mxu0 %v2218
        %2231 = vmatprep.subr.bf16.mxu0 0
        %2232 = vmatpush1.bf16.msra.mxu0 %v2219
        %2233 = vmatprep.subr.bf16.mxu0 0
        %2234 = vmatpush1.bf16.msra.mxu0 %v2220
        %2235 = vmatprep.subr.bf16.mxu0 0
        %2236 = vmatpush1.bf16.msra.mxu0 %v2221
        %2237 = vmatprep.subr.bf16.mxu0 0
        %2238 = vmatpush1.bf16.msra.mxu0 0
        %2239 = vmatprep.subr.bf16.mxu0 0
        %2240 = vmatpush1.bf16.msra.mxu0 0
        %2241 = vmatprep.subr.bf16.mxu0 0
        %2242 = vmatpush1.bf16.msra.mxu0 0
        %2243 = vmatprep.subr.bf16.mxu0 0
        %2244 = vmatpush1.bf16.msra.mxu0 0
        %2245 = vmatprep.subr.bf16.mxu0 0
        %2246 = vmatpush1.bf16.msra.mxu0 0
        %2247 = vmatprep.subr.bf16.mxu0 0
        %2248 = vmatpush1.bf16.msra.mxu0 0
        %2249 = vmatprep.subr.bf16.mxu0 0
        %2250 = vmatpush1.bf16.msra.mxu0 0
        %2251 = vmatprep.subr.bf16.mxu0 0
        %2252 = vmatpush1.bf16.msra.mxu0 0
        %2253 = vmatprep.subr.bf16.mxu0 0
        %2254 = vmatpush1.bf16.msra.mxu0 0
        %2255 = vmatprep.subr.bf16.mxu0 0
        %2256 = vmatpush1.bf16.msra.mxu0 0
        %2257 = vmatprep.subr.bf16.mxu0 0
        %2258 = vmatpush1.bf16.msra.mxu0 0
        %2259 = vmatprep.subr.bf16.mxu0 0
        %2260 = vmatpush1.bf16.msra.mxu0 0
        %2261 = vmatprep.mubr.bf16.mxu0 0
        %2262 = vmatmul.mubr.bf16.gmra.mrb[0].mxu0 %v2227
        %v2263 = vpop.f32.mrb[0].mxu0
        %v2264 = vadd.f32 0.0, %v2263
        %v2265 = vpop.f32.mrb[0].mxu0
        %v2266 = vpop.f32.mrb[0].mxu0
        %v2267 = vadd.f32 0.0, %v2266
        %v2268 = vpop.f32.mrb[0].mxu0
        %2269 = vdwg.mxu0
        %v2271 = vlaneseq
        %v2272 = vshrl.u32 %v2271, 7
        %v2273 = vsub.s32 0, %v2272
        %v2274 = vrot.slane %v2192, %v2273
        %v2276 = vadd.f32 %v2274, %v2264
        %v2277 = vadd.f32 %v2274, %v2267
        %s2278 = scalar_lea.vmem %s9, 32
        %v2279 = vld [vmem:[%s2278] sm:$0xf]
        %v2280 = vld [vmem:[%s2278 + $0x4] sm:$0xf]
        %v2281 = vld [vmem:[%s2278 + $0x8] sm:$0xf]
        %v2282 = vld [vmem:[%s2278 + $0xc] sm:$0xf]
        %v2283 = vld [vmem:[%s2278 + $0x10] sm:$0xf]
        %v2284 = vld [vmem:[%s2278 + $0x14] sm:$0xf]
        %v2285 = vld [vmem:[%s2278 + $0x18] sm:$0xf]
        %v2286 = vld [vmem:[%s2278 + $0x1c] sm:$0xf]
        %v2287 = vshrl.u32 %v2193, 16
        %v2289 = vshll.u32 %v2193, 16
        %v2291 = vrot.slane %v2289, 1
        %v2292 = vor.u32 %v2287, %v2291
        %v2301 = vunpack.c.l.b16 %v2279
        %v2302 = vunpack.c.l.b16 %v2280
        %v2303 = vunpack.c.l.b16 %v2281
        %v2304 = vunpack.c.l.b16 %v2282
        %v2305 = vunpack.c.l.b16 %v2283
        %v2306 = vunpack.c.l.b16 %v2284
        %v2307 = vunpack.c.l.b16 %v2285
        %v2308 = vunpack.c.l.b16 %v2286
        %v2309 = vpack.c.b16 %v2302, %v2301
        %v2310 = vpack.c.b16 %v2304, %v2303
        %v2311 = vpack.c.b16 %v2306, %v2305
        %v2312 = vpack.c.b16 %v2308, %v2307
        %v2318 = vsel %vm1836, %v2292, 0
        %2320 = vmatprep.subr.bf16.mxu0 0
        %2321 = vmatpush1.bf16.msra.mxu0 %v2309
        %2322 = vmatprep.subr.bf16.mxu0 0
        %2323 = vmatpush1.bf16.msra.mxu0 %v2310
        %2324 = vmatprep.subr.bf16.mxu0 0
        %2325 = vmatpush1.bf16.msra.mxu0 %v2311
        %2326 = vmatprep.subr.bf16.mxu0 0
        %2327 = vmatpush1.bf16.msra.mxu0 %v2312
        %2328 = vmatprep.subr.bf16.mxu0 0
        %2329 = vmatpush1.bf16.msra.mxu0 0
        %2330 = vmatprep.subr.bf16.mxu0 0
        %2331 = vmatpush1.bf16.msra.mxu0 0
        %2332 = vmatprep.subr.bf16.mxu0 0
        %2333 = vmatpush1.bf16.msra.mxu0 0
        %2334 = vmatprep.subr.bf16.mxu0 0
        %2335 = vmatpush1.bf16.msra.mxu0 0
        %2336 = vmatprep.subr.bf16.mxu0 0
        %2337 = vmatpush1.bf16.msra.mxu0 0
        %2338 = vmatprep.subr.bf16.mxu0 0
        %2339 = vmatpush1.bf16.msra.mxu0 0
        %2340 = vmatprep.subr.bf16.mxu0 0
        %2341 = vmatpush1.bf16.msra.mxu0 0
        %2342 = vmatprep.subr.bf16.mxu0 0
        %2343 = vmatpush1.bf16.msra.mxu0 0
        %2344 = vmatprep.subr.bf16.mxu0 0
        %2345 = vmatpush1.bf16.msra.mxu0 0
        %2346 = vmatprep.subr.bf16.mxu0 0
        %2347 = vmatpush1.bf16.msra.mxu0 0
        %2348 = vmatprep.subr.bf16.mxu0 0
        %2349 = vmatpush1.bf16.msra.mxu0 0
        %2350 = vmatprep.subr.bf16.mxu0 0
        %2351 = vmatpush1.bf16.msra.mxu0 0
        %2352 = vmatprep.mubr.bf16.mxu0 0
        %2353 = vmatmul.mubr.bf16.gmra.mrb[0].mxu0 %v2318
        %v2354 = vpop.f32.mrb[0].mxu0
        %v2355 = vadd.f32 0.0, %v2354
        %v2356 = vpop.f32.mrb[0].mxu0
        %v2357 = vpop.f32.mrb[0].mxu0
        %v2358 = vadd.f32 0.0, %v2357
        %v2359 = vpop.f32.mrb[0].mxu0
        %2360 = vdwg.mxu0
        %v2361 = vadd.f32 %v2276, %v2355
        %v2362 = vadd.f32 %v2277, %v2358
        %s2363 = scalar_lea.vmem %s9, 64
        %v2364 = vld [vmem:[%s2363] sm:$0xf]
        %v2365 = vld [vmem:[%s2363 + $0x4] sm:$0xf]
        %v2366 = vld [vmem:[%s2363 + $0x8] sm:$0xf]
        %v2367 = vld [vmem:[%s2363 + $0xc] sm:$0xf]
        %v2368 = vld [vmem:[%s2363 + $0x10] sm:$0xf]
        %v2369 = vld [vmem:[%s2363 + $0x14] sm:$0xf]
        %v2370 = vld [vmem:[%s2363 + $0x18] sm:$0xf]
        %v2371 = vld [vmem:[%s2363 + $0x1c] sm:$0xf]
        %v2373 = vrot.slane %v2193, 1
        %v2382 = vunpack.c.l.b16 %v2364
        %v2383 = vunpack.c.l.b16 %v2365
        %v2384 = vunpack.c.l.b16 %v2366
        %v2385 = vunpack.c.l.b16 %v2367
        %v2386 = vunpack.c.l.b16 %v2368
        %v2387 = vunpack.c.l.b16 %v2369
        %v2388 = vunpack.c.l.b16 %v2370
        %v2389 = vunpack.c.l.b16 %v2371
        %v2390 = vpack.c.b16 %v2383, %v2382
        %v2391 = vpack.c.b16 %v2385, %v2384
        %v2392 = vpack.c.b16 %v2387, %v2386
        %v2393 = vpack.c.b16 %v2389, %v2388
        %v2399 = vsel %vm1836, %v2373, 0
        %2401 = vmatprep.subr.bf16.mxu0 0
        %2402 = vmatpush1.bf16.msra.mxu0 %v2390
        %2403 = vmatprep.subr.bf16.mxu0 0
        %2404 = vmatpush1.bf16.msra.mxu0 %v2391
        %2405 = vmatprep.subr.bf16.mxu0 0
        %2406 = vmatpush1.bf16.msra.mxu0 %v2392
        %2407 = vmatprep.subr.bf16.mxu0 0
        %2408 = vmatpush1.bf16.msra.mxu0 %v2393
        %2409 = vmatprep.subr.bf16.mxu0 0
        %2410 = vmatpush1.bf16.msra.mxu0 0
        %2411 = vmatprep.subr.bf16.mxu0 0
        %2412 = vmatpush1.bf16.msra.mxu0 0
        %2413 = vmatprep.subr.bf16.mxu0 0
        %2414 = vmatpush1.bf16.msra.mxu0 0
        %2415 = vmatprep.subr.bf16.mxu0 0
        %2416 = vmatpush1.bf16.msra.mxu0 0
        %2417 = vmatprep.subr.bf16.mxu0 0
        %2418 = vmatpush1.bf16.msra.mxu0 0
        %2419 = vmatprep.subr.bf16.mxu0 0
        %2420 = vmatpush1.bf16.msra.mxu0 0
        %2421 = vmatprep.subr.bf16.mxu0 0
        %2422 = vmatpush1.bf16.msra.mxu0 0
        %2423 = vmatprep.subr.bf16.mxu0 0
        %2424 = vmatpush1.bf16.msra.mxu0 0
        %2425 = vmatprep.subr.bf16.mxu0 0
        %2426 = vmatpush1.bf16.msra.mxu0 0
        %2427 = vmatprep.subr.bf16.mxu0 0
        %2428 = vmatpush1.bf16.msra.mxu0 0
        %2429 = vmatprep.subr.bf16.mxu0 0
        %2430 = vmatpush1.bf16.msra.mxu0 0
        %2431 = vmatprep.subr.bf16.mxu0 0
        %2432 = vmatpush1.bf16.msra.mxu0 0
        %2433 = vmatprep.mubr.bf16.mxu0 0
        %2434 = vmatmul.mubr.bf16.gmra.mrb[0].mxu0 %v2399
        %v2435 = vpop.f32.mrb[0].mxu0
        %v2436 = vadd.f32 0.0, %v2435
        %v2437 = vpop.f32.mrb[0].mxu0
        %v2438 = vpop.f32.mrb[0].mxu0
        %v2439 = vadd.f32 0.0, %v2438
        %v2440 = vpop.f32.mrb[0].mxu0
        %2441 = vdwg.mxu0
        %v2442 = vadd.f32 %v2361, %v2436
        %v2443 = vadd.f32 %v2362, %v2439
        %v2444 = vmax.f32 %v2442, 0.0
        %v2445 = vmax.f32 %v2443, 0.0
        %v2446 = vld [vmem:[%s12] sm:$0x1]
        %v2448 = vrot.slane %v2444, 1
        %v2450 = vmax.f32 %v2444, %v2448
        %v2451 = vpack.c.bf16 %v2450, %v2450
        %v2452 = vld [vmem:[%s11] sm:$0xf]
        %v2453 = vld [vmem:[%s11 + $0x4] sm:$0xf]
        %v2454 = vld [vmem:[%s11 + $0x8] sm:$0xf]
        %v2455 = vld [vmem:[%s11 + $0xc] sm:$0xf]
        %v2456 = vld [vmem:[%s11 + $0x10] sm:$0xf]
        %v2457 = vld [vmem:[%s11 + $0x14] sm:$0xf]
        %v2458 = vld [vmem:[%s11 + $0x18] sm:$0xf]
        %v2459 = vld [vmem:[%s11 + $0x1c] sm:$0xf]
        %v2468 = vunpack.c.l.b16 %v2452
        %v2469 = vunpack.c.l.b16 %v2453
        %v2470 = vunpack.c.l.b16 %v2454
        %v2471 = vunpack.c.l.b16 %v2455
        %v2472 = vunpack.c.l.b16 %v2456
        %v2473 = vunpack.c.l.b16 %v2457
        %v2474 = vunpack.c.l.b16 %v2458
        %v2475 = vunpack.c.l.b16 %v2459
        %v2476 = vpack.c.b16 %v2469, %v2468
        %v2477 = vpack.c.b16 %v2471, %v2470
        %v2478 = vpack.c.b16 %v2473, %v2472
        %v2479 = vpack.c.b16 %v2475, %v2474
        %v2485 = vsel %vm1836, %v2451, 0
        %2487 = vmatprep.subr.bf16.mxu0 0
        %2488 = vmatpush1.bf16.msra.mxu0 %v2476
        %2489 = vmatprep.subr.bf16.mxu0 0
        %2490 = vmatpush1.bf16.msra.mxu0 %v2477
        %2491 = vmatprep.subr.bf16.mxu0 0
        %2492 = vmatpush1.bf16.msra.mxu0 %v2478
        %2493 = vmatprep.subr.bf16.mxu0 0
        %2494 = vmatpush1.bf16.msra.mxu0 %v2479
        %2495 = vmatprep.subr.bf16.mxu0 0
        %2496 = vmatpush1.bf16.msra.mxu0 0
        %2497 = vmatprep.subr.bf16.mxu0 0
        %2498 = vmatpush1.bf16.msra.mxu0 0
        %2499 = vmatprep.subr.bf16.mxu0 0
        %2500 = vmatpush1.bf16.msra.mxu0 0
        %2501 = vmatprep.subr.bf16.mxu0 0
        %2502 = vmatpush1.bf16.msra.mxu0 0
        %2503 = vmatprep.subr.bf16.mxu0 0
        %2504 = vmatpush1.bf16.msra.mxu0 0
        %2505 = vmatprep.subr.bf16.mxu0 0
        %2506 = vmatpush1.bf16.msra.mxu0 0
        %2507 = vmatprep.subr.bf16.mxu0 0
        %2508 = vmatpush1.bf16.msra.mxu0 0
        %2509 = vmatprep.subr.bf16.mxu0 0
        %2510 = vmatpush1.bf16.msra.mxu0 0
        %2511 = vmatprep.subr.bf16.mxu0 0
        %2512 = vmatpush1.bf16.msra.mxu0 0
        %2513 = vmatprep.subr.bf16.mxu0 0
        %2514 = vmatpush1.bf16.msra.mxu0 0
        %2515 = vmatprep.subr.bf16.mxu0 0
        %2516 = vmatpush1.bf16.msra.mxu0 0
        %2517 = vmatprep.subr.bf16.mxu0 0
        %2518 = vmatpush1.bf16.msra.mxu0 0
        %2519 = vmatprep.mubr.bf16.mxu0 0
        %2520 = vmatmul.mubr.bf16.gmra.mrb[0].mxu0 %v2485
        %v2521 = vpop.f32.mrb[0].mxu0
        %v2522 = vadd.f32 0.0, %v2521
        %v2523 = vpop.f32.mrb[0].mxu0
        %v2524 = vpop.f32.mrb[0].mxu0
        %v2525 = vpop.f32.mrb[0].mxu0
        %2526 = vdwg.mxu0
        %v2527 = vadd.f32 %v2446, %v2522
        %v2528 = vld [vmem:[%s11 + $0x20] sm:$0xf]
        %v2529 = vld [vmem:[%s11 + $0x24] sm:$0xf]
        %v2530 = vld [vmem:[%s11 + $0x28] sm:$0xf]
        %v2531 = vld [vmem:[%s11 + $0x2c] sm:$0xf]
        %v2532 = vld [vmem:[%s11 + $0x30] sm:$0xf]
        %v2533 = vld [vmem:[%s11 + $0x34] sm:$0xf]
        %v2534 = vld [vmem:[%s11 + $0x38] sm:$0xf]
        %v2535 = vld [vmem:[%s11 + $0x3c] sm:$0xf]
        %v2537 = vrot.slane %v2451, 1
        %v2546 = vunpack.c.l.b16 %v2528
        %v2547 = vunpack.c.l.b16 %v2529
        %v2548 = vunpack.c.l.b16 %v2530
        %v2549 = vunpack.c.l.b16 %v2531
        %v2550 = vunpack.c.l.b16 %v2532
        %v2551 = vunpack.c.l.b16 %v2533
        %v2552 = vunpack.c.l.b16 %v2534
        %v2553 = vunpack.c.l.b16 %v2535
        %v2554 = vpack.c.b16 %v2547, %v2546
        %v2555 = vpack.c.b16 %v2549, %v2548
        %v2556 = vpack.c.b16 %v2551, %v2550
        %v2557 = vpack.c.b16 %v2553, %v2552
        %v2563 = vsel %vm1836, %v2537, 0
        %2565 = vmatprep.subr.bf16.mxu0 0
        %2566 = vmatpush1.bf16.msra.mxu0 %v2554
        %2567 = vmatprep.subr.bf16.mxu0 0
        %2568 = vmatpush1.bf16.msra.mxu0 %v2555
        %2569 = vmatprep.subr.bf16.mxu0 0
        %2570 = vmatpush1.bf16.msra.mxu0 %v2556
        %2571 = vmatprep.subr.bf16.mxu0 0
        %2572 = vmatpush1.bf16.msra.mxu0 %v2557
        %2573 = vmatprep.subr.bf16.mxu0 0
        %2574 = vmatpush1.bf16.msra.mxu0 0
        %2575 = vmatprep.subr.bf16.mxu0 0
        %2576 = vmatpush1.bf16.msra.mxu0 0
        %2577 = vmatprep.subr.bf16.mxu0 0
        %2578 = vmatpush1.bf16.msra.mxu0 0
        %2579 = vmatprep.subr.bf16.mxu0 0
        %2580 = vmatpush1.bf16.msra.mxu0 0
        %2581 = vmatprep.subr.bf16.mxu0 0
        %2582 = vmatpush1.bf16.msra.mxu0 0
        %2583 = vmatprep.subr.bf16.mxu0 0
        %2584 = vmatpush1.bf16.msra.mxu0 0
        %2585 = vmatprep.subr.bf16.mxu0 0
        %2586 = vmatpush1.bf16.msra.mxu0 0
        %2587 = vmatprep.subr.bf16.mxu0 0
        %2588 = vmatpush1.bf16.msra.mxu0 0
        %2589 = vmatprep.subr.bf16.mxu0 0
        %2590 = vmatpush1.bf16.msra.mxu0 0
        %2591 = vmatprep.subr.bf16.mxu0 0
        %2592 = vmatpush1.bf16.msra.mxu0 0
        %2593 = vmatprep.subr.bf16.mxu0 0
        %2594 = vmatpush1.bf16.msra.mxu0 0
        %2595 = vmatprep.subr.bf16.mxu0 0
        %2596 = vmatpush1.bf16.msra.mxu0 0
        %2597 = vmatprep.mubr.bf16.mxu0 0
        %2598 = vmatmul.mubr.bf16.gmra.mrb[0].mxu0 %v2563
        %v2599 = vpop.f32.mrb[0].mxu0
        %v2600 = vadd.f32 0.0, %v2599
        %v2601 = vpop.f32.mrb[0].mxu0
        %v2602 = vpop.f32.mrb[0].mxu0
        %v2603 = vpop.f32.mrb[0].mxu0
        %2604 = vdwg.mxu0
        %v2605 = vadd.f32 %v2527, %v2600
        %v2606 = vld [vmem:[%s11 + $0x40] sm:$0xf]
        %v2607 = vld [vmem:[%s11 + $0x44] sm:$0xf]
        %v2608 = vld [vmem:[%s11 + $0x48] sm:$0xf]
        %v2609 = vld [vmem:[%s11 + $0x4c] sm:$0xf]
        %v2610 = vld [vmem:[%s11 + $0x50] sm:$0xf]
        %v2611 = vld [vmem:[%s11 + $0x54] sm:$0xf]
        %v2612 = vld [vmem:[%s11 + $0x58] sm:$0xf]
        %v2613 = vld [vmem:[%s11 + $0x5c] sm:$0xf]
        %v2614 = vrot.slane %v2451, 2
        %v2623 = vunpack.c.l.b16 %v2606
        %v2624 = vunpack.c.l.b16 %v2607
        %v2625 = vunpack.c.l.b16 %v2608
        %v2626 = vunpack.c.l.b16 %v2609
        %v2627 = vunpack.c.l.b16 %v2610
        %v2628 = vunpack.c.l.b16 %v2611
        %v2629 = vunpack.c.l.b16 %v2612
        %v2630 = vunpack.c.l.b16 %v2613
        %v2631 = vpack.c.b16 %v2624, %v2623
        %v2632 = vpack.c.b16 %v2626, %v2625
        %v2633 = vpack.c.b16 %v2628, %v2627
        %v2634 = vpack.c.b16 %v2630, %v2629
        %v2640 = vsel %vm1836, %v2614, 0
        %2642 = vmatprep.subr.bf16.mxu0 0
        %2643 = vmatpush1.bf16.msra.mxu0 %v2631
        %2644 = vmatprep.subr.bf16.mxu0 0
        %2645 = vmatpush1.bf16.msra.mxu0 %v2632
        %2646 = vmatprep.subr.bf16.mxu0 0
        %2647 = vmatpush1.bf16.msra.mxu0 %v2633
        %2648 = vmatprep.subr.bf16.mxu0 0
        %2649 = vmatpush1.bf16.msra.mxu0 %v2634
        %2650 = vmatprep.subr.bf16.mxu0 0
        %2651 = vmatpush1.bf16.msra.mxu0 0
        %2652 = vmatprep.subr.bf16.mxu0 0
        %2653 = vmatpush1.bf16.msra.mxu0 0
        %2654 = vmatprep.subr.bf16.mxu0 0
        %2655 = vmatpush1.bf16.msra.mxu0 0
        %2656 = vmatprep.subr.bf16.mxu0 0
        %2657 = vmatpush1.bf16.msra.mxu0 0
        %2658 = vmatprep.subr.bf16.mxu0 0
        %2659 = vmatpush1.bf16.msra.mxu0 0
        %2660 = vmatprep.subr.bf16.mxu0 0
        %2661 = vmatpush1.bf16.msra.mxu0 0
        %2662 = vmatprep.subr.bf16.mxu0 0
        %2663 = vmatpush1.bf16.msra.mxu0 0
        %2664 = vmatprep.subr.bf16.mxu0 0
        %2665 = vmatpush1.bf16.msra.mxu0 0
        %2666 = vmatprep.subr.bf16.mxu0 0
        %2667 = vmatpush1.bf16.msra.mxu0 0
        %2668 = vmatprep.subr.bf16.mxu0 0
        %2669 = vmatpush1.bf16.msra.mxu0 0
        %2670 = vmatprep.subr.bf16.mxu0 0
        %2671 = vmatpush1.bf16.msra.mxu0 0
        %2672 = vmatprep.subr.bf16.mxu0 0
        %2673 = vmatpush1.bf16.msra.mxu0 0
        %2674 = vmatprep.mubr.bf16.mxu0 0
        %2675 = vmatmul.mubr.bf16.gmra.mrb[0].mxu0 %v2640
        %v2676 = vpop.f32.mrb[0].mxu0
        %v2677 = vadd.f32 0.0, %v2676
        %v2678 = vpop.f32.mrb[0].mxu0
        %v2679 = vpop.f32.mrb[0].mxu0
        %v2680 = vpop.f32.mrb[0].mxu0
        %2681 = vdwg.mxu0
        %v2682 = vadd.f32 %v2605, %v2677
        %v2683 = vld [vmem:[%s11 + $0x60] sm:$0xf]
        %v2684 = vld [vmem:[%s11 + $0x64] sm:$0xf]
        %v2685 = vld [vmem:[%s11 + $0x68] sm:$0xf]
        %v2686 = vld [vmem:[%s11 + $0x6c] sm:$0xf]
        %v2687 = vld [vmem:[%s11 + $0x70] sm:$0xf]
        %v2688 = vld [vmem:[%s11 + $0x74] sm:$0xf]
        %v2689 = vld [vmem:[%s11 + $0x78] sm:$0xf]
        %v2690 = vld [vmem:[%s11 + $0x7c] sm:$0xf]
        %v2691 = vrot.slane %v2451, 3
        %v2700 = vunpack.c.l.b16 %v2683
        %v2701 = vunpack.c.l.b16 %v2684
        %v2702 = vunpack.c.l.b16 %v2685
        %v2703 = vunpack.c.l.b16 %v2686
        %v2704 = vunpack.c.l.b16 %v2687
        %v2705 = vunpack.c.l.b16 %v2688
        %v2706 = vunpack.c.l.b16 %v2689
        %v2707 = vunpack.c.l.b16 %v2690
        %v2708 = vpack.c.b16 %v2701, %v2700
        %v2709 = vpack.c.b16 %v2703, %v2702
        %v2710 = vpack.c.b16 %v2705, %v2704
        %v2711 = vpack.c.b16 %v2707, %v2706
        %v2717 = vsel %vm1836, %v2691, 0
        %2719 = vmatprep.subr.bf16.mxu0 0
        %2720 = vmatpush1.bf16.msra.mxu0 %v2708
        %2721 = vmatprep.subr.bf16.mxu0 0
        %2722 = vmatpush1.bf16.msra.mxu0 %v2709
        %2723 = vmatprep.subr.bf16.mxu0 0
        %2724 = vmatpush1.bf16.msra.mxu0 %v2710
        %2725 = vmatprep.subr.bf16.mxu0 0
        %2726 = vmatpush1.bf16.msra.mxu0 %v2711
        %2727 = vmatprep.subr.bf16.mxu0 0
        %2728 = vmatpush1.bf16.msra.mxu0 0
        %2729 = vmatprep.subr.bf16.mxu0 0
        %2730 = vmatpush1.bf16.msra.mxu0 0
        %2731 = vmatprep.subr.bf16.mxu0 0
        %2732 = vmatpush1.bf16.msra.mxu0 0
        %2733 = vmatprep.subr.bf16.mxu0 0
        %2734 = vmatpush1.bf16.msra.mxu0 0
        %2735 = vmatprep.subr.bf16.mxu0 0
        %2736 = vmatpush1.bf16.msra.mxu0 0
        %2737 = vmatprep.subr.bf16.mxu0 0
        %2738 = vmatpush1.bf16.msra.mxu0 0
        %2739 = vmatprep.subr.bf16.mxu0 0
        %2740 = vmatpush1.bf16.msra.mxu0 0
        %2741 = vmatprep.subr.bf16.mxu0 0
        %2742 = vmatpush1.bf16.msra.mxu0 0
        %2743 = vmatprep.subr.bf16.mxu0 0
        %2744 = vmatpush1.bf16.msra.mxu0 0
        %2745 = vmatprep.subr.bf16.mxu0 0
        %2746 = vmatpush1.bf16.msra.mxu0 0
        %2747 = vmatprep.subr.bf16.mxu0 0
        %2748 = vmatpush1.bf16.msra.mxu0 0
        %2749 = vmatprep.subr.bf16.mxu0 0
        %2750 = vmatpush1.bf16.msra.mxu0 0
        %2751 = vmatprep.mubr.bf16.mxu0 0
        %2752 = vmatmul.mubr.bf16.gmra.mrb[0].mxu0 %v2717
        %v2753 = vpop.f32.mrb[0].mxu0
        %v2754 = vadd.f32 0.0, %v2753
        %v2755 = vpop.f32.mrb[0].mxu0
        %v2756 = vpop.f32.mrb[0].mxu0
        %v2757 = vpop.f32.mrb[0].mxu0
        %2758 = vdwg.mxu0
        %v2759 = vadd.f32 %v2682, %v2754
        %v2761 = vrot.slane %v2445, 1
        %v2763 = vmax.f32 %v2445, %v2761
        %v2764 = vpack.c.bf16 %v2763, %v2763
        %v2765 = vld [vmem:[%s11 + $0x80] sm:$0xf]
        %v2766 = vld [vmem:[%s11 + $0x84] sm:$0xf]
        %v2767 = vld [vmem:[%s11 + $0x88] sm:$0xf]
        %v2768 = vld [vmem:[%s11 + $0x8c] sm:$0xf]
        %v2769 = vld [vmem:[%s11 + $0x90] sm:$0xf]
        %v2770 = vld [vmem:[%s11 + $0x94] sm:$0xf]
        %v2771 = vld [vmem:[%s11 + $0x98] sm:$0xf]
        %v2772 = vld [vmem:[%s11 + $0x9c] sm:$0xf]
        %v2781 = vunpack.c.l.b16 %v2765
        %v2782 = vunpack.c.l.b16 %v2766
        %v2783 = vunpack.c.l.b16 %v2767
        %v2784 = vunpack.c.l.b16 %v2768
        %v2785 = vunpack.c.l.b16 %v2769
        %v2786 = vunpack.c.l.b16 %v2770
        %v2787 = vunpack.c.l.b16 %v2771
        %v2788 = vunpack.c.l.b16 %v2772
        %v2789 = vpack.c.b16 %v2782, %v2781
        %v2790 = vpack.c.b16 %v2784, %v2783
        %v2791 = vpack.c.b16 %v2786, %v2785
        %v2792 = vpack.c.b16 %v2788, %v2787
        %v2798 = vsel %vm1836, %v2764, 0
        %2800 = vmatprep.subr.bf16.mxu0 0
        %2801 = vmatpush1.bf16.msra.mxu0 %v2789
        %2802 = vmatprep.subr.bf16.mxu0 0
        %2803 = vmatpush1.bf16.msra.mxu0 %v2790
        %2804 = vmatprep.subr.bf16.mxu0 0
        %2805 = vmatpush1.bf16.msra.mxu0 %v2791
        %2806 = vmatprep.subr.bf16.mxu0 0
        %2807 = vmatpush1.bf16.msra.mxu0 %v2792
        %2808 = vmatprep.subr.bf16.mxu0 0
        %2809 = vmatpush1.bf16.msra.mxu0 0
        %2810 = vmatprep.subr.bf16.mxu0 0
        %2811 = vmatpush1.bf16.msra.mxu0 0
        %2812 = vmatprep.subr.bf16.mxu0 0
        %2813 = vmatpush1.bf16.msra.mxu0 0
        %2814 = vmatprep.subr.bf16.mxu0 0
        %2815 = vmatpush1.bf16.msra.mxu0 0
        %2816 = vmatprep.subr.bf16.mxu0 0
        %2817 = vmatpush1.bf16.msra.mxu0 0
        %2818 = vmatprep.subr.bf16.mxu0 0
        %2819 = vmatpush1.bf16.msra.mxu0 0
        %2820 = vmatprep.subr.bf16.mxu0 0
        %2821 = vmatpush1.bf16.msra.mxu0 0
        %2822 = vmatprep.subr.bf16.mxu0 0
        %2823 = vmatpush1.bf16.msra.mxu0 0
        %2824 = vmatprep.subr.bf16.mxu0 0
        %2825 = vmatpush1.bf16.msra.mxu0 0
        %2826 = vmatprep.subr.bf16.mxu0 0
        %2827 = vmatpush1.bf16.msra.mxu0 0
        %2828 = vmatprep.subr.bf16.mxu0 0
        %2829 = vmatpush1.bf16.msra.mxu0 0
        %2830 = vmatprep.subr.bf16.mxu0 0
        %2831 = vmatpush1.bf16.msra.mxu0 0
        %2832 = vmatprep.mubr.bf16.mxu0 0
        %2833 = vmatmul.mubr.bf16.gmra.mrb[0].mxu0 %v2798
        %v2834 = vpop.f32.mrb[0].mxu0
        %v2835 = vadd.f32 0.0, %v2834
        %v2836 = vpop.f32.mrb[0].mxu0
        %v2837 = vpop.f32.mrb[0].mxu0
        %v2838 = vpop.f32.mrb[0].mxu0
        %2839 = vdwg.mxu0
        %v2840 = vadd.f32 %v2759, %v2835
        %v2841 = vld [vmem:[%s11 + $0xa0] sm:$0xf]
        %v2842 = vld [vmem:[%s11 + $0xa4] sm:$0xf]
        %v2843 = vld [vmem:[%s11 + $0xa8] sm:$0xf]
        %v2844 = vld [vmem:[%s11 + $0xac] sm:$0xf]
        %v2845 = vld [vmem:[%s11 + $0xb0] sm:$0xf]
        %v2846 = vld [vmem:[%s11 + $0xb4] sm:$0xf]
        %v2847 = vld [vmem:[%s11 + $0xb8] sm:$0xf]
        %v2848 = vld [vmem:[%s11 + $0xbc] sm:$0xf]
        %v2850 = vrot.slane %v2764, 1
        %v2859 = vunpack.c.l.b16 %v2841
        %v2860 = vunpack.c.l.b16 %v2842
        %v2861 = vunpack.c.l.b16 %v2843
        %v2862 = vunpack.c.l.b16 %v2844
        %v2863 = vunpack.c.l.b16 %v2845
        %v2864 = vunpack.c.l.b16 %v2846
        %v2865 = vunpack.c.l.b16 %v2847
        %v2866 = vunpack.c.l.b16 %v2848
        %v2867 = vpack.c.b16 %v2860, %v2859
        %v2868 = vpack.c.b16 %v2862, %v2861
        %v2869 = vpack.c.b16 %v2864, %v2863
        %v2870 = vpack.c.b16 %v2866, %v2865
        %v2876 = vsel %vm1836, %v2850, 0
        %2878 = vmatprep.subr.bf16.mxu0 0
        %2879 = vmatpush1.bf16.msra.mxu0 %v2867
        %2880 = vmatprep.subr.bf16.mxu0 0
        %2881 = vmatpush1.bf16.msra.mxu0 %v2868
        %2882 = vmatprep.subr.bf16.mxu0 0
        %2883 = vmatpush1.bf16.msra.mxu0 %v2869
        %2884 = vmatprep.subr.bf16.mxu0 0
        %2885 = vmatpush1.bf16.msra.mxu0 %v2870
        %2886 = vmatprep.subr.bf16.mxu0 0
        %2887 = vmatpush1.bf16.msra.mxu0 0
        %2888 = vmatprep.subr.bf16.mxu0 0
        %2889 = vmatpush1.bf16.msra.mxu0 0
        %2890 = vmatprep.subr.bf16.mxu0 0
        %2891 = vmatpush1.bf16.msra.mxu0 0
        %2892 = vmatprep.subr.bf16.mxu0 0
        %2893 = vmatpush1.bf16.msra.mxu0 0
        %2894 = vmatprep.subr.bf16.mxu0 0
        %2895 = vmatpush1.bf16.msra.mxu0 0
        %2896 = vmatprep.subr.bf16.mxu0 0
        %2897 = vmatpush1.bf16.msra.mxu0 0
        %2898 = vmatprep.subr.bf16.mxu0 0
        %2899 = vmatpush1.bf16.msra.mxu0 0
        %2900 = vmatprep.subr.bf16.mxu0 0
        %2901 = vmatpush1.bf16.msra.mxu0 0
        %2902 = vmatprep.subr.bf16.mxu0 0
        %2903 = vmatpush1.bf16.msra.mxu0 0
        %2904 = vmatprep.subr.bf16.mxu0 0
        %2905 = vmatpush1.bf16.msra.mxu0 0
        %2906 = vmatprep.subr.bf16.mxu0 0
        %2907 = vmatpush1.bf16.msra.mxu0 0
        %2908 = vmatprep.subr.bf16.mxu0 0
        %2909 = vmatpush1.bf16.msra.mxu0 0
        %2910 = vmatprep.mubr.bf16.mxu0 0
        %2911 = vmatmul.mubr.bf16.gmra.mrb[0].mxu0 %v2876
        %v2912 = vpop.f32.mrb[0].mxu0
        %v2913 = vadd.f32 0.0, %v2912
        %v2914 = vpop.f32.mrb[0].mxu0
        %v2915 = vpop.f32.mrb[0].mxu0
        %v2916 = vpop.f32.mrb[0].mxu0
        %2917 = vdwg.mxu0
        %v2918 = vadd.f32 %v2840, %v2913
        %v2919 = vsub.f32 0.0, %v2918
        %v2920 = vmul.f32 %v2919, 1.442695
        %v2921 = vpow.pop %v2920
        %v2922 = vadd.f32 %v2921, 1.0
        %v2923 = vrcp.pop %v2922
        %v2924 = vpack.c.bf16 %v2923, %v2923
        %v2925 = vld [vmem:[%s13] sm:$0xf]
        %v2926 = vld [vmem:[%s13 + $0x4] sm:$0xf]
        %v2927 = vld [vmem:[%s13 + $0x8] sm:$0xf]
        %v2928 = vld [vmem:[%s13 + $0xc] sm:$0xf]
        %v2929 = vld [vmem:[%s13 + $0x10] sm:$0xf]
        %v2930 = vld [vmem:[%s13 + $0x14] sm:$0xf]
        %v2931 = vld [vmem:[%s13 + $0x18] sm:$0xf]
        %v2932 = vld [vmem:[%s13 + $0x1c] sm:$0xf]
        %v2933 = vld [vmem:[%s13 + $0x20] sm:$0xf]
        %v2934 = vld [vmem:[%s13 + $0x24] sm:$0xf]
        %v2935 = vld [vmem:[%s13 + $0x28] sm:$0xf]
        %v2936 = vld [vmem:[%s13 + $0x2c] sm:$0xf]
        %v2937 = vld [vmem:[%s13 + $0x30] sm:$0x3]
        %v2938 = vld [vmem:[%s14] sm:$0x1]
        %v2952 = vunpack.c.l.b16 %v2925
        %v2953 = vunpack.c.l.b16 %v2926
        %v2954 = vunpack.c.l.b16 %v2927
        %v2955 = vunpack.c.l.b16 %v2928
        %v2956 = vunpack.c.l.b16 %v2929
        %v2957 = vunpack.c.l.b16 %v2930
        %v2958 = vunpack.c.l.b16 %v2931
        %v2959 = vunpack.c.l.b16 %v2932
        %v2960 = vunpack.c.l.b16 %v2933
        %v2961 = vunpack.c.l.b16 %v2934
        %v2962 = vunpack.c.l.b16 %v2935
        %v2963 = vunpack.c.l.b16 %v2936
        %v2964 = vunpack.c.l.b16 %v2937
        %v2965 = vpack.c.b16 %v2953, %v2952
        %v2966 = vpack.c.b16 %v2955, %v2954
        %v2967 = vpack.c.b16 %v2957, %v2956
        %v2968 = vpack.c.b16 %v2959, %v2958
        %v2969 = vpack.c.b16 %v2961, %v2960
        %v2970 = vpack.c.b16 %v2963, %v2962
        %v2971 = vpack.c.b16 %v2964, %v2964
        %vm2978 = vcmask 818176
        %v2980 = vsel %vm2978, %v2924, 0
        %vm2982 = vcmask 1041408
        %v2984 = vsel %vm2982, %v2971, 0
        %2986 = vmatprep.subr.bf16.mxu0 0
        %2987 = vmatpush1.bf16.msra.mxu0 %v2965
        %2988 = vmatprep.subr.bf16.mxu0 0
        %2989 = vmatpush1.bf16.msra.mxu0 %v2966
        %2990 = vmatprep.subr.bf16.mxu0 0
        %2991 = vmatpush1.bf16.msra.mxu0 %v2967
        %2992 = vmatprep.subr.bf16.mxu0 0
        %2993 = vmatpush1.bf16.msra.mxu0 %v2968
        %2994 = vmatprep.subr.bf16.mxu0 0
        %2995 = vmatpush1.bf16.msra.mxu0 %v2969
        %2996 = vmatprep.subr.bf16.mxu0 0
        %2997 = vmatpush1.bf16.msra.mxu0 %v2970
        %2998 = vmatprep.subr.bf16.mxu0 0
        %2999 = vmatpush1.bf16.msra.mxu0 %v2984
        %3000 = vmatprep.subr.bf16.mxu0 0
        %3001 = vmatpush1.bf16.msra.mxu0 0
        %3002 = vmatprep.subr.bf16.mxu0 0
        %3003 = vmatpush1.bf16.msra.mxu0 0
        %3004 = vmatprep.subr.bf16.mxu0 0
        %3005 = vmatpush1.bf16.msra.mxu0 0
        %3006 = vmatprep.subr.bf16.mxu0 0
        %3007 = vmatpush1.bf16.msra.mxu0 0
        %3008 = vmatprep.subr.bf16.mxu0 0
        %3009 = vmatpush1.bf16.msra.mxu0 0
        %3010 = vmatprep.subr.bf16.mxu0 0
        %3011 = vmatpush1.bf16.msra.mxu0 0
        %3012 = vmatprep.subr.bf16.mxu0 0
        %3013 = vmatpush1.bf16.msra.mxu0 0
        %3014 = vmatprep.subr.bf16.mxu0 0
        %3015 = vmatpush1.bf16.msra.mxu0 0
        %3016 = vmatprep.subr.bf16.mxu0 0
        %3017 = vmatpush1.bf16.msra.mxu0 0
        %3018 = vmatprep.mubr.bf16.mxu0 0
        %3019 = vmatmul.mubr.bf16.gmra.mrb[0].mxu0 %v2980
        %v3020 = vpop.f32.mrb[0].mxu0
        %v3021 = vadd.f32 %v2938, %v3020
        %v3022 = vpop.f32.mrb[0].mxu0
        %v3023 = vpop.f32.mrb[0].mxu0
        %v3024 = vpop.f32.mrb[0].mxu0
        %3025 = vdwg.mxu0
        %vm3026 = vcmask 73728
        %v3027 = vsel %vm3026, %v3021, -inf
        %3028 = vmax.xlane.f32.xlu0 %v3027
        %v3029 = vpop.xlane.xlu0 %3028
        %v3030 = vsub.f32 %v3021, %v3029
        %v3031 = vmul.f32 %v3030, 1.442695
        %v3032 = vpow.pop %v3031
        %v3033 = vsel %vm3026, %v3032, 0.0
        %3034 = vadd.xlane.f32.xlu0 %v3033
        %v3035 = vpop.xlane.xlu0 %3034
        %v3036 = vrcp.pop %v3035
        %v3037 = vmul.f32 %v3032, %v3036
        %3038 = vst.msk [vmem:[%s486] sm:$0x1] %vm3026, %v3037
        %s3039 = sand.u32 %s357, 1
        %s3040 = scalar_lea.sflag [#allocation10], %s3039
        %s3041 = sand.u32 %s357, 1
        %s3042 = scalar_lea.vmem [#allocation9], %s3041
        // Predicated region
        $region81: #{wdcnn2_forward.1} parent=79 // pred_check
          %p3043 = pneg %p367
        $region82: #{wdcnn2_forward.1} parent=79 // pred_check_branch
          %3045 = sbr.rel (%p3043) target = $region84
        $region83: #{wdcnn2_forward.1} parent=79 // pred_region
          %s3047 = ssub.s32 16, 16
          %3048 = vsyncadd %s3040, %s3047
          %s3049 = smul.addr %s29, 16
          %s3050 = scalar_lea.hbm %s15, %s3049
          %s3052 = sshll.u32 %s3042, 4
          %s3053 = int_to_ptr.vmem [resolvable:$true] %s3052
          %3055 = dma.vmem_to_hbm [thread:$0]  %s3053, 16, %s3050, %s3040
        $region84: #{wdcnn2_forward.1} parent=79 // pred_fallthru
          _
      $region80: #{wdcnn2_forward.1} parent=5 // pred_fallthru
        _
      %p3056 = scmp.le.s32.totalorder 2, %s24
      // Predicated region
      $region85: #{wdcnn2_forward.1} parent=5 // pred_check
        %p3057 = pneg %p3056
      $region86: #{wdcnn2_forward.1} parent=5 // pred_check_branch
        %3059 = sbr.rel (%p3057) target = $region88
      $region87: #{wdcnn2_forward.1} parent=5 // pred_region
        %s3060 = ssub.s32 %s24, 2
        // Predicated region
        $region89: #{wdcnn2_forward.1} parent=87 // pred_check
          %p3061 = pneg %p373
        $region90: #{wdcnn2_forward.1} parent=87 // pred_check_branch
          %3063 = sbr.rel (%p3061) target = $region92
        $region91: #{wdcnn2_forward.1} parent=87 // pred_region
          %s3064 = sand.u32 %s358, 1
          %s3065 = scalar_lea.sflag [#allocation10], %s3064
          %s3066 = sand.u32 %s358, 1
          %s3067 = scalar_lea.vmem [#allocation9], %s3066
          %3068 = dma.done %s3065, 16
        $region92: #{wdcnn2_forward.1} parent=87 // pred_fallthru
          _
      $region88: #{wdcnn2_forward.1} parent=5 // pred_fallthru
        _
    $region6: #{wdcnn2_forward.1} parent=1 // loop_footer
      %s28 = sadd.s32 1, %s24
    $region7: #{wdcnn2_forward.1} parent=1 // loop_footer_branch
      %23 = sbr.rel target = $region3
    $region8: #{wdcnn2_forward.1} parent=1 // loop_exit
      _
    %3069 = vsyncpa [#allocation10], 1
    %s3070 = scalar_lea.sflag [#allocation10], 1
    %3071 = vsyncpa %s3070, 1

</llo_original>
